<compile_context>
chip_gen: v6e
topology: v6e:2x2x1
jax: 0.10.0
libtpu: 0.0.40
codegen_flags: <defaults>
</compile_context>

<pallas_src>
import numpy as np

import jax
import jax.numpy as jnp
from jax.experimental import pallas as pl
from jax.experimental.pallas import tpu as pltpu


# ----------------------------------------------------------------------------
# Fused Pallas kernel: one grid step processes TB batch samples end-to-end.
# ----------------------------------------------------------------------------
def _resnet_kernel(xcat_ref, bw1_ref, b1_ref, bw0a_ref, b0a_ref,
                   bw0b_ref, b0b_ref, bw1a_ref, b1a_ref, bw1b_ref, b1b_ref,
                   selmp_ref, sds_ref, whead_ref, bfc_ref,
                   out_ref,
                   y1s, x0s, x1s):
    f32 = jnp.float32
    bf16 = jnp.bfloat16

    TB = out_ref.shape[0]
    H1 = xcat_ref.shape[0] // TB      # 16: stem output rows / sample
    H2 = H1 // 2                      # 8 : maxpool / section-0 rows / sample
    H3 = H2 // 2                      # 4 : section-1 rows / sample

    def rowpos(shape, period):
        # per-sample row index (samples stacked along the M/sublane dimension,
        # `period` rows per sample)
        return jax.lax.broadcasted_iota(jnp.int32, shape, 0) % period

    def shift_down(x, period):
        # result[r] = x[r-1] within each sample, 0 on each sample's first row
        zero = jnp.zeros_like(x[:1])
        sh = jnp.concatenate([zero, x[:-1]], axis=0)
        return jnp.where(rowpos(x.shape, period) == 0, 0.0, sh)

    def shift_up(x, period):
        # result[r] = x[r+1] within each sample, 0 on each sample's last row
        zero = jnp.zeros_like(x[:1])
        sh = jnp.concatenate([x[1:], zero], axis=0)
        return jnp.where(rowpos(x.shape, period) == period - 1, 0.0, sh)

    def conv(tap0, tap1, tap2, w_ref, b_ref, relu):
        # ONE fused MXU matmul over the lane-concatenated kh taps:
        # bf16 operands, f32 accumulation, folded-BN bias, optional ReLU.
        slab = jnp.concatenate([tap0, tap1, tap2], axis=-1).astype(bf16)
        y = jnp.dot(slab, w_ref[...], preferred_element_type=f32) + b_ref[...]
        return jnp.maximum(y, 0.0) if relu else y

    # ---- stem: conv1 3x3 s2 p1 (3 -> 8) + BN + ReLU --------------------------
    # the wrapper pre-concatenated the three kh taps -> one (TB*16, 288) slab
    y1 = jnp.dot(xcat_ref[...], bw1_ref[...], preferred_element_type=f32)
    y1 = jnp.maximum(y1 + b1_ref[...], 0.0)                    # (TB*16, 16*8)

    # ---- maxpool 3x3 s2 p1 ---------------------------------------------------
    # H direction: even/odd row planes via wide strided reads (pad value 0 is
    # exact because the input is post-ReLU, i.e. >= 0).
    y1s[...] = y1
    even = y1s[pl.ds(0, TB * H2, 2), :]                        # rows 2*ho
    odd = y1s[pl.ds(1, TB * H2, 2), :]                         # rows 2*ho + 1
    hmax = jnp.maximum(jnp.maximum(even, odd), shift_down(odd, H2))
    # W direction: +-1 lane-group shifts + max, then one exact f32 stride-2
    # selection matmul down to the 8-wide layout.
    C1 = hmax.shape[1] // H1                                   # 8 channels
    zpad = jnp.zeros_like(hmax[:, :C1])
    wl = jnp.concatenate([zpad, hmax[:, :-C1]], axis=1)        # neighbour w-1
    wr = jnp.concatenate([hmax[:, C1:], zpad], axis=1)         # neighbour w+1
    wmax = jnp.maximum(jnp.maximum(hmax, wl), wr)
    mp = jnp.dot(wmax, selmp_ref[...], preferred_element_type=f32)   # (TB*8, 64)

    # ---- section 0, block 0 (identity shortcut) ------------------------------
    ya = conv(shift_down(mp, H2), mp, shift_up(mp, H2), bw0a_ref, b0a_ref, True)
    yb = conv(shift_down(ya, H2), ya, shift_up(ya, H2), bw0b_ref, b0b_ref, False)
    x0 = jnp.maximum(mp + yb, 0.0)                             # (TB*8, 8*8)

    # ---- section 1, block 0 (DownsampleB shortcut, stride 2, 8 -> 16) --------
    x0s[...] = x0
    e0 = x0s[pl.ds(0, TB * H3, 2), :]                          # rows 2*ho
    o0 = x0s[pl.ds(1, TB * H3, 2), :]                          # rows 2*ho + 1
    y1a = conv(shift_down(o0, H3), e0, o0, bw1a_ref, b1a_ref, True)
    y1b = conv(shift_down(y1a, H3), y1a, shift_up(y1a, H3), bw1b_ref, b1b_ref, False)
    # DownsampleB: AvgPool2d(2) + zero channel pad 8->16, folded into sds.
    sc = jnp.dot(e0 + o0, sds_ref[...], preferred_element_type=f32)
    x1 = jnp.maximum(sc + y1b, 0.0)                            # (TB*4, 4*16)

    # ---- global average pool + fc (pool scale folded into whead) -------------
    x1s[...] = x1
    hsum = x1s[pl.ds(0, TB, H3), :]
    for i in range(1, H3):
        hsum = hsum + x1s[pl.ds(i, TB, H3), :]                 # (TB, 64)
    out_ref[...] = (jnp.dot(hsum, whead_ref[...], preferred_element_type=f32)
                    + bfc_ref[...])


# ----------------------------------------------------------------------------
# Parameter initialization (matches the PyTorch module's init) and one-time
# repacking into the kernel's fused weight layout.
# ----------------------------------------------------------------------------
def init_params(key, nbf=8, num_classes=10):
    ks = list(jax.random.split(key, 8))

    def conv_w(k, kh, kw, cin, cout):
        std = (2.0 / (kh * kw * cout)) ** 0.5
        return std * jax.random.normal(k, (kh, kw, cin, cout), jnp.float32)

    def bn(c):
        return dict(gamma=jnp.ones((c,), jnp.float32),
                    beta=jnp.zeros((c,), jnp.float32),
                    mean=jnp.zeros((c,), jnp.float32),
                    var=jnp.ones((c,), jnp.float32))

    p = {}
    p["conv1_w"] = conv_w(ks[0], 3, 3, 3, nbf)
    p["bn1"] = bn(nbf)
    p["s0_conv_a"] = conv_w(ks[1], 3, 3, nbf, nbf)
    p["s0_bn_a"] = bn(nbf)
    p["s0_conv_b"] = conv_w(ks[2], 3, 3, nbf, nbf)
    p["s0_bn_b"] = bn(nbf)
    p["s1_conv_a"] = conv_w(ks[3], 3, 3, nbf, 2 * nbf)
    p["s1_bn_a"] = bn(2 * nbf)
    p["s1_conv_b"] = conv_w(ks[4], 3, 3, 2 * nbf, 2 * nbf)
    p["s1_bn_b"] = bn(2 * nbf)
    bound = 1.0 / (2 * nbf) ** 0.5
    p["fc_w"] = jax.random.uniform(ks[5], (2 * nbf, num_classes), jnp.float32, -bound, bound)
    p["fc_b"] = jax.random.uniform(ks[6], (num_classes,), jnp.float32, -bound, bound)
    return p


def _bn_fold(bn, eps=1e-5):
    scale = bn["gamma"] / jnp.sqrt(bn["var"] + eps)
    shift = bn["beta"] - bn["mean"] * scale
    return scale, shift


def _fused_conv_w(w_hwio, scale, stride, w_in, w_out):
    # BW[kh*Win*Cin + w*Cin + cin, v*Cout + cout]
    #   = w[kh, w - stride*v + 1, cin, cout] * scale[cout]
    # (taps outside [0,3) dropped -> W zero-padding folded; BN scale folded;
    #  the three kh blocks are stacked along K for the one-matmul conv).
    KH, KW, Cin, Cout = w_hwio.shape
    ws = w_hwio * scale[None, None, None, :]
    wv = np.arange(w_in)[:, None, None]
    vv = np.arange(w_out)[None, :, None]
    kk = np.arange(KW)[None, None, :]
    T = jnp.asarray((wv == stride * vv + kk - 1).astype(np.float32))   # (w_in, w_out, KW)
    big = jnp.einsum("wvk,hkio->hwivo", T, ws)     # (KH, w_in, Cin, w_out, Cout)
    return big.reshape(KH * w_in * Cin, w_out * Cout).astype(jnp.bfloat16)


def _bias_vec(shift, w_out):
    return jnp.tile(shift, (w_out,)).reshape(1, w_out * shift.shape[0]).astype(jnp.float32)


def prepare_params(p, nbf=8, num_classes=10, img_hw=32):
    c2 = 2 * nbf
    s1c, sh1c = _bn_fold(p["bn1"])
    s0a, sh0a = _bn_fold(p["s0_bn_a"])
    s0b, sh0b = _bn_fold(p["s0_bn_b"])
    s1a, sh1a = _bn_fold(p["s1_bn_a"])
    s1b, sh1b = _bn_fold(p["s1_bn_b"])

    w0 = img_hw          # 32: input width
    w1 = img_hw // 2     # 16: conv1 output width
    w2 = img_hw // 4     # 8 : maxpool / section-0 width
    w3 = img_hw // 8     # 4 : section-1 width

    prep = {
        "bw1":  _fused_conv_w(p["conv1_w"], s1c, 2, w0, w1),     # (288, 128)
        "b1":   _bias_vec(sh1c, w1),
        "bw0a": _fused_conv_w(p["s0_conv_a"], s0a, 1, w2, w2),   # (192, 64)
        "b0a":  _bias_vec(sh0a, w2),
        "bw0b": _fused_conv_w(p["s0_conv_b"], s0b, 1, w2, w2),
        "b0b":  _bias_vec(sh0b, w2),
        "bw1a": _fused_conv_w(p["s1_conv_a"], s1a, 2, w2, w3),
        "b1a":  _bias_vec(sh1a, w3),
        "bw1b": _fused_conv_w(p["s1_conv_b"], s1b, 1, w3, w3),
        "b1b":  _bias_vec(sh1b, w3),
    }

    # maxpool stride-2 W selection (exact 0/1 picks, kept f32).
    selmp = np.zeros((w1 * nbf, w2 * nbf), np.float32)
    for wo in range(w2):
        for c in range(nbf):
            selmp[(2 * wo) * nbf + c, wo * nbf + c] = 1.0
    # DownsampleB: W-direction 2x average (H handled by the even+odd row sum),
    # 0.25 total scale and the zero channel pad nbf -> 2*nbf folded in.
    sds = np.zeros((w2 * nbf, w3 * c2), np.float32)
    for wo in range(w3):
        for w in (2 * wo, 2 * wo + 1):
            for c in range(nbf):
                sds[w * nbf + c, wo * c2 + c] = 0.25
    # global avg pool (1 / (w3*w3)) folded with the fc weight.
    whead = jnp.tile(p["fc_w"], (w3, 1)) / float(w3 * w3)        # (w3*c2, classes)

    prep["selmp"] = jnp.asarray(selmp)
    prep["sds"] = jnp.asarray(sds)
    prep["whead"] = whead.astype(jnp.float32)
    prep["bfc"] = p["fc_b"].reshape(1, -1).astype(jnp.float32)
    return prep


# ----------------------------------------------------------------------------
# Forward wrapper: tiny XLA glue on the network input, then one pallas_call
# over batch blocks of TB samples.
# ----------------------------------------------------------------------------
def resnet_forward(x_nchw, prep, block_batch=8):
    """x_nchw: (N, 3, 32, 32) float32 (NCHW, like the PyTorch module)."""
    N, Cin, H, W = x_nchw.shape
    num_classes = prep["whead"].shape[1]
    TB = block_batch
    assert TB % 8 == 0, "block batch must be a multiple of 8 (sublane tiling)"
    Npad = ((N + TB - 1) // TB) * TB
    Hout = H // 2
    WC = W * Cin

    # NCHW -> NHWC, pad batch to a multiple of TB, zero-pad H, and build the
    # lane-concatenated stem slab (taps kh=0,1,2 at padded rows 2*ho + kh),
    # cast to bf16 once here (halves the per-step input DMA).
    x = jnp.transpose(x_nchw, (0, 2, 3, 1)).astype(jnp.float32)
    if Npad != N:
        x = jnp.concatenate([x, jnp.zeros((Npad - N, H, W, Cin), x.dtype)], axis=0)
    xp = jnp.pad(x, ((0, 0), (1, 1), (0, 0), (0, 0)))
    taps = [xp[:, kh:kh + 2 * Hout - 1:2, :, :].reshape(Npad, Hout, WC)
            for kh in range(3)]
    xcat = (jnp.concatenate(taps, axis=-1)
            .reshape(Npad * Hout, 3 * WC).astype(jnp.bfloat16))

    ins = (xcat, prep["bw1"], prep["b1"], prep["bw0a"], prep["b0a"],
           prep["bw0b"], prep["b0b"], prep["bw1a"], prep["b1a"],
           prep["bw1b"], prep["b1b"], prep["selmp"], prep["sds"],
           prep["whead"], prep["bfc"])

    def whole(a):
        nd = a.ndim
        return pl.BlockSpec(a.shape, lambda n, _nd=nd: (0,) * _nd)

    in_specs = [pl.BlockSpec((TB * Hout, 3 * WC), lambda n: (n, 0))]
    in_specs += [whole(a) for a in ins[1:]]

    out = pl.pallas_call(
        _resnet_kernel,
        out_shape=jax.ShapeDtypeStruct((Npad, num_classes), jnp.float32),
        grid=(Npad // TB,),
        in_specs=in_specs,
        out_specs=pl.BlockSpec((TB, num_classes), lambda n: (n, 0)),
        scratch_shapes=[
            pltpu.VMEM((TB * Hout, prep["bw1"].shape[1]), jnp.float32),        # y1 staging
            pltpu.VMEM((TB * Hout // 2, prep["bw0b"].shape[1]), jnp.float32),  # x0 staging
            pltpu.VMEM((TB * Hout // 4, prep["bw1b"].shape[1]), jnp.float32),  # x1 staging
        ],
        compiler_params=pltpu.CompilerParams(dimension_semantics=("parallel",)),
    )(*ins)
    return out[:N]


if __name__ == "__main__":
    key = jax.random.PRNGKey(0)
    k_in, k_par = jax.random.split(key)
    N = 16
    x = jax.random.normal(k_in, (N, 3, 32, 32), jnp.float32)   # NCHW, like PyTorch
    params = init_params(k_par, nbf=8, num_classes=10)
    prep = prepare_params(params, nbf=8, num_classes=10, img_hw=32)

    fwd = jax.jit(resnet_forward)   # TB=8 -> grid=(2,), M=128/64/32 per conv
    out = fwd(x, prep)
    jax.block_until_ready(out)
    assert out.shape == (N, 10) and out.dtype == jnp.float32
    assert bool(jnp.all(jnp.isfinite(out)))
    print("KERNEL_OK")
</pallas_src>

<mosaic_0001>
module attributes {stable_mosaic.version = 11 : i64} {
  func.func @_resnet_kernel(%arg0: i32, %arg1: memref<128x288xbf16, #tpu.memory_space<vmem>>, %arg2: memref<288x128xbf16, #tpu.memory_space<vmem>>, %arg3: memref<1x128xf32, #tpu.memory_space<vmem>>, %arg4: memref<192x64xbf16, #tpu.memory_space<vmem>>, %arg5: memref<1x64xf32, #tpu.memory_space<vmem>>, %arg6: memref<192x64xbf16, #tpu.memory_space<vmem>>, %arg7: memref<1x64xf32, #tpu.memory_space<vmem>>, %arg8: memref<192x64xbf16, #tpu.memory_space<vmem>>, %arg9: memref<1x64xf32, #tpu.memory_space<vmem>>, %arg10: memref<192x64xbf16, #tpu.memory_space<vmem>>, %arg11: memref<1x64xf32, #tpu.memory_space<vmem>>, %arg12: memref<128x64xf32, #tpu.memory_space<vmem>>, %arg13: memref<64x64xf32, #tpu.memory_space<vmem>>, %arg14: memref<64x10xf32, #tpu.memory_space<vmem>>, %arg15: memref<1x10xf32, #tpu.memory_space<vmem>>, %arg16: memref<8x10xf32, #tpu.memory_space<vmem>>, %arg17: memref<128x128xf32, #tpu.memory_space<vmem>>, %arg18: memref<64x64xf32, #tpu.memory_space<vmem>>, %arg19: memref<32x64xf32, #tpu.memory_space<vmem>>) attributes {dimension_semantics = [#tpu.dimension_semantics<parallel>], iteration_bounds = array<i64: 2>, scalar_prefetch = 0 : i64, scratch_operands = 3 : i64, tpu.core_type = #tpu.core_type<tc>, window_params = [{transform_indices = @transform_0, window_bounds = array<i64: 128, 288>}, {pipeline_mode = #tpu.pipeline_mode<synchronous>, transform_indices = @transform_1, window_bounds = array<i64: 288, 128>}, {pipeline_mode = #tpu.pipeline_mode<synchronous>, transform_indices = @transform_2, window_bounds = array<i64: 1, 128>}, {pipeline_mode = #tpu.pipeline_mode<synchronous>, transform_indices = @transform_3, window_bounds = array<i64: 192, 64>}, {pipeline_mode = #tpu.pipeline_mode<synchronous>, transform_indices = @transform_4, window_bounds = array<i64: 1, 64>}, {pipeline_mode = #tpu.pipeline_mode<synchronous>, transform_indices = @transform_5, window_bounds = array<i64: 192, 64>}, {pipeline_mode = #tpu.pipeline_mode<synchronous>, transform_indices = @transform_6, window_bounds = array<i64: 1, 64>}, {pipeline_mode = #tpu.pipeline_mode<synchronous>, transform_indices = @transform_7, window_bounds = array<i64: 192, 64>}, {pipeline_mode = #tpu.pipeline_mode<synchronous>, transform_indices = @transform_8, window_bounds = array<i64: 1, 64>}, {pipeline_mode = #tpu.pipeline_mode<synchronous>, transform_indices = @transform_9, window_bounds = array<i64: 192, 64>}, {pipeline_mode = #tpu.pipeline_mode<synchronous>, transform_indices = @transform_10, window_bounds = array<i64: 1, 64>}, {pipeline_mode = #tpu.pipeline_mode<synchronous>, transform_indices = @transform_11, window_bounds = array<i64: 128, 64>}, {pipeline_mode = #tpu.pipeline_mode<synchronous>, transform_indices = @transform_12, window_bounds = array<i64: 64, 64>}, {pipeline_mode = #tpu.pipeline_mode<synchronous>, transform_indices = @transform_13, window_bounds = array<i64: 64, 10>}, {pipeline_mode = #tpu.pipeline_mode<synchronous>, transform_indices = @transform_14, window_bounds = array<i64: 1, 10>}, {transform_indices = @transform_15, window_bounds = array<i64: 8, 10>}]} {
    %c0 = arith.constant 0 : index
    %c0_0 = arith.constant 0 : index
    %0 = vector.load %arg1[%c0, %c0_0] : memref<128x288xbf16, #tpu.memory_space<vmem>>, vector<128x288xbf16>
    %c0_1 = arith.constant 0 : index
    %c0_2 = arith.constant 0 : index
    %1 = vector.load %arg2[%c0_1, %c0_2] : memref<288x128xbf16, #tpu.memory_space<vmem>>, vector<288x128xbf16>
    %cst = arith.constant dense<0.000000e+00> : vector<128x128xf32>
    %2 = tpu.matmul %0, %1, %cst {dimension_numbers = #tpu.dot_dimension_numbers<[1], [0], [0], [1], [0, 0, 1, 1], [], []>} : vector<128x288xbf16>, vector<288x128xbf16>, vector<128x128xf32> -> vector<128x128xf32>
    %c0_3 = arith.constant 0 : index
    %c0_4 = arith.constant 0 : index
    %3 = vector.load %arg3[%c0_3, %c0_4] : memref<1x128xf32, #tpu.memory_space<vmem>>, vector<1x128xf32>
    %4 = vector.broadcast %3 : vector<1x128xf32> to vector<128x128xf32>
    %5 = arith.addf %2, %4 : vector<128x128xf32>
    %cst_5 = arith.constant 0.000000e+00 : f32
    %6 = vector.broadcast %cst_5 : f32 to vector<128x128xf32>
    %7 = arith.maximumf %5, %6 : vector<128x128xf32>
    %c0_6 = arith.constant 0 : index
    %c0_7 = arith.constant 0 : index
    %8 = vector.load %arg17[%c0_6, %c0_7] : memref<128x128xf32, #tpu.memory_space<vmem>>, vector<128x128xf32>
    tpu.vector_store %arg17[%c0_6, %c0_7], %7 {strides = array<i32>} : memref<128x128xf32, #tpu.memory_space<vmem>>, vector<128x128xf32>,
    %c0_8 = arith.constant 0 : index
    %c0_9 = arith.constant 0 : index
    %9 = tpu.strided_load %arg17[%c0_8, %c0_9] {strides = array<i32: 2, 1>} : memref<128x128xf32, #tpu.memory_space<vmem>>, vector<64x128xf32>
    %c1 = arith.constant 1 : index
    %c0_10 = arith.constant 0 : index
    %10 = tpu.strided_load %arg17[%c1, %c0_10] {strides = array<i32: 2, 1>} : memref<128x128xf32, #tpu.memory_space<vmem>>, vector<64x128xf32>
    %11 = arith.maximumf %9, %10 : vector<64x128xf32>
    %cst_11 = arith.constant 0.000000e+00 : f32
    %12 = vector.broadcast %cst_11 : f32 to vector<1x128xf32>
    %13 = vector.extract_strided_slice %10 {offsets = [0, 0], sizes = [63, 128], strides = [1, 1]} : vector<64x128xf32> to vector<63x128xf32>
    %14 = tpu.concatenate %12, %13 in 0 : vector<1x128xf32>, vector<63x128xf32> -> vector<64x128xf32>
    %15 = tpu.iota {dimensions = array<i32: 0>} : vector<64x128xi32>
    %c8_i32 = arith.constant 8 : i32
    %c0_i32 = arith.constant 0 : i32
    %16 = arith.cmpi eq, %c8_i32, %c0_i32 : i32
    %c1_i32 = arith.constant 1 : i32
    %17 = arith.select %16, %c1_i32, %c8_i32 : i32
    %18 = vector.broadcast %17 : i32 to vector<64x128xi32>
    %19 = arith.remsi %15, %18 : vector<64x128xi32>
    %c0_i32_12 = arith.constant 0 : i32
    %20 = vector.broadcast %c0_i32_12 : i32 to vector<64x128xi32>
    %21 = arith.cmpi ne, %19, %20 : vector<64x128xi32>
    %c0_i32_13 = arith.constant 0 : i32
    %22 = vector.broadcast %c0_i32_13 : i32 to vector<64x128xi32>
    %23 = arith.cmpi slt, %19, %22 : vector<64x128xi32>
    %c0_i32_14 = arith.constant 0 : i32
    %24 = arith.cmpi slt, %17, %c0_i32_14 : i32
    %25 = vector.broadcast %24 : i1 to vector<64x128xi1>
    %26 = vector.broadcast %25 : vector<64x128xi1> to vector<64x128xi1>
    %27 = arith.xori %23, %26 : vector<64x128xi1>
    %28 = arith.andi %27, %21 : vector<64x128xi1>
    %29 = vector.broadcast %17 : i32 to vector<64x128xi32>
    %30 = arith.addi %19, %29 : vector<64x128xi32>
    %31 = arith.select %28, %30, %19 : vector<64x128xi1>, vector<64x128xi32>
    %c0_i32_15 = arith.constant 0 : i32
    %32 = vector.broadcast %c0_i32_15 : i32 to vector<64x128xi32>
    %33 = arith.cmpi eq, %31, %32 : vector<64x128xi32>
    %cst_16 = arith.constant 0.000000e+00 : f32
    %34 = vector.broadcast %cst_16 : f32 to vector<64x128xf32>
    %35 = arith.select %33, %34, %14 : vector<64x128xi1>, vector<64x128xf32>
    %36 = arith.maximumf %11, %35 : vector<64x128xf32>
    %cst_17 = arith.constant 0.000000e+00 : f32
    %37 = vector.broadcast %cst_17 : f32 to vector<64x8xf32>
    %38 = vector.extract_strided_slice %36 {offsets = [0, 0], sizes = [64, 120], strides = [1, 1]} : vector<64x128xf32> to vector<64x120xf32>
    %39 = tpu.concatenate %37, %38 in 1 : vector<64x8xf32>, vector<64x120xf32> -> vector<64x128xf32>
    %40 = vector.extract_strided_slice %36 {offsets = [0, 8], sizes = [64, 120], strides = [1, 1]} : vector<64x128xf32> to vector<64x120xf32>
    %41 = tpu.concatenate %40, %37 in 1 : vector<64x120xf32>, vector<64x8xf32> -> vector<64x128xf32>
    %42 = arith.maximumf %36, %39 : vector<64x128xf32>
    %43 = arith.maximumf %42, %41 : vector<64x128xf32>
    %c0_18 = arith.constant 0 : index
    %c0_19 = arith.constant 0 : index
    %44 = vector.load %arg12[%c0_18, %c0_19] : memref<128x64xf32, #tpu.memory_space<vmem>>, vector<128x64xf32>
    %cst_20 = arith.constant dense<0.000000e+00> : vector<64x64xf32>
    %45 = tpu.matmul %43, %44, %cst_20 {dimension_numbers = #tpu.dot_dimension_numbers<[1], [0], [0], [1], [0, 0, 1, 1], [], []>} : vector<64x128xf32>, vector<128x64xf32>, vector<64x64xf32> -> vector<64x64xf32>
    %cst_21 = arith.constant 0.000000e+00 : f32
    %46 = vector.broadcast %cst_21 : f32 to vector<1x64xf32>
    %47 = vector.extract_strided_slice %45 {offsets = [0, 0], sizes = [63, 64], strides = [1, 1]} : vector<64x64xf32> to vector<63x64xf32>
    %48 = tpu.concatenate %46, %47 in 0 : vector<1x64xf32>, vector<63x64xf32> -> vector<64x64xf32>
    %49 = tpu.iota {dimensions = array<i32: 0>} : vector<64x64xi32>
    %c8_i32_22 = arith.constant 8 : i32
    %c0_i32_23 = arith.constant 0 : i32
    %50 = arith.cmpi eq, %c8_i32_22, %c0_i32_23 : i32
    %c1_i32_24 = arith.constant 1 : i32
    %51 = arith.select %50, %c1_i32_24, %c8_i32_22 : i32
    %52 = vector.broadcast %51 : i32 to vector<64x64xi32>
    %53 = arith.remsi %49, %52 : vector<64x64xi32>
    %c0_i32_25 = arith.constant 0 : i32
    %54 = vector.broadcast %c0_i32_25 : i32 to vector<64x64xi32>
    %55 = arith.cmpi ne, %53, %54 : vector<64x64xi32>
    %c0_i32_26 = arith.constant 0 : i32
    %56 = vector.broadcast %c0_i32_26 : i32 to vector<64x64xi32>
    %57 = arith.cmpi slt, %53, %56 : vector<64x64xi32>
    %c0_i32_27 = arith.constant 0 : i32
    %58 = arith.cmpi slt, %51, %c0_i32_27 : i32
    %59 = vector.broadcast %58 : i1 to vector<64x64xi1>
    %60 = vector.broadcast %59 : vector<64x64xi1> to vector<64x64xi1>
    %61 = arith.xori %57, %60 : vector<64x64xi1>
    %62 = arith.andi %61, %55 : vector<64x64xi1>
    %63 = vector.broadcast %51 : i32 to vector<64x64xi32>
    %64 = arith.addi %53, %63 : vector<64x64xi32>
    %65 = arith.select %62, %64, %53 : vector<64x64xi1>, vector<64x64xi32>
    %c0_i32_28 = arith.constant 0 : i32
    %66 = vector.broadcast %c0_i32_28 : i32 to vector<64x64xi32>
    %67 = arith.cmpi eq, %65, %66 : vector<64x64xi32>
    %cst_29 = arith.constant 0.000000e+00 : f32
    %68 = vector.broadcast %cst_29 : f32 to vector<64x64xf32>
    %69 = arith.select %67, %68, %48 : vector<64x64xi1>, vector<64x64xf32>
    %cst_30 = arith.constant 0.000000e+00 : f32
    %70 = vector.broadcast %cst_30 : f32 to vector<1x64xf32>
    %71 = vector.extract_strided_slice %45 {offsets = [1, 0], sizes = [63, 64], strides = [1, 1]} : vector<64x64xf32> to vector<63x64xf32>
    %72 = tpu.concatenate %71, %70 in 0 : vector<63x64xf32>, vector<1x64xf32> -> vector<64x64xf32>
    %73 = tpu.iota {dimensions = array<i32: 0>} : vector<64x64xi32>
    %c8_i32_31 = arith.constant 8 : i32
    %c0_i32_32 = arith.constant 0 : i32
    %74 = arith.cmpi eq, %c8_i32_31, %c0_i32_32 : i32
    %c1_i32_33 = arith.constant 1 : i32
    %75 = arith.select %74, %c1_i32_33, %c8_i32_31 : i32
    %76 = vector.broadcast %75 : i32 to vector<64x64xi32>
    %77 = arith.remsi %73, %76 : vector<64x64xi32>
    %c0_i32_34 = arith.constant 0 : i32
    %78 = vector.broadcast %c0_i32_34 : i32 to vector<64x64xi32>
    %79 = arith.cmpi ne, %77, %78 : vector<64x64xi32>
    %c0_i32_35 = arith.constant 0 : i32
    %80 = vector.broadcast %c0_i32_35 : i32 to vector<64x64xi32>
    %81 = arith.cmpi slt, %77, %80 : vector<64x64xi32>
    %c0_i32_36 = arith.constant 0 : i32
    %82 = arith.cmpi slt, %75, %c0_i32_36 : i32
    %83 = vector.broadcast %82 : i1 to vector<64x64xi1>
    %84 = vector.broadcast %83 : vector<64x64xi1> to vector<64x64xi1>
    %85 = arith.xori %81, %84 : vector<64x64xi1>
    %86 = arith.andi %85, %79 : vector<64x64xi1>
    %87 = vector.broadcast %75 : i32 to vector<64x64xi32>
    %88 = arith.addi %77, %87 : vector<64x64xi32>
    %89 = arith.select %86, %88, %77 : vector<64x64xi1>, vector<64x64xi32>
    %c7_i32 = arith.constant 7 : i32
    %90 = vector.broadcast %c7_i32 : i32 to vector<64x64xi32>
    %91 = arith.cmpi eq, %89, %90 : vector<64x64xi32>
    %cst_37 = arith.constant 0.000000e+00 : f32
    %92 = vector.broadcast %cst_37 : f32 to vector<64x64xf32>
    %93 = arith.select %91, %92, %72 : vector<64x64xi1>, vector<64x64xf32>
    %94 = tpu.concatenate %69, %45, %93 in 1 : vector<64x64xf32>, vector<64x64xf32>, vector<64x64xf32> -> vector<64x192xf32>
    %95 = arith.truncf %94 : vector<64x192xf32> to vector<64x192xbf16>
    %c0_38 = arith.constant 0 : index
    %c0_39 = arith.constant 0 : index
    %96 = vector.load %arg4[%c0_38, %c0_39] : memref<192x64xbf16, #tpu.memory_space<vmem>>, vector<192x64xbf16>
    %cst_40 = arith.constant dense<0.000000e+00> : vector<64x64xf32>
    %97 = tpu.matmul %95, %96, %cst_40 {dimension_numbers = #tpu.dot_dimension_numbers<[1], [0], [0], [1], [0, 0, 1, 1], [], []>} : vector<64x192xbf16>, vector<192x64xbf16>, vector<64x64xf32> -> vector<64x64xf32>
    %c0_41 = arith.constant 0 : index
    %c0_42 = arith.constant 0 : index
    %98 = vector.load %arg5[%c0_41, %c0_42] : memref<1x64xf32, #tpu.memory_space<vmem>>, vector<1x64xf32>
    %99 = vector.broadcast %98 : vector<1x64xf32> to vector<64x64xf32>
    %100 = arith.addf %97, %99 : vector<64x64xf32>
    %cst_43 = arith.constant 0.000000e+00 : f32
    %101 = vector.broadcast %cst_43 : f32 to vector<64x64xf32>
    %102 = arith.maximumf %100, %101 : vector<64x64xf32>
    %cst_44 = arith.constant 0.000000e+00 : f32
    %103 = vector.broadcast %cst_44 : f32 to vector<1x64xf32>
    %104 = vector.extract_strided_slice %102 {offsets = [0, 0], sizes = [63, 64], strides = [1, 1]} : vector<64x64xf32> to vector<63x64xf32>
    %105 = tpu.concatenate %103, %104 in 0 : vector<1x64xf32>, vector<63x64xf32> -> vector<64x64xf32>
    %106 = tpu.iota {dimensions = array<i32: 0>} : vector<64x64xi32>
    %c8_i32_45 = arith.constant 8 : i32
    %c0_i32_46 = arith.constant 0 : i32
    %107 = arith.cmpi eq, %c8_i32_45, %c0_i32_46 : i32
    %c1_i32_47 = arith.constant 1 : i32
    %108 = arith.select %107, %c1_i32_47, %c8_i32_45 : i32
    %109 = vector.broadcast %108 : i32 to vector<64x64xi32>
    %110 = arith.remsi %106, %109 : vector<64x64xi32>
    %c0_i32_48 = arith.constant 0 : i32
    %111 = vector.broadcast %c0_i32_48 : i32 to vector<64x64xi32>
    %112 = arith.cmpi ne, %110, %111 : vector<64x64xi32>
    %c0_i32_49 = arith.constant 0 : i32
    %113 = vector.broadcast %c0_i32_49 : i32 to vector<64x64xi32>
    %114 = arith.cmpi slt, %110, %113 : vector<64x64xi32>
    %c0_i32_50 = arith.constant 0 : i32
    %115 = arith.cmpi slt, %108, %c0_i32_50 : i32
    %116 = vector.broadcast %115 : i1 to vector<64x64xi1>
    %117 = vector.broadcast %116 : vector<64x64xi1> to vector<64x64xi1>
    %118 = arith.xori %114, %117 : vector<64x64xi1>
    %119 = arith.andi %118, %112 : vector<64x64xi1>
    %120 = vector.broadcast %108 : i32 to vector<64x64xi32>
    %121 = arith.addi %110, %120 : vector<64x64xi32>
    %122 = arith.select %119, %121, %110 : vector<64x64xi1>, vector<64x64xi32>
    %c0_i32_51 = arith.constant 0 : i32
    %123 = vector.broadcast %c0_i32_51 : i32 to vector<64x64xi32>
    %124 = arith.cmpi eq, %122, %123 : vector<64x64xi32>
    %cst_52 = arith.constant 0.000000e+00 : f32
    %125 = vector.broadcast %cst_52 : f32 to vector<64x64xf32>
    %126 = arith.select %124, %125, %105 : vector<64x64xi1>, vector<64x64xf32>
    %cst_53 = arith.constant 0.000000e+00 : f32
    %127 = vector.broadcast %cst_53 : f32 to vector<1x64xf32>
    %128 = vector.extract_strided_slice %102 {offsets = [1, 0], sizes = [63, 64], strides = [1, 1]} : vector<64x64xf32> to vector<63x64xf32>
    %129 = tpu.concatenate %128, %127 in 0 : vector<63x64xf32>, vector<1x64xf32> -> vector<64x64xf32>
    %130 = tpu.iota {dimensions = array<i32: 0>} : vector<64x64xi32>
    %c8_i32_54 = arith.constant 8 : i32
    %c0_i32_55 = arith.constant 0 : i32
    %131 = arith.cmpi eq, %c8_i32_54, %c0_i32_55 : i32
    %c1_i32_56 = arith.constant 1 : i32
    %132 = arith.select %131, %c1_i32_56, %c8_i32_54 : i32
    %133 = vector.broadcast %132 : i32 to vector<64x64xi32>
    %134 = arith.remsi %130, %133 : vector<64x64xi32>
    %c0_i32_57 = arith.constant 0 : i32
    %135 = vector.broadcast %c0_i32_57 : i32 to vector<64x64xi32>
    %136 = arith.cmpi ne, %134, %135 : vector<64x64xi32>
    %c0_i32_58 = arith.constant 0 : i32
    %137 = vector.broadcast %c0_i32_58 : i32 to vector<64x64xi32>
    %138 = arith.cmpi slt, %134, %137 : vector<64x64xi32>
    %c0_i32_59 = arith.constant 0 : i32
    %139 = arith.cmpi slt, %132, %c0_i32_59 : i32
    %140 = vector.broadcast %139 : i1 to vector<64x64xi1>
    %141 = vector.broadcast %140 : vector<64x64xi1> to vector<64x64xi1>
    %142 = arith.xori %138, %141 : vector<64x64xi1>
    %143 = arith.andi %142, %136 : vector<64x64xi1>
    %144 = vector.broadcast %132 : i32 to vector<64x64xi32>
    %145 = arith.addi %134, %144 : vector<64x64xi32>
    %146 = arith.select %143, %145, %134 : vector<64x64xi1>, vector<64x64xi32>
    %c7_i32_60 = arith.constant 7 : i32
    %147 = vector.broadcast %c7_i32_60 : i32 to vector<64x64xi32>
    %148 = arith.cmpi eq, %146, %147 : vector<64x64xi32>
    %cst_61 = arith.constant 0.000000e+00 : f32
    %149 = vector.broadcast %cst_61 : f32 to vector<64x64xf32>
    %150 = arith.select %148, %149, %129 : vector<64x64xi1>, vector<64x64xf32>
    %151 = tpu.concatenate %126, %102, %150 in 1 : vector<64x64xf32>, vector<64x64xf32>, vector<64x64xf32> -> vector<64x192xf32>
    %152 = arith.truncf %151 : vector<64x192xf32> to vector<64x192xbf16>
    %c0_62 = arith.constant 0 : index
    %c0_63 = arith.constant 0 : index
    %153 = vector.load %arg6[%c0_62, %c0_63] : memref<192x64xbf16, #tpu.memory_space<vmem>>, vector<192x64xbf16>
    %cst_64 = arith.constant dense<0.000000e+00> : vector<64x64xf32>
    %154 = tpu.matmul %152, %153, %cst_64 {dimension_numbers = #tpu.dot_dimension_numbers<[1], [0], [0], [1], [0, 0, 1, 1], [], []>} : vector<64x192xbf16>, vector<192x64xbf16>, vector<64x64xf32> -> vector<64x64xf32>
    %c0_65 = arith.constant 0 : index
    %c0_66 = arith.constant 0 : index
    %155 = vector.load %arg7[%c0_65, %c0_66] : memref<1x64xf32, #tpu.memory_space<vmem>>, vector<1x64xf32>
    %156 = vector.broadcast %155 : vector<1x64xf32> to vector<64x64xf32>
    %157 = arith.addf %154, %156 : vector<64x64xf32>
    %158 = arith.addf %45, %157 : vector<64x64xf32>
    %cst_67 = arith.constant 0.000000e+00 : f32
    %159 = vector.broadcast %cst_67 : f32 to vector<64x64xf32>
    %160 = arith.maximumf %158, %159 : vector<64x64xf32>
    %c0_68 = arith.constant 0 : index
    %c0_69 = arith.constant 0 : index
    %161 = vector.load %arg18[%c0_68, %c0_69] : memref<64x64xf32, #tpu.memory_space<vmem>>, vector<64x64xf32>
    tpu.vector_store %arg18[%c0_68, %c0_69], %160 {strides = array<i32>} : memref<64x64xf32, #tpu.memory_space<vmem>>, vector<64x64xf32>,
    %c0_70 = arith.constant 0 : index
    %c0_71 = arith.constant 0 : index
    %162 = tpu.strided_load %arg18[%c0_70, %c0_71] {strides = array<i32: 2, 1>} : memref<64x64xf32, #tpu.memory_space<vmem>>, vector<32x64xf32>
    %c1_72 = arith.constant 1 : index
    %c0_73 = arith.constant 0 : index
    %163 = tpu.strided_load %arg18[%c1_72, %c0_73] {strides = array<i32: 2, 1>} : memref<64x64xf32, #tpu.memory_space<vmem>>, vector<32x64xf32>
    %cst_74 = arith.constant 0.000000e+00 : f32
    %164 = vector.broadcast %cst_74 : f32 to vector<1x64xf32>
    %165 = vector.extract_strided_slice %163 {offsets = [0, 0], sizes = [31, 64], strides = [1, 1]} : vector<32x64xf32> to vector<31x64xf32>
    %166 = tpu.concatenate %164, %165 in 0 : vector<1x64xf32>, vector<31x64xf32> -> vector<32x64xf32>
    %167 = tpu.iota {dimensions = array<i32: 0>} : vector<32x64xi32>
    %c4_i32 = arith.constant 4 : i32
    %c0_i32_75 = arith.constant 0 : i32
    %168 = arith.cmpi eq, %c4_i32, %c0_i32_75 : i32
    %c1_i32_76 = arith.constant 1 : i32
    %169 = arith.select %168, %c1_i32_76, %c4_i32 : i32
    %170 = vector.broadcast %169 : i32 to vector<32x64xi32>
    %171 = arith.remsi %167, %170 : vector<32x64xi32>
    %c0_i32_77 = arith.constant 0 : i32
    %172 = vector.broadcast %c0_i32_77 : i32 to vector<32x64xi32>
    %173 = arith.cmpi ne, %171, %172 : vector<32x64xi32>
    %c0_i32_78 = arith.constant 0 : i32
    %174 = vector.broadcast %c0_i32_78 : i32 to vector<32x64xi32>
    %175 = arith.cmpi slt, %171, %174 : vector<32x64xi32>
    %c0_i32_79 = arith.constant 0 : i32
    %176 = arith.cmpi slt, %169, %c0_i32_79 : i32
    %177 = vector.broadcast %176 : i1 to vector<32x64xi1>
    %178 = vector.broadcast %177 : vector<32x64xi1> to vector<32x64xi1>
    %179 = arith.xori %175, %178 : vector<32x64xi1>
    %180 = arith.andi %179, %173 : vector<32x64xi1>
    %181 = vector.broadcast %169 : i32 to vector<32x64xi32>
    %182 = arith.addi %171, %181 : vector<32x64xi32>
    %183 = arith.select %180, %182, %171 : vector<32x64xi1>, vector<32x64xi32>
    %c0_i32_80 = arith.constant 0 : i32
    %184 = vector.broadcast %c0_i32_80 : i32 to vector<32x64xi32>
    %185 = arith.cmpi eq, %183, %184 : vector<32x64xi32>
    %cst_81 = arith.constant 0.000000e+00 : f32
    %186 = vector.broadcast %cst_81 : f32 to vector<32x64xf32>
    %187 = arith.select %185, %186, %166 : vector<32x64xi1>, vector<32x64xf32>
    %188 = tpu.concatenate %187, %162, %163 in 1 : vector<32x64xf32>, vector<32x64xf32>, vector<32x64xf32> -> vector<32x192xf32>
    %189 = arith.truncf %188 : vector<32x192xf32> to vector<32x192xbf16>
    %c0_82 = arith.constant 0 : index
    %c0_83 = arith.constant 0 : index
    %190 = vector.load %arg8[%c0_82, %c0_83] : memref<192x64xbf16, #tpu.memory_space<vmem>>, vector<192x64xbf16>
    %cst_84 = arith.constant dense<0.000000e+00> : vector<32x64xf32>
    %191 = tpu.matmul %189, %190, %cst_84 {dimension_numbers = #tpu.dot_dimension_numbers<[1], [0], [0], [1], [0, 0, 1, 1], [], []>} : vector<32x192xbf16>, vector<192x64xbf16>, vector<32x64xf32> -> vector<32x64xf32>
    %c0_85 = arith.constant 0 : index
    %c0_86 = arith.constant 0 : index
    %192 = vector.load %arg9[%c0_85, %c0_86] : memref<1x64xf32, #tpu.memory_space<vmem>>, vector<1x64xf32>
    %193 = vector.broadcast %192 : vector<1x64xf32> to vector<32x64xf32>
    %194 = arith.addf %191, %193 : vector<32x64xf32>
    %cst_87 = arith.constant 0.000000e+00 : f32
    %195 = vector.broadcast %cst_87 : f32 to vector<32x64xf32>
    %196 = arith.maximumf %194, %195 : vector<32x64xf32>
    %cst_88 = arith.constant 0.000000e+00 : f32
    %197 = vector.broadcast %cst_88 : f32 to vector<1x64xf32>
    %198 = vector.extract_strided_slice %196 {offsets = [0, 0], sizes = [31, 64], strides = [1, 1]} : vector<32x64xf32> to vector<31x64xf32>
    %199 = tpu.concatenate %197, %198 in 0 : vector<1x64xf32>, vector<31x64xf32> -> vector<32x64xf32>
    %200 = tpu.iota {dimensions = array<i32: 0>} : vector<32x64xi32>
    %c4_i32_89 = arith.constant 4 : i32
    %c0_i32_90 = arith.constant 0 : i32
    %201 = arith.cmpi eq, %c4_i32_89, %c0_i32_90 : i32
    %c1_i32_91 = arith.constant 1 : i32
    %202 = arith.select %201, %c1_i32_91, %c4_i32_89 : i32
    %203 = vector.broadcast %202 : i32 to vector<32x64xi32>
    %204 = arith.remsi %200, %203 : vector<32x64xi32>
    %c0_i32_92 = arith.constant 0 : i32
    %205 = vector.broadcast %c0_i32_92 : i32 to vector<32x64xi32>
    %206 = arith.cmpi ne, %204, %205 : vector<32x64xi32>
    %c0_i32_93 = arith.constant 0 : i32
    %207 = vector.broadcast %c0_i32_93 : i32 to vector<32x64xi32>
    %208 = arith.cmpi slt, %204, %207 : vector<32x64xi32>
    %c0_i32_94 = arith.constant 0 : i32
    %209 = arith.cmpi slt, %202, %c0_i32_94 : i32
    %210 = vector.broadcast %209 : i1 to vector<32x64xi1>
    %211 = vector.broadcast %210 : vector<32x64xi1> to vector<32x64xi1>
    %212 = arith.xori %208, %211 : vector<32x64xi1>
    %213 = arith.andi %212, %206 : vector<32x64xi1>
    %214 = vector.broadcast %202 : i32 to vector<32x64xi32>
    %215 = arith.addi %204, %214 : vector<32x64xi32>
    %216 = arith.select %213, %215, %204 : vector<32x64xi1>, vector<32x64xi32>
    %c0_i32_95 = arith.constant 0 : i32
    %217 = vector.broadcast %c0_i32_95 : i32 to vector<32x64xi32>
    %218 = arith.cmpi eq, %216, %217 : vector<32x64xi32>
    %cst_96 = arith.constant 0.000000e+00 : f32
    %219 = vector.broadcast %cst_96 : f32 to vector<32x64xf32>
    %220 = arith.select %218, %219, %199 : vector<32x64xi1>, vector<32x64xf32>
    %cst_97 = arith.constant 0.000000e+00 : f32
    %221 = vector.broadcast %cst_97 : f32 to vector<1x64xf32>
    %222 = vector.extract_strided_slice %196 {offsets = [1, 0], sizes = [31, 64], strides = [1, 1]} : vector<32x64xf32> to vector<31x64xf32>
    %223 = tpu.concatenate %222, %221 in 0 : vector<31x64xf32>, vector<1x64xf32> -> vector<32x64xf32>
    %224 = tpu.iota {dimensions = array<i32: 0>} : vector<32x64xi32>
    %c4_i32_98 = arith.constant 4 : i32
    %c0_i32_99 = arith.constant 0 : i32
    %225 = arith.cmpi eq, %c4_i32_98, %c0_i32_99 : i32
    %c1_i32_100 = arith.constant 1 : i32
    %226 = arith.select %225, %c1_i32_100, %c4_i32_98 : i32
    %227 = vector.broadcast %226 : i32 to vector<32x64xi32>
    %228 = arith.remsi %224, %227 : vector<32x64xi32>
    %c0_i32_101 = arith.constant 0 : i32
    %229 = vector.broadcast %c0_i32_101 : i32 to vector<32x64xi32>
    %230 = arith.cmpi ne, %228, %229 : vector<32x64xi32>
    %c0_i32_102 = arith.constant 0 : i32
    %231 = vector.broadcast %c0_i32_102 : i32 to vector<32x64xi32>
    %232 = arith.cmpi slt, %228, %231 : vector<32x64xi32>
    %c0_i32_103 = arith.constant 0 : i32
    %233 = arith.cmpi slt, %226, %c0_i32_103 : i32
    %234 = vector.broadcast %233 : i1 to vector<32x64xi1>
    %235 = vector.broadcast %234 : vector<32x64xi1> to vector<32x64xi1>
    %236 = arith.xori %232, %235 : vector<32x64xi1>
    %237 = arith.andi %236, %230 : vector<32x64xi1>
    %238 = vector.broadcast %226 : i32 to vector<32x64xi32>
    %239 = arith.addi %228, %238 : vector<32x64xi32>
    %240 = arith.select %237, %239, %228 : vector<32x64xi1>, vector<32x64xi32>
    %c3_i32 = arith.constant 3 : i32
    %241 = vector.broadcast %c3_i32 : i32 to vector<32x64xi32>
    %242 = arith.cmpi eq, %240, %241 : vector<32x64xi32>
    %cst_104 = arith.constant 0.000000e+00 : f32
    %243 = vector.broadcast %cst_104 : f32 to vector<32x64xf32>
    %244 = arith.select %242, %243, %223 : vector<32x64xi1>, vector<32x64xf32>
    %245 = tpu.concatenate %220, %196, %244 in 1 : vector<32x64xf32>, vector<32x64xf32>, vector<32x64xf32> -> vector<32x192xf32>
    %246 = arith.truncf %245 : vector<32x192xf32> to vector<32x192xbf16>
    %c0_105 = arith.constant 0 : index
    %c0_106 = arith.constant 0 : index
    %247 = vector.load %arg10[%c0_105, %c0_106] : memref<192x64xbf16, #tpu.memory_space<vmem>>, vector<192x64xbf16>
    %cst_107 = arith.constant dense<0.000000e+00> : vector<32x64xf32>
    %248 = tpu.matmul %246, %247, %cst_107 {dimension_numbers = #tpu.dot_dimension_numbers<[1], [0], [0], [1], [0, 0, 1, 1], [], []>} : vector<32x192xbf16>, vector<192x64xbf16>, vector<32x64xf32> -> vector<32x64xf32>
    %c0_108 = arith.constant 0 : index
    %c0_109 = arith.constant 0 : index
    %249 = vector.load %arg11[%c0_108, %c0_109] : memref<1x64xf32, #tpu.memory_space<vmem>>, vector<1x64xf32>
    %250 = vector.broadcast %249 : vector<1x64xf32> to vector<32x64xf32>
    %251 = arith.addf %248, %250 : vector<32x64xf32>
    %252 = arith.addf %162, %163 : vector<32x64xf32>
    %c0_110 = arith.constant 0 : index
    %c0_111 = arith.constant 0 : index
    %253 = vector.load %arg13[%c0_110, %c0_111] : memref<64x64xf32, #tpu.memory_space<vmem>>, vector<64x64xf32>
    %cst_112 = arith.constant dense<0.000000e+00> : vector<32x64xf32>
    %254 = tpu.matmul %252, %253, %cst_112 {dimension_numbers = #tpu.dot_dimension_numbers<[1], [0], [0], [1], [0, 0, 1, 1], [], []>} : vector<32x64xf32>, vector<64x64xf32>, vector<32x64xf32> -> vector<32x64xf32>
    %255 = arith.addf %254, %251 : vector<32x64xf32>
    %cst_113 = arith.constant 0.000000e+00 : f32
    %256 = vector.broadcast %cst_113 : f32 to vector<32x64xf32>
    %257 = arith.maximumf %255, %256 : vector<32x64xf32>
    %c0_114 = arith.constant 0 : index
    %c0_115 = arith.constant 0 : index
    %258 = vector.load %arg19[%c0_114, %c0_115] : memref<32x64xf32, #tpu.memory_space<vmem>>, vector<32x64xf32>
    tpu.vector_store %arg19[%c0_114, %c0_115], %257 {strides = array<i32>} : memref<32x64xf32, #tpu.memory_space<vmem>>, vector<32x64xf32>,
    %c0_116 = arith.constant 0 : index
    %c0_117 = arith.constant 0 : index
    %259 = tpu.strided_load %arg19[%c0_116, %c0_117] {strides = array<i32: 4, 1>} : memref<32x64xf32, #tpu.memory_space<vmem>>, vector<8x64xf32>
    %c1_118 = arith.constant 1 : index
    %c0_119 = arith.constant 0 : index
    %260 = tpu.strided_load %arg19[%c1_118, %c0_119] {strides = array<i32: 4, 1>} : memref<32x64xf32, #tpu.memory_space<vmem>>, vector<8x64xf32>
    %261 = arith.addf %259, %260 : vector<8x64xf32>
    %c2 = arith.constant 2 : index
    %c0_120 = arith.constant 0 : index
    %262 = tpu.strided_load %arg19[%c2, %c0_120] {strides = array<i32: 4, 1>} : memref<32x64xf32, #tpu.memory_space<vmem>>, vector<8x64xf32>
    %263 = arith.addf %261, %262 : vector<8x64xf32>
    %c3 = arith.constant 3 : index
    %c0_121 = arith.constant 0 : index
    %264 = tpu.strided_load %arg19[%c3, %c0_121] {strides = array<i32: 4, 1>} : memref<32x64xf32, #tpu.memory_space<vmem>>, vector<8x64xf32>
    %265 = arith.addf %263, %264 : vector<8x64xf32>
    %c0_122 = arith.constant 0 : index
    %c0_123 = arith.constant 0 : index
    %266 = vector.load %arg14[%c0_122, %c0_123] : memref<64x10xf32, #tpu.memory_space<vmem>>, vector<64x10xf32>
    %cst_124 = arith.constant dense<0.000000e+00> : vector<8x10xf32>
    %267 = tpu.matmul %265, %266, %cst_124 {dimension_numbers = #tpu.dot_dimension_numbers<[1], [0], [0], [1], [0, 0, 1, 1], [], []>} : vector<8x64xf32>, vector<64x10xf32>, vector<8x10xf32> -> vector<8x10xf32>
    %c0_125 = arith.constant 0 : index
    %c0_126 = arith.constant 0 : index
    %268 = vector.load %arg15[%c0_125, %c0_126] : memref<1x10xf32, #tpu.memory_space<vmem>>, vector<1x10xf32>
    %269 = vector.broadcast %268 : vector<1x10xf32> to vector<8x10xf32>
    %270 = arith.addf %267, %269 : vector<8x10xf32>
    %c0_127 = arith.constant 0 : index
    %c0_128 = arith.constant 0 : index
    %271 = vector.load %arg16[%c0_127, %c0_128] : memref<8x10xf32, #tpu.memory_space<vmem>>, vector<8x10xf32>
    tpu.vector_store %arg16[%c0_127, %c0_128], %270 {strides = array<i32>} : memref<8x10xf32, #tpu.memory_space<vmem>>, vector<8x10xf32>,
    return
  }
  func.func @transform_0(%arg0: i32) -> (i32, i32) {
    %c0_i32 = arith.constant 0 : i32
    %c0_i32_0 = arith.constant 0 : i32
    return %arg0, %c0_i32 : i32, i32
  }
  func.func @transform_1(%arg0: i32) -> (i32, i32) {
    %c0_i32 = arith.constant 0 : i32
    %c0_i32_0 = arith.constant 0 : i32
    %c0_i32_1 = arith.constant 0 : i32
    return %c0_i32, %c0_i32_0 : i32, i32
  }
  func.func @transform_2(%arg0: i32) -> (i32, i32) {
    %c0_i32 = arith.constant 0 : i32
    %c0_i32_0 = arith.constant 0 : i32
    %c0_i32_1 = arith.constant 0 : i32
    return %c0_i32, %c0_i32_0 : i32, i32
  }
  func.func @transform_3(%arg0: i32) -> (i32, i32) {
    %c0_i32 = arith.constant 0 : i32
    %c0_i32_0 = arith.constant 0 : i32
    %c0_i32_1 = arith.constant 0 : i32
    return %c0_i32, %c0_i32_0 : i32, i32
  }
  func.func @transform_4(%arg0: i32) -> (i32, i32) {
    %c0_i32 = arith.constant 0 : i32
    %c0_i32_0 = arith.constant 0 : i32
    %c0_i32_1 = arith.constant 0 : i32
    return %c0_i32, %c0_i32_0 : i32, i32
  }
  func.func @transform_5(%arg0: i32) -> (i32, i32) {
    %c0_i32 = arith.constant 0 : i32
    %c0_i32_0 = arith.constant 0 : i32
    %c0_i32_1 = arith.constant 0 : i32
    return %c0_i32, %c0_i32_0 : i32, i32
  }
  func.func @transform_6(%arg0: i32) -> (i32, i32) {
    %c0_i32 = arith.constant 0 : i32
    %c0_i32_0 = arith.constant 0 : i32
    %c0_i32_1 = arith.constant 0 : i32
    return %c0_i32, %c0_i32_0 : i32, i32
  }
  func.func @transform_7(%arg0: i32) -> (i32, i32) {
    %c0_i32 = arith.constant 0 : i32
    %c0_i32_0 = arith.constant 0 : i32
    %c0_i32_1 = arith.constant 0 : i32
    return %c0_i32, %c0_i32_0 : i32, i32
  }
  func.func @transform_8(%arg0: i32) -> (i32, i32) {
    %c0_i32 = arith.constant 0 : i32
    %c0_i32_0 = arith.constant 0 : i32
    %c0_i32_1 = arith.constant 0 : i32
    return %c0_i32, %c0_i32_0 : i32, i32
  }
  func.func @transform_9(%arg0: i32) -> (i32, i32) {
    %c0_i32 = arith.constant 0 : i32
    %c0_i32_0 = arith.constant 0 : i32
    %c0_i32_1 = arith.constant 0 : i32
    return %c0_i32, %c0_i32_0 : i32, i32
  }
  func.func @transform_10(%arg0: i32) -> (i32, i32) {
    %c0_i32 = arith.constant 0 : i32
    %c0_i32_0 = arith.constant 0 : i32
    %c0_i32_1 = arith.constant 0 : i32
    return %c0_i32, %c0_i32_0 : i32, i32
  }
  func.func @transform_11(%arg0: i32) -> (i32, i32) {
    %c0_i32 = arith.constant 0 : i32
    %c0_i32_0 = arith.constant 0 : i32
    %c0_i32_1 = arith.constant 0 : i32
    return %c0_i32, %c0_i32_0 : i32, i32
  }
  func.func @transform_12(%arg0: i32) -> (i32, i32) {
    %c0_i32 = arith.constant 0 : i32
    %c0_i32_0 = arith.constant 0 : i32
    %c0_i32_1 = arith.constant 0 : i32
    return %c0_i32, %c0_i32_0 : i32, i32
  }
  func.func @transform_13(%arg0: i32) -> (i32, i32) {
    %c0_i32 = arith.constant 0 : i32
    %c0_i32_0 = arith.constant 0 : i32
    %c0_i32_1 = arith.constant 0 : i32
    return %c0_i32, %c0_i32_0 : i32, i32
  }
  func.func @transform_14(%arg0: i32) -> (i32, i32) {
    %c0_i32 = arith.constant 0 : i32
    %c0_i32_0 = arith.constant 0 : i32
    %c0_i32_1 = arith.constant 0 : i32
    return %c0_i32, %c0_i32_0 : i32, i32
  }
  func.func @transform_15(%arg0: i32) -> (i32, i32) {
    %c0_i32 = arith.constant 0 : i32
    %c0_i32_0 = arith.constant 0 : i32
    return %arg0, %c0_i32 : i32, i32
  }
}

</mosaic_0001>

<llo_original>
// kernel: resnet_forward.1
$region0: #{resnet_forward.1}
  #allocation0 [shape = 'u32[]', space=smem, size = 0x4, offset = 0x4, fixed_abs, tag = 'smem constant byte address 0x4 - core index']
  #allocation1 [shape = 'u32[144,128]{1,0:T(1,128)}', space=vmem, size = 0x12000, scoped, tag = 'internal scratch']
  #allocation2 [shape = 'f32[128,128]{1,0:T(8,128)}', space=vmem, size = 0x10000, scoped, tag = 'scratch operand']
  #allocation3 [shape = 'f32[64,64]{1,0:T(8,128)}', space=vmem, size = 0x8000, scoped, tag = 'scratch operand']
  #allocation4 [shape = 'f32[32,64]{1,0:T(8,128)}', space=vmem, size = 0x4000, scoped, tag = 'scratch operand']
  %s0 = inlined_call_operand.vmem [shape: bf16[256,288], index: 0, kind: input, shape index: {}]
  %s1 = inlined_call_operand.vmem [shape: bf16[288,128], index: 1, kind: input, shape index: {}]
  %s2 = inlined_call_operand.vmem [shape: f32[1,128], index: 2, kind: input, shape index: {}]
  %s3 = inlined_call_operand.vmem [shape: bf16[192,64], index: 3, kind: input, shape index: {}]
  %s4 = inlined_call_operand.vmem [shape: f32[1,64], index: 4, kind: input, shape index: {}]
  %s5 = inlined_call_operand.vmem [shape: bf16[192,64], index: 5, kind: input, shape index: {}]
  %s6 = inlined_call_operand.vmem [shape: f32[1,64], index: 6, kind: input, shape index: {}]
  %s7 = inlined_call_operand.vmem [shape: bf16[192,64], index: 7, kind: input, shape index: {}]
  %s8 = inlined_call_operand.vmem [shape: f32[1,64], index: 8, kind: input, shape index: {}]
  %s9 = inlined_call_operand.vmem [shape: bf16[192,64], index: 9, kind: input, shape index: {}]
  %s10 = inlined_call_operand.vmem [shape: f32[1,64], index: 10, kind: input, shape index: {}]
  %s11 = inlined_call_operand.vmem [shape: f32[128,64], index: 11, kind: input, shape index: {}]
  %s12 = inlined_call_operand.vmem [shape: f32[64,64], index: 12, kind: input, shape index: {}]
  %s13 = inlined_call_operand.vmem [shape: f32[64,10], index: 13, kind: input, shape index: {}]
  %s14 = inlined_call_operand.vmem [shape: f32[1,10], index: 14, kind: input, shape index: {}]
  %s15 = inlined_call_operand.hbm [shape: f32[16,10], index: 15, kind: output, shape index: {}]
  %s16 = sld [smem:[#allocation0]]
  $region93: #{resnet_forward.1} parent=0
    _
  %s18 = ssub.s32 1, %s16
  %s19 = scalar_select 0, %s18, %s16
  $region1: #{resnet_forward.1} parent=0
    #allocation5 [shape = 'u8[8192]{0}', space=vmem, size = 0x2000, scoped, tag = 'output window, operand 0']
    #allocation6 [shape = 's32[2]{0}', space=sflag, size = 0x8, scoped, tag = 'scoped memory for resnet_forward.1']
    %20 = vsyncpa [#allocation6], 0
    %s21 = scalar_lea.sflag [#allocation6], 1
    %22 = vsyncpa %s21, 0
    loop: start=0, step=1, limit=4
    $region2: #{resnet_forward.1} parent=1 // loop_pre_header
      _
    $region3: #{resnet_forward.1} parent=1 // loop_header
      %s24 = sphi 0, %s28
      %p25 = scmp.ge.s32.totalorder %s24, 4
      %s34 = sphi 0, %s36
      %s37 = sphi 0, %s34
      %s38 = sphi 0, %s37
      %s54 = sphi 0, %s38
      %s58 = sphi 0, %s58
      %s60 = sphi 0, %s58
      %s61 = sphi 0, %s60
      %s75 = sphi 0, %s61
      %s79 = sphi 0, %s79
      %s81 = sphi 0, %s79
      %s82 = sphi 0, %s81
      %s96 = sphi 0, %s82
      %s100 = sphi 0, %s100
      %s102 = sphi 0, %s100
      %s103 = sphi 0, %s102
      %s117 = sphi 0, %s103
      %s121 = sphi 0, %s121
      %s123 = sphi 0, %s121
      %s124 = sphi 0, %s123
      %s138 = sphi 0, %s124
      %s142 = sphi 0, %s142
      %s144 = sphi 0, %s142
      %s145 = sphi 0, %s144
      %s159 = sphi 0, %s145
      %s163 = sphi 0, %s163
      %s165 = sphi 0, %s163
      %s166 = sphi 0, %s165
      %s180 = sphi 0, %s166
      %s184 = sphi 0, %s184
      %s186 = sphi 0, %s184
      %s187 = sphi 0, %s186
      %s201 = sphi 0, %s187
      %s205 = sphi 0, %s205
      %s207 = sphi 0, %s205
      %s208 = sphi 0, %s207
      %s222 = sphi 0, %s208
      %s226 = sphi 0, %s226
      %s228 = sphi 0, %s226
      %s229 = sphi 0, %s228
      %s243 = sphi 0, %s229
      %s247 = sphi 0, %s247
      %s249 = sphi 0, %s247
      %s250 = sphi 0, %s249
      %s264 = sphi 0, %s250
      %s268 = sphi 0, %s268
      %s270 = sphi 0, %s268
      %s271 = sphi 0, %s270
      %s285 = sphi 0, %s271
      %s289 = sphi 0, %s289
      %s291 = sphi 0, %s289
      %s292 = sphi 0, %s291
      %s306 = sphi 0, %s292
      %s310 = sphi 0, %s310
      %s312 = sphi 0, %s310
      %s313 = sphi 0, %s312
      %s327 = sphi 0, %s313
      %s331 = sphi 0, %s331
      %s333 = sphi 0, %s331
      %s334 = sphi 0, %s333
      %s348 = sphi 0, %s334
      %s354 = sphi 0, %s356
      %s357 = sphi 0, %s354
      %s358 = sphi 0, %s357
      %s374 = sphi 0, %s358
    $region4: #{resnet_forward.1} parent=1 // loop_header_branch
      %27 = sbr.rel (%p25) target = $region8
    $region5: #{resnet_forward.1} parent=1 // loop_body
      %s29 = ssub.s32 %s24, 1
      %s30 = ssub.s32 %s24, 2
      %s31 = sadd.s32 %s24, 1
      %s32 = ssub.s32 %s24, %s31
      %p33 = scmp.eq.s32.totalorder %s32, 0
      %s35 = sadd.s32 %s34, 1
      %s36 = scalar_select %p33, %s34, %s35
      %p39 = pneg %p33
      %p40 = scmp.eq.s32.totalorder %s24, 1
      %p41 = por %p39, %p40
      %p42 = scmp.ne.s32.totalorder %s34, %s37
      %p43 = scmp.eq.s32.totalorder %s24, 0
      %p44 = por %p42, %p43
      %p45 = scmp.ne.s32.totalorder %s34, %s37
      %p46 = scmp.eq.s32.totalorder %s29, 1
      %p47 = por %p45, %p46
      %p48 = scmp.ne.s32.totalorder %s37, %s38
      %p49 = scmp.eq.s32.totalorder %s29, 0
      %p50 = por %p48, %p49
      %p51 = scmp.ne.s32.totalorder %s37, %s38
      %p52 = scmp.eq.s32.totalorder %s30, 1
      %p53 = por %p51, %p52
      %p55 = scmp.ne.s32.totalorder %s38, %s54
      %p56 = scmp.eq.s32.totalorder %s30, 0
      %p57 = por %p55, %p56
      %s59 = sadd.s32 %s58, 1
      %p62 = scmp.eq.s32.totalorder %s24, 1
      %p63 = scmp.ne.s32.totalorder %s58, %s60
      %p64 = scmp.eq.s32.totalorder %s24, 0
      %p65 = por %p63, %p64
      %p66 = scmp.ne.s32.totalorder %s58, %s60
      %p67 = scmp.eq.s32.totalorder %s29, 1
      %p68 = por %p66, %p67
      %p69 = scmp.ne.s32.totalorder %s60, %s61
      %p70 = scmp.eq.s32.totalorder %s29, 0
      %p71 = por %p69, %p70
      %p72 = scmp.ne.s32.totalorder %s60, %s61
      %p73 = scmp.eq.s32.totalorder %s30, 1
      %p74 = por %p72, %p73
      %p76 = scmp.ne.s32.totalorder %s61, %s75
      %p77 = scmp.eq.s32.totalorder %s30, 0
      %p78 = por %p76, %p77
      %s80 = sadd.s32 %s79, 1
      %p83 = scmp.eq.s32.totalorder %s24, 1
      %p84 = scmp.ne.s32.totalorder %s79, %s81
      %p85 = scmp.eq.s32.totalorder %s24, 0
      %p86 = por %p84, %p85
      %p87 = scmp.ne.s32.totalorder %s79, %s81
      %p88 = scmp.eq.s32.totalorder %s29, 1
      %p89 = por %p87, %p88
      %p90 = scmp.ne.s32.totalorder %s81, %s82
      %p91 = scmp.eq.s32.totalorder %s29, 0
      %p92 = por %p90, %p91
      %p93 = scmp.ne.s32.totalorder %s81, %s82
      %p94 = scmp.eq.s32.totalorder %s30, 1
      %p95 = por %p93, %p94
      %p97 = scmp.ne.s32.totalorder %s82, %s96
      %p98 = scmp.eq.s32.totalorder %s30, 0
      %p99 = por %p97, %p98
      %s101 = sadd.s32 %s100, 1
      %p104 = scmp.eq.s32.totalorder %s24, 1
      %p105 = scmp.ne.s32.totalorder %s100, %s102
      %p106 = scmp.eq.s32.totalorder %s24, 0
      %p107 = por %p105, %p106
      %p108 = scmp.ne.s32.totalorder %s100, %s102
      %p109 = scmp.eq.s32.totalorder %s29, 1
      %p110 = por %p108, %p109
      %p111 = scmp.ne.s32.totalorder %s102, %s103
      %p112 = scmp.eq.s32.totalorder %s29, 0
      %p113 = por %p111, %p112
      %p114 = scmp.ne.s32.totalorder %s102, %s103
      %p115 = scmp.eq.s32.totalorder %s30, 1
      %p116 = por %p114, %p115
      %p118 = scmp.ne.s32.totalorder %s103, %s117
      %p119 = scmp.eq.s32.totalorder %s30, 0
      %p120 = por %p118, %p119
      %s122 = sadd.s32 %s121, 1
      %p125 = scmp.eq.s32.totalorder %s24, 1
      %p126 = scmp.ne.s32.totalorder %s121, %s123
      %p127 = scmp.eq.s32.totalorder %s24, 0
      %p128 = por %p126, %p127
      %p129 = scmp.ne.s32.totalorder %s121, %s123
      %p130 = scmp.eq.s32.totalorder %s29, 1
      %p131 = por %p129, %p130
      %p132 = scmp.ne.s32.totalorder %s123, %s124
      %p133 = scmp.eq.s32.totalorder %s29, 0
      %p134 = por %p132, %p133
      %p135 = scmp.ne.s32.totalorder %s123, %s124
      %p136 = scmp.eq.s32.totalorder %s30, 1
      %p137 = por %p135, %p136
      %p139 = scmp.ne.s32.totalorder %s124, %s138
      %p140 = scmp.eq.s32.totalorder %s30, 0
      %p141 = por %p139, %p140
      %s143 = sadd.s32 %s142, 1
      %p146 = scmp.eq.s32.totalorder %s24, 1
      %p147 = scmp.ne.s32.totalorder %s142, %s144
      %p148 = scmp.eq.s32.totalorder %s24, 0
      %p149 = por %p147, %p148
      %p150 = scmp.ne.s32.totalorder %s142, %s144
      %p151 = scmp.eq.s32.totalorder %s29, 1
      %p152 = por %p150, %p151
      %p153 = scmp.ne.s32.totalorder %s144, %s145
      %p154 = scmp.eq.s32.totalorder %s29, 0
      %p155 = por %p153, %p154
      %p156 = scmp.ne.s32.totalorder %s144, %s145
      %p157 = scmp.eq.s32.totalorder %s30, 1
      %p158 = por %p156, %p157
      %p160 = scmp.ne.s32.totalorder %s145, %s159
      %p161 = scmp.eq.s32.totalorder %s30, 0
      %p162 = por %p160, %p161
      %s164 = sadd.s32 %s163, 1
      %p167 = scmp.eq.s32.totalorder %s24, 1
      %p168 = scmp.ne.s32.totalorder %s163, %s165
      %p169 = scmp.eq.s32.totalorder %s24, 0
      %p170 = por %p168, %p169
      %p171 = scmp.ne.s32.totalorder %s163, %s165
      %p172 = scmp.eq.s32.totalorder %s29, 1
      %p173 = por %p171, %p172
      %p174 = scmp.ne.s32.totalorder %s165, %s166
      %p175 = scmp.eq.s32.totalorder %s29, 0
      %p176 = por %p174, %p175
      %p177 = scmp.ne.s32.totalorder %s165, %s166
      %p178 = scmp.eq.s32.totalorder %s30, 1
      %p179 = por %p177, %p178
      %p181 = scmp.ne.s32.totalorder %s166, %s180
      %p182 = scmp.eq.s32.totalorder %s30, 0
      %p183 = por %p181, %p182
      %s185 = sadd.s32 %s184, 1
      %p188 = scmp.eq.s32.totalorder %s24, 1
      %p189 = scmp.ne.s32.totalorder %s184, %s186
      %p190 = scmp.eq.s32.totalorder %s24, 0
      %p191 = por %p189, %p190
      %p192 = scmp.ne.s32.totalorder %s184, %s186
      %p193 = scmp.eq.s32.totalorder %s29, 1
      %p194 = por %p192, %p193
      %p195 = scmp.ne.s32.totalorder %s186, %s187
      %p196 = scmp.eq.s32.totalorder %s29, 0
      %p197 = por %p195, %p196
      %p198 = scmp.ne.s32.totalorder %s186, %s187
      %p199 = scmp.eq.s32.totalorder %s30, 1
      %p200 = por %p198, %p199
      %p202 = scmp.ne.s32.totalorder %s187, %s201
      %p203 = scmp.eq.s32.totalorder %s30, 0
      %p204 = por %p202, %p203
      %s206 = sadd.s32 %s205, 1
      %p209 = scmp.eq.s32.totalorder %s24, 1
      %p210 = scmp.ne.s32.totalorder %s205, %s207
      %p211 = scmp.eq.s32.totalorder %s24, 0
      %p212 = por %p210, %p211
      %p213 = scmp.ne.s32.totalorder %s205, %s207
      %p214 = scmp.eq.s32.totalorder %s29, 1
      %p215 = por %p213, %p214
      %p216 = scmp.ne.s32.totalorder %s207, %s208
      %p217 = scmp.eq.s32.totalorder %s29, 0
      %p218 = por %p216, %p217
      %p219 = scmp.ne.s32.totalorder %s207, %s208
      %p220 = scmp.eq.s32.totalorder %s30, 1
      %p221 = por %p219, %p220
      %p223 = scmp.ne.s32.totalorder %s208, %s222
      %p224 = scmp.eq.s32.totalorder %s30, 0
      %p225 = por %p223, %p224
      %s227 = sadd.s32 %s226, 1
      %p230 = scmp.eq.s32.totalorder %s24, 1
      %p231 = scmp.ne.s32.totalorder %s226, %s228
      %p232 = scmp.eq.s32.totalorder %s24, 0
      %p233 = por %p231, %p232
      %p234 = scmp.ne.s32.totalorder %s226, %s228
      %p235 = scmp.eq.s32.totalorder %s29, 1
      %p236 = por %p234, %p235
      %p237 = scmp.ne.s32.totalorder %s228, %s229
      %p238 = scmp.eq.s32.totalorder %s29, 0
      %p239 = por %p237, %p238
      %p240 = scmp.ne.s32.totalorder %s228, %s229
      %p241 = scmp.eq.s32.totalorder %s30, 1
      %p242 = por %p240, %p241
      %p244 = scmp.ne.s32.totalorder %s229, %s243
      %p245 = scmp.eq.s32.totalorder %s30, 0
      %p246 = por %p244, %p245
      %s248 = sadd.s32 %s247, 1
      %p251 = scmp.eq.s32.totalorder %s24, 1
      %p252 = scmp.ne.s32.totalorder %s247, %s249
      %p253 = scmp.eq.s32.totalorder %s24, 0
      %p254 = por %p252, %p253
      %p255 = scmp.ne.s32.totalorder %s247, %s249
      %p256 = scmp.eq.s32.totalorder %s29, 1
      %p257 = por %p255, %p256
      %p258 = scmp.ne.s32.totalorder %s249, %s250
      %p259 = scmp.eq.s32.totalorder %s29, 0
      %p260 = por %p258, %p259
      %p261 = scmp.ne.s32.totalorder %s249, %s250
      %p262 = scmp.eq.s32.totalorder %s30, 1
      %p263 = por %p261, %p262
      %p265 = scmp.ne.s32.totalorder %s250, %s264
      %p266 = scmp.eq.s32.totalorder %s30, 0
      %p267 = por %p265, %p266
      %s269 = sadd.s32 %s268, 1
      %p272 = scmp.eq.s32.totalorder %s24, 1
      %p273 = scmp.ne.s32.totalorder %s268, %s270
      %p274 = scmp.eq.s32.totalorder %s24, 0
      %p275 = por %p273, %p274
      %p276 = scmp.ne.s32.totalorder %s268, %s270
      %p277 = scmp.eq.s32.totalorder %s29, 1
      %p278 = por %p276, %p277
      %p279 = scmp.ne.s32.totalorder %s270, %s271
      %p280 = scmp.eq.s32.totalorder %s29, 0
      %p281 = por %p279, %p280
      %p282 = scmp.ne.s32.totalorder %s270, %s271
      %p283 = scmp.eq.s32.totalorder %s30, 1
      %p284 = por %p282, %p283
      %p286 = scmp.ne.s32.totalorder %s271, %s285
      %p287 = scmp.eq.s32.totalorder %s30, 0
      %p288 = por %p286, %p287
      %s290 = sadd.s32 %s289, 1
      %p293 = scmp.eq.s32.totalorder %s24, 1
      %p294 = scmp.ne.s32.totalorder %s289, %s291
      %p295 = scmp.eq.s32.totalorder %s24, 0
      %p296 = por %p294, %p295
      %p297 = scmp.ne.s32.totalorder %s289, %s291
      %p298 = scmp.eq.s32.totalorder %s29, 1
      %p299 = por %p297, %p298
      %p300 = scmp.ne.s32.totalorder %s291, %s292
      %p301 = scmp.eq.s32.totalorder %s29, 0
      %p302 = por %p300, %p301
      %p303 = scmp.ne.s32.totalorder %s291, %s292
      %p304 = scmp.eq.s32.totalorder %s30, 1
      %p305 = por %p303, %p304
      %p307 = scmp.ne.s32.totalorder %s292, %s306
      %p308 = scmp.eq.s32.totalorder %s30, 0
      %p309 = por %p307, %p308
      %s311 = sadd.s32 %s310, 1
      %p314 = scmp.eq.s32.totalorder %s24, 1
      %p315 = scmp.ne.s32.totalorder %s310, %s312
      %p316 = scmp.eq.s32.totalorder %s24, 0
      %p317 = por %p315, %p316
      %p318 = scmp.ne.s32.totalorder %s310, %s312
      %p319 = scmp.eq.s32.totalorder %s29, 1
      %p320 = por %p318, %p319
      %p321 = scmp.ne.s32.totalorder %s312, %s313
      %p322 = scmp.eq.s32.totalorder %s29, 0
      %p323 = por %p321, %p322
      %p324 = scmp.ne.s32.totalorder %s312, %s313
      %p325 = scmp.eq.s32.totalorder %s30, 1
      %p326 = por %p324, %p325
      %p328 = scmp.ne.s32.totalorder %s313, %s327
      %p329 = scmp.eq.s32.totalorder %s30, 0
      %p330 = por %p328, %p329
      %s332 = sadd.s32 %s331, 1
      %p335 = scmp.eq.s32.totalorder %s24, 1
      %p336 = scmp.ne.s32.totalorder %s331, %s333
      %p337 = scmp.eq.s32.totalorder %s24, 0
      %p338 = por %p336, %p337
      %p339 = scmp.ne.s32.totalorder %s331, %s333
      %p340 = scmp.eq.s32.totalorder %s29, 1
      %p341 = por %p339, %p340
      %p342 = scmp.ne.s32.totalorder %s333, %s334
      %p343 = scmp.eq.s32.totalorder %s29, 0
      %p344 = por %p342, %p343
      %p345 = scmp.ne.s32.totalorder %s333, %s334
      %p346 = scmp.eq.s32.totalorder %s30, 1
      %p347 = por %p345, %p346
      %p349 = scmp.ne.s32.totalorder %s334, %s348
      %p350 = scmp.eq.s32.totalorder %s30, 0
      %p351 = por %p349, %p350
      %s352 = ssub.s32 %s24, %s31
      %p353 = scmp.eq.s32.totalorder %s352, 0
      %s355 = sadd.s32 %s354, 1
      %s356 = scalar_select %p353, %s354, %s355
      %p359 = pneg %p353
      %p360 = scmp.eq.s32.totalorder %s24, 1
      %p361 = por %p359, %p360
      %p362 = scmp.ne.s32.totalorder %s354, %s357
      %p363 = scmp.eq.s32.totalorder %s24, 0
      %p364 = por %p362, %p363
      %p365 = scmp.ne.s32.totalorder %s354, %s357
      %p366 = scmp.eq.s32.totalorder %s29, 1
      %p367 = por %p365, %p366
      %p368 = scmp.ne.s32.totalorder %s357, %s358
      %p369 = scmp.eq.s32.totalorder %s29, 0
      %p370 = por %p368, %p369
      %p371 = scmp.ne.s32.totalorder %s357, %s358
      %p372 = scmp.eq.s32.totalorder %s30, 1
      %p373 = por %p371, %p372
      %p375 = scmp.ne.s32.totalorder %s358, %s374
      %p376 = scmp.eq.s32.totalorder %s30, 0
      %p377 = por %p375, %p376
      %p378 = scmp.le.s32.totalorder 1, %s24
      %p379 = scmp.lt.s32.totalorder %s24, 3
      %p380 = pnand %p378, %p379
      %p381 = pneg %p380
      // Predicated region
      $region9: #{resnet_forward.1} parent=5 // pred_check
        _
      $region10: #{resnet_forward.1} parent=5 // pred_check_branch
        %383 = sbr.rel (%p380) target = $region12
      $region11: #{resnet_forward.1} parent=5 // pred_region
        %s384 = ssub.s32 %s24, 1
        // Predicated region
        $region13: #{resnet_forward.1} parent=11 // pred_check
          %p385 = pneg %p71
        $region14: #{resnet_forward.1} parent=11 // pred_check_branch
          %387 = sbr.rel (%p385) target = $region16
        $region15: #{resnet_forward.1} parent=11 // pred_region
          _
        $region16: #{resnet_forward.1} parent=11 // pred_fallthru
          _
        // Predicated region
        $region17: #{resnet_forward.1} parent=11 // pred_check
          %p388 = pneg %p92
        $region18: #{resnet_forward.1} parent=11 // pred_check_branch
          %390 = sbr.rel (%p388) target = $region20
        $region19: #{resnet_forward.1} parent=11 // pred_region
          _
        $region20: #{resnet_forward.1} parent=11 // pred_fallthru
          _
        // Predicated region
        $region21: #{resnet_forward.1} parent=11 // pred_check
          %p391 = pneg %p113
        $region22: #{resnet_forward.1} parent=11 // pred_check_branch
          %393 = sbr.rel (%p391) target = $region24
        $region23: #{resnet_forward.1} parent=11 // pred_region
          _
        $region24: #{resnet_forward.1} parent=11 // pred_fallthru
          _
        // Predicated region
        $region25: #{resnet_forward.1} parent=11 // pred_check
          %p394 = pneg %p134
        $region26: #{resnet_forward.1} parent=11 // pred_check_branch
          %396 = sbr.rel (%p394) target = $region28
        $region27: #{resnet_forward.1} parent=11 // pred_region
          _
        $region28: #{resnet_forward.1} parent=11 // pred_fallthru
          _
        // Predicated region
        $region29: #{resnet_forward.1} parent=11 // pred_check
          %p397 = pneg %p155
        $region30: #{resnet_forward.1} parent=11 // pred_check_branch
          %399 = sbr.rel (%p397) target = $region32
        $region31: #{resnet_forward.1} parent=11 // pred_region
          _
        $region32: #{resnet_forward.1} parent=11 // pred_fallthru
          _
        // Predicated region
        $region33: #{resnet_forward.1} parent=11 // pred_check
          %p400 = pneg %p176
        $region34: #{resnet_forward.1} parent=11 // pred_check_branch
          %402 = sbr.rel (%p400) target = $region36
        $region35: #{resnet_forward.1} parent=11 // pred_region
          _
        $region36: #{resnet_forward.1} parent=11 // pred_fallthru
          _
        // Predicated region
        $region37: #{resnet_forward.1} parent=11 // pred_check
          %p403 = pneg %p197
        $region38: #{resnet_forward.1} parent=11 // pred_check_branch
          %405 = sbr.rel (%p403) target = $region40
        $region39: #{resnet_forward.1} parent=11 // pred_region
          _
        $region40: #{resnet_forward.1} parent=11 // pred_fallthru
          _
        // Predicated region
        $region41: #{resnet_forward.1} parent=11 // pred_check
          %p406 = pneg %p218
        $region42: #{resnet_forward.1} parent=11 // pred_check_branch
          %408 = sbr.rel (%p406) target = $region44
        $region43: #{resnet_forward.1} parent=11 // pred_region
          _
        $region44: #{resnet_forward.1} parent=11 // pred_fallthru
          _
        // Predicated region
        $region45: #{resnet_forward.1} parent=11 // pred_check
          %p409 = pneg %p239
        $region46: #{resnet_forward.1} parent=11 // pred_check_branch
          %411 = sbr.rel (%p409) target = $region48
        $region47: #{resnet_forward.1} parent=11 // pred_region
          _
        $region48: #{resnet_forward.1} parent=11 // pred_fallthru
          _
        // Predicated region
        $region49: #{resnet_forward.1} parent=11 // pred_check
          %p412 = pneg %p260
        $region50: #{resnet_forward.1} parent=11 // pred_check_branch
          %414 = sbr.rel (%p412) target = $region52
        $region51: #{resnet_forward.1} parent=11 // pred_region
          _
        $region52: #{resnet_forward.1} parent=11 // pred_fallthru
          _
        // Predicated region
        $region53: #{resnet_forward.1} parent=11 // pred_check
          %p415 = pneg %p281
        $region54: #{resnet_forward.1} parent=11 // pred_check_branch
          %417 = sbr.rel (%p415) target = $region56
        $region55: #{resnet_forward.1} parent=11 // pred_region
          _
        $region56: #{resnet_forward.1} parent=11 // pred_fallthru
          _
        // Predicated region
        $region57: #{resnet_forward.1} parent=11 // pred_check
          %p418 = pneg %p302
        $region58: #{resnet_forward.1} parent=11 // pred_check_branch
          %420 = sbr.rel (%p418) target = $region60
        $region59: #{resnet_forward.1} parent=11 // pred_region
          _
        $region60: #{resnet_forward.1} parent=11 // pred_fallthru
          _
        // Predicated region
        $region61: #{resnet_forward.1} parent=11 // pred_check
          %p421 = pneg %p323
        $region62: #{resnet_forward.1} parent=11 // pred_check_branch
          %423 = sbr.rel (%p421) target = $region64
        $region63: #{resnet_forward.1} parent=11 // pred_region
          _
        $region64: #{resnet_forward.1} parent=11 // pred_fallthru
          _
        // Predicated region
        $region65: #{resnet_forward.1} parent=11 // pred_check
          %p424 = pneg %p344
        $region66: #{resnet_forward.1} parent=11 // pred_check_branch
          %426 = sbr.rel (%p424) target = $region68
        $region67: #{resnet_forward.1} parent=11 // pred_region
          _
        $region68: #{resnet_forward.1} parent=11 // pred_fallthru
          _
      $region12: #{resnet_forward.1} parent=5 // pred_fallthru
        _
      %p427 = scmp.lt.s32.totalorder %s24, 2
      // Predicated region
      $region69: #{resnet_forward.1} parent=5 // pred_check
        %p428 = pneg %p427
      $region70: #{resnet_forward.1} parent=5 // pred_check_branch
        %430 = sbr.rel (%p428) target = $region72
      $region71: #{resnet_forward.1} parent=5 // pred_region
        // Predicated region
        $region73: #{resnet_forward.1} parent=71 // pred_check
          %p431 = pneg %p44
        $region74: #{resnet_forward.1} parent=71 // pred_check_branch
          %433 = sbr.rel (%p431) target = $region76
        $region75: #{resnet_forward.1} parent=71 // pred_region
          %s434 = smul.u32 16, %s24
          %p435 = scmp.lt.s32.totalorder %s434, 31
          %s436 = scalar_select %p435, %s434, 31
          %s437 = smul.addr %s436, 3
          %s438 = smul.addr %s437, 4
          %s439 = scalar_lea.vmem %s0, %s438
          %s440 = smul.u32 16, %s24
        $region76: #{resnet_forward.1} parent=71 // pred_fallthru
          _
      $region72: #{resnet_forward.1} parent=5 // pred_fallthru
        _
      %p441 = scmp.le.s32.totalorder 1, %s24
      %p442 = scmp.lt.s32.totalorder %s24, 3
      %p443 = pnand %p441, %p442
      %p444 = pneg %p443
      // Predicated region
      $region77: #{resnet_forward.1} parent=5 // pred_check
        _
      $region78: #{resnet_forward.1} parent=5 // pred_check_branch
        %446 = sbr.rel (%p443) target = $region80
      $region79: #{resnet_forward.1} parent=5 // pred_region
        %s447 = ssub.s32 %s24, 1
        %s448 = smul.u32 16, %s29
        %p449 = scmp.lt.s32.totalorder %s448, 31
        %s450 = scalar_select %p449, %s448, 31
        %s451 = smul.addr %s450, 3
        %s452 = smul.addr %s451, 4
        %s453 = scalar_lea.vmem %s0, %s452
        %p454 = pneg %p50
        %p455 = pneg %p47
        %p456 = pneg %p71
        %p457 = pneg %p68
        %p458 = pneg %p92
        %p459 = pneg %p89
        %p460 = pneg %p113
        %p461 = pneg %p110
        %p462 = pneg %p134
        %p463 = pneg %p131
        %p464 = pneg %p155
        %p465 = pneg %p152
        %p466 = pneg %p176
        %p467 = pneg %p173
        %p468 = pneg %p197
        %p469 = pneg %p194
        %p470 = pneg %p218
        %p471 = pneg %p215
        %p472 = pneg %p239
        %p473 = pneg %p236
        %p474 = pneg %p260
        %p475 = pneg %p257
        %p476 = pneg %p281
        %p477 = pneg %p278
        %p478 = pneg %p302
        %p479 = pneg %p299
        %p480 = pneg %p323
        %p481 = pneg %p320
        %p482 = pneg %p344
        %p483 = pneg %p341
        %p484 = pneg %p370
        %p485 = pneg %p367
        %s486 = sand.u32 %s357, 1
        %s487 = scalar_lea.sflag [#allocation6], %s486
        %s488 = sand.u32 %s357, 1
        %s489 = smul.addr %s488, 8
        %s490 = scalar_lea.vmem [#allocation5], %s489
        %s491 = smul.u32 16, %s29
        %p492 = scmp.lt.s32.totalorder %s491, 31
        %s493 = scalar_select %p492, %s491, 31
        %s494 = smul.addr %s493, 3
        %s495 = smul.addr %s494, 4
        %s496 = scalar_lea.vmem %s0, %s495
        %s497 = smul.u32 16, %s29
        %v499 = vld [vmem:[%s496] sm:$0xff]
        %v500 = vld [vmem:[%s496 + $0x8] sm:$0xf]
        %v501 = vld [vmem:[%s496 + $0xc] sm:$0xff]
        %v502 = vld [vmem:[%s496 + $0x14] sm:$0xf]
        %v503 = vld [vmem:[%s496 + $0x18] sm:$0xff]
        %v504 = vld [vmem:[%s496 + $0x20] sm:$0xf]
        %v505 = vld [vmem:[%s496 + $0x24] sm:$0xff]
        %v506 = vld [vmem:[%s496 + $0x2c] sm:$0xf]
        %v507 = vld [vmem:[%s496 + $0x30] sm:$0xff]
        %v508 = vld [vmem:[%s496 + $0x38] sm:$0xf]
        %v509 = vld [vmem:[%s496 + $0x3c] sm:$0xff]
        %v510 = vld [vmem:[%s496 + $0x44] sm:$0xf]
        %v511 = vld [vmem:[%s496 + $0x48] sm:$0xff]
        %v512 = vld [vmem:[%s496 + $0x50] sm:$0xf]
        %v513 = vld [vmem:[%s496 + $0x54] sm:$0xff]
        %v514 = vld [vmem:[%s496 + $0x5c] sm:$0xf]
        %v515 = vld [vmem:[%s496 + $0x60] sm:$0xff]
        %v516 = vld [vmem:[%s496 + $0x68] sm:$0xf]
        %v517 = vld [vmem:[%s496 + $0x6c] sm:$0xff]
        %v518 = vld [vmem:[%s496 + $0x74] sm:$0xf]
        %v519 = vld [vmem:[%s496 + $0x78] sm:$0xff]
        %v520 = vld [vmem:[%s496 + $0x80] sm:$0xf]
        %v521 = vld [vmem:[%s496 + $0x84] sm:$0xff]
        %v522 = vld [vmem:[%s496 + $0x8c] sm:$0xf]
        %v523 = vld [vmem:[%s496 + $0x90] sm:$0xff]
        %v524 = vld [vmem:[%s496 + $0x98] sm:$0xf]
        %v525 = vld [vmem:[%s496 + $0x9c] sm:$0xff]
        %v526 = vld [vmem:[%s496 + $0xa4] sm:$0xf]
        %v527 = vld [vmem:[%s496 + $0xa8] sm:$0xff]
        %v528 = vld [vmem:[%s496 + $0xb0] sm:$0xf]
        %v529 = vld [vmem:[%s496 + $0xb4] sm:$0xff]
        %v530 = vld [vmem:[%s496 + $0xbc] sm:$0xf]
        %v531 = vld [vmem:[%s1] sm:$0xf]
        %v532 = vld [vmem:[%s1 + $0x4] sm:$0xf]
        %v533 = vld [vmem:[%s1 + $0x8] sm:$0xf]
        %v534 = vld [vmem:[%s1 + $0xc] sm:$0xf]
        %v535 = vld [vmem:[%s1 + $0x10] sm:$0xf]
        %v536 = vld [vmem:[%s1 + $0x14] sm:$0xf]
        %v537 = vld [vmem:[%s1 + $0x18] sm:$0xf]
        %v538 = vld [vmem:[%s1 + $0x1c] sm:$0xf]
        %v539 = vld [vmem:[%s1 + $0x20] sm:$0xf]
        %v540 = vld [vmem:[%s1 + $0x24] sm:$0xf]
        %v541 = vld [vmem:[%s1 + $0x28] sm:$0xf]
        %v542 = vld [vmem:[%s1 + $0x2c] sm:$0xf]
        %v543 = vld [vmem:[%s1 + $0x30] sm:$0xf]
        %v544 = vld [vmem:[%s1 + $0x34] sm:$0xf]
        %v545 = vld [vmem:[%s1 + $0x38] sm:$0xf]
        %v546 = vld [vmem:[%s1 + $0x3c] sm:$0xf]
        %v547 = vld [vmem:[%s1 + $0x40] sm:$0xf]
        %v548 = vld [vmem:[%s1 + $0x44] sm:$0xf]
        %v549 = vld [vmem:[%s1 + $0x48] sm:$0xf]
        %v550 = vld [vmem:[%s1 + $0x4c] sm:$0xf]
        %v551 = vld [vmem:[%s1 + $0x50] sm:$0xf]
        %v552 = vld [vmem:[%s1 + $0x54] sm:$0xf]
        %v553 = vld [vmem:[%s1 + $0x58] sm:$0xf]
        %v554 = vld [vmem:[%s1 + $0x5c] sm:$0xf]
        %v555 = vld [vmem:[%s1 + $0x60] sm:$0xf]
        %v556 = vld [vmem:[%s1 + $0x64] sm:$0xf]
        %v557 = vld [vmem:[%s1 + $0x68] sm:$0xf]
        %v558 = vld [vmem:[%s1 + $0x6c] sm:$0xf]
        %v559 = vld [vmem:[%s1 + $0x70] sm:$0xf]
        %v560 = vld [vmem:[%s1 + $0x74] sm:$0xf]
        %v561 = vld [vmem:[%s1 + $0x78] sm:$0xf]
        %v562 = vld [vmem:[%s1 + $0x7c] sm:$0xf]
        %v563 = vld [vmem:[%s1 + $0x80] sm:$0xf]
        %v564 = vld [vmem:[%s1 + $0x84] sm:$0xf]
        %v565 = vld [vmem:[%s1 + $0x88] sm:$0xf]
        %v566 = vld [vmem:[%s1 + $0x8c] sm:$0xf]
        %v567 = vld [vmem:[%s2] sm:$0x1]
        %v569 = vlaneseq
        %v570 = vshrl.u32 %v569, 7
        %v571 = vsub.s32 0, %v570
        %v572 = vrot.slane %v567, %v571
        %v606 = vunpack.c.l.b16 %v499
        %v607 = vunpack.c.h.b16 %v499
        %v608 = vunpack.c.l.b16 %v500
        %v609 = vunpack.c.l.b16 %v501
        %v610 = vunpack.c.h.b16 %v501
        %v611 = vunpack.c.l.b16 %v502
        %v612 = vunpack.c.l.b16 %v503
        %v613 = vunpack.c.h.b16 %v503
        %v614 = vunpack.c.l.b16 %v504
        %v615 = vunpack.c.l.b16 %v505
        %v616 = vunpack.c.h.b16 %v505
        %v617 = vunpack.c.l.b16 %v506
        %v618 = vunpack.c.l.b16 %v507
        %v619 = vunpack.c.h.b16 %v507
        %v620 = vunpack.c.l.b16 %v508
        %v621 = vunpack.c.l.b16 %v509
        %v622 = vunpack.c.h.b16 %v509
        %v623 = vunpack.c.l.b16 %v510
        %v624 = vunpack.c.l.b16 %v511
        %v625 = vunpack.c.h.b16 %v511
        %v626 = vunpack.c.l.b16 %v512
        %v627 = vunpack.c.l.b16 %v513
        %v628 = vunpack.c.h.b16 %v513
        %v629 = vunpack.c.l.b16 %v514
        %v630 = vunpack.c.l.b16 %v515
        %v631 = vunpack.c.h.b16 %v515
        %v632 = vunpack.c.l.b16 %v516
        %v633 = vunpack.c.l.b16 %v517
        %v634 = vunpack.c.h.b16 %v517
        %v635 = vunpack.c.l.b16 %v518
        %v636 = vunpack.c.l.b16 %v519
        %v637 = vunpack.c.h.b16 %v519
        %v638 = vunpack.c.l.b16 %v520
        %v639 = vunpack.c.l.b16 %v521
        %v640 = vunpack.c.h.b16 %v521
        %v641 = vunpack.c.l.b16 %v522
        %v642 = vunpack.c.l.b16 %v523
        %v643 = vunpack.c.h.b16 %v523
        %v644 = vunpack.c.l.b16 %v524
        %v645 = vunpack.c.l.b16 %v525
        %v646 = vunpack.c.h.b16 %v525
        %v647 = vunpack.c.l.b16 %v526
        %v648 = vunpack.c.l.b16 %v527
        %v649 = vunpack.c.h.b16 %v527
        %v650 = vunpack.c.l.b16 %v528
        %v651 = vunpack.c.l.b16 %v529
        %v652 = vunpack.c.h.b16 %v529
        %v653 = vunpack.c.l.b16 %v530
        %v654 = vpack.c.b16 %v609, %v606
        %v655 = vpack.c.b16 %v610, %v607
        %v656 = vpack.c.b16 %v611, %v608
        %v657 = vpack.c.b16 %v615, %v612
        %v658 = vpack.c.b16 %v616, %v613
        %v659 = vpack.c.b16 %v617, %v614
        %v660 = vpack.c.b16 %v621, %v618
        %v661 = vpack.c.b16 %v622, %v619
        %v662 = vpack.c.b16 %v623, %v620
        %v663 = vpack.c.b16 %v627, %v624
        %v664 = vpack.c.b16 %v628, %v625
        %v665 = vpack.c.b16 %v629, %v626
        %v666 = vpack.c.b16 %v633, %v630
        %v667 = vpack.c.b16 %v634, %v631
        %v668 = vpack.c.b16 %v635, %v632
        %v669 = vpack.c.b16 %v639, %v636
        %v670 = vpack.c.b16 %v640, %v637
        %v671 = vpack.c.b16 %v641, %v638
        %v672 = vpack.c.b16 %v645, %v642
        %v673 = vpack.c.b16 %v646, %v643
        %v674 = vpack.c.b16 %v647, %v644
        %v675 = vpack.c.b16 %v651, %v648
        %v676 = vpack.c.b16 %v652, %v649
        %v677 = vpack.c.b16 %v653, %v650
        %v730 = vunpack.c.l.b16 %v531
        %v731 = vunpack.c.l.b16 %v532
        %v732 = vunpack.c.l.b16 %v533
        %v733 = vunpack.c.l.b16 %v534
        %v734 = vunpack.c.l.b16 %v535
        %v735 = vunpack.c.l.b16 %v536
        %v736 = vunpack.c.l.b16 %v537
        %v737 = vunpack.c.l.b16 %v538
        %v738 = vunpack.c.l.b16 %v539
        %v739 = vunpack.c.l.b16 %v540
        %v740 = vunpack.c.l.b16 %v541
        %v741 = vunpack.c.l.b16 %v542
        %v742 = vunpack.c.l.b16 %v543
        %v743 = vunpack.c.l.b16 %v544
        %v744 = vunpack.c.l.b16 %v545
        %v745 = vunpack.c.l.b16 %v546
        %v746 = vunpack.c.l.b16 %v547
        %v747 = vunpack.c.l.b16 %v548
        %v748 = vunpack.c.l.b16 %v549
        %v749 = vunpack.c.l.b16 %v550
        %v750 = vunpack.c.l.b16 %v551
        %v751 = vunpack.c.l.b16 %v552
        %v752 = vunpack.c.l.b16 %v553
        %v753 = vunpack.c.l.b16 %v554
        %v754 = vunpack.c.l.b16 %v555
        %v755 = vunpack.c.l.b16 %v556
        %v756 = vunpack.c.l.b16 %v557
        %v757 = vunpack.c.l.b16 %v558
        %v758 = vunpack.c.l.b16 %v559
        %v759 = vunpack.c.l.b16 %v560
        %v760 = vunpack.c.l.b16 %v561
        %v761 = vunpack.c.l.b16 %v562
        %v762 = vunpack.c.l.b16 %v563
        %v763 = vunpack.c.l.b16 %v564
        %v764 = vunpack.c.l.b16 %v565
        %v765 = vunpack.c.l.b16 %v566
        %v766 = vpack.c.b16 %v731, %v730
        %v767 = vpack.c.b16 %v733, %v732
        %v768 = vpack.c.b16 %v735, %v734
        %v769 = vpack.c.b16 %v737, %v736
        %v770 = vpack.c.b16 %v739, %v738
        %v771 = vpack.c.b16 %v741, %v740
        %v772 = vpack.c.b16 %v743, %v742
        %v773 = vpack.c.b16 %v745, %v744
        %v774 = vpack.c.b16 %v747, %v746
        %v775 = vpack.c.b16 %v749, %v748
        %v776 = vpack.c.b16 %v751, %v750
        %v777 = vpack.c.b16 %v753, %v752
        %v778 = vpack.c.b16 %v755, %v754
        %v779 = vpack.c.b16 %v757, %v756
        %v780 = vpack.c.b16 %v759, %v758
        %v781 = vpack.c.b16 %v761, %v760
        %v782 = vpack.c.b16 %v763, %v762
        %v783 = vpack.c.b16 %v765, %v764
        %vm802 = vcmask 261120
        %v804 = vsel %vm802, %v656, 0
        %v807 = vsel %vm802, %v659, 0
        %v810 = vsel %vm802, %v662, 0
        %v813 = vsel %vm802, %v665, 0
        %v816 = vsel %vm802, %v668, 0
        %v819 = vsel %vm802, %v671, 0
        %v822 = vsel %vm802, %v674, 0
        %v825 = vsel %vm802, %v677, 0
        %827 = vmatprep.subr.bf16.mxu0 0
        %828 = vmatpush1.bf16.msra.mxu0 %v773
        %829 = vmatprep.subr.bf16.mxu0 0
        %830 = vmatpush1.bf16.msra.mxu0 %v772
        %831 = vmatprep.subr.bf16.mxu0 0
        %832 = vmatpush1.bf16.msra.mxu0 %v771
        %833 = vmatprep.subr.bf16.mxu0 0
        %834 = vmatpush1.bf16.msra.mxu0 %v770
        %835 = vmatprep.subr.bf16.mxu0 0
        %836 = vmatpush1.bf16.msra.mxu0 %v769
        %837 = vmatprep.subr.bf16.mxu0 0
        %838 = vmatpush1.bf16.msra.mxu0 %v768
        %839 = vmatprep.subr.bf16.mxu0 0
        %840 = vmatpush1.bf16.msra.mxu0 %v767
        %841 = vmatprep.subr.bf16.mxu0 0
        %842 = vmatpush1.bf16.msra.mxu0 %v766
        %843 = vmatprep.subr.bf16.mxu0 0
        %844 = vmatpush2.bf16.msra.mxu0 %v781
        %845 = vmatprep.subr.bf16.mxu0 0
        %846 = vmatpush2.bf16.msra.mxu0 %v780
        %847 = vmatprep.subr.bf16.mxu0 0
        %848 = vmatpush2.bf16.msra.mxu0 %v779
        %849 = vmatprep.subr.bf16.mxu0 0
        %850 = vmatpush2.bf16.msra.mxu0 %v778
        %851 = vmatprep.subr.bf16.mxu0 0
        %852 = vmatpush2.bf16.msra.mxu0 %v777
        %853 = vmatprep.subr.bf16.mxu0 0
        %854 = vmatpush2.bf16.msra.mxu0 %v776
        %855 = vmatprep.subr.bf16.mxu0 0
        %856 = vmatpush2.bf16.msra.mxu0 %v775
        %857 = vmatprep.subr.bf16.mxu0 0
        %858 = vmatpush2.bf16.msra.mxu0 %v774
        %859 = vmatprep.mubr.bf16.mxu0 %v655
        %860 = vmatmul.mubr.bf16.gmra.mxu0 %v654
        %v861 = vpop.f32.mrf.mxu0
        %v862 = vadd.f32 %v572, %v861
        %v863 = vpop.f32.mrf.mxu0
        %v864 = vpop.f32.mrf.mxu0
        %v865 = vadd.f32 %v572, %v864
        %v866 = vpop.f32.mrf.mxu0
        %867 = vmatprep.mubr.bf16.mxu0 %v658
        %868 = vmatmul.mubr.bf16.gmra.mxu0 %v657
        %v869 = vpop.f32.mrf.mxu0
        %v870 = vadd.f32 %v572, %v869
        %v871 = vpop.f32.mrf.mxu0
        %v872 = vpop.f32.mrf.mxu0
        %v873 = vadd.f32 %v572, %v872
        %v874 = vpop.f32.mrf.mxu0
        %875 = vmatprep.mubr.bf16.mxu0 %v661
        %876 = vmatmul.mubr.bf16.gmra.mxu0 %v660
        %v877 = vpop.f32.mrf.mxu0
        %v878 = vadd.f32 %v572, %v877
        %v879 = vpop.f32.mrf.mxu0
        %v880 = vpop.f32.mrf.mxu0
        %v881 = vadd.f32 %v572, %v880
        %v882 = vpop.f32.mrf.mxu0
        %883 = vmatprep.mubr.bf16.mxu0 %v664
        %884 = vmatmul.mubr.bf16.gmra.mxu0 %v663
        %v885 = vpop.f32.mrf.mxu0
        %v886 = vadd.f32 %v572, %v885
        %v887 = vpop.f32.mrf.mxu0
        %v888 = vpop.f32.mrf.mxu0
        %v889 = vadd.f32 %v572, %v888
        %v890 = vpop.f32.mrf.mxu0
        %891 = vmatprep.mubr.bf16.mxu0 %v667
        %892 = vmatmul.mubr.bf16.gmra.mxu0 %v666
        %v893 = vpop.f32.mrf.mxu0
        %v894 = vadd.f32 %v572, %v893
        %v895 = vpop.f32.mrf.mxu0
        %v896 = vpop.f32.mrf.mxu0
        %v897 = vadd.f32 %v572, %v896
        %v898 = vpop.f32.mrf.mxu0
        %899 = vmatprep.mubr.bf16.mxu0 %v670
        %900 = vmatmul.mubr.bf16.gmra.mxu0 %v669
        %v901 = vpop.f32.mrf.mxu0
        %v902 = vadd.f32 %v572, %v901
        %v903 = vpop.f32.mrf.mxu0
        %v904 = vpop.f32.mrf.mxu0
        %v905 = vadd.f32 %v572, %v904
        %v906 = vpop.f32.mrf.mxu0
        %907 = vmatprep.mubr.bf16.mxu0 %v673
        %908 = vmatmul.mubr.bf16.gmra.mxu0 %v672
        %v909 = vpop.f32.mrf.mxu0
        %v910 = vadd.f32 %v572, %v909
        %v911 = vpop.f32.mrf.mxu0
        %v912 = vpop.f32.mrf.mxu0
        %v913 = vadd.f32 %v572, %v912
        %v914 = vpop.f32.mrf.mxu0
        %915 = vmatprep.mubr.bf16.mxu0 %v676
        %916 = vmatmul.mubr.bf16.gmra.mxu0 %v675
        %v917 = vpop.f32.mrf.mxu0
        %v918 = vadd.f32 %v572, %v917
        %v919 = vpop.f32.mrf.mxu0
        %v920 = vpop.f32.mrf.mxu0
        %v921 = vadd.f32 %v572, %v920
        %v922 = vpop.f32.mrf.mxu0
        %923 = vdwg.mxu0
        %924 = vmatprep.subr.bf16.mxu0 0
        %925 = vmatpush1.bf16.msra.mxu0 0
        %926 = vmatprep.subr.bf16.mxu0 0
        %927 = vmatpush1.bf16.msra.mxu0 0
        %928 = vmatprep.subr.bf16.mxu0 0
        %929 = vmatpush1.bf16.msra.mxu0 0
        %930 = vmatprep.subr.bf16.mxu0 0
        %931 = vmatpush1.bf16.msra.mxu0 0
        %932 = vmatprep.subr.bf16.mxu0 0
        %933 = vmatpush1.bf16.msra.mxu0 0
        %934 = vmatprep.subr.bf16.mxu0 0
        %935 = vmatpush1.bf16.msra.mxu0 0
        %936 = vmatprep.subr.bf16.mxu0 0
        %937 = vmatpush1.bf16.msra.mxu0 %v783
        %938 = vmatprep.subr.bf16.mxu0 0
        %939 = vmatpush1.bf16.msra.mxu0 %v782
        %940 = vmatprep.subr.bf16.mxu0 0
        %941 = vmatpush2.bf16.msra.mxu0 0
        %942 = vmatprep.subr.bf16.mxu0 0
        %943 = vmatpush2.bf16.msra.mxu0 0
        %944 = vmatprep.subr.bf16.mxu0 0
        %945 = vmatpush2.bf16.msra.mxu0 0
        %946 = vmatprep.subr.bf16.mxu0 0
        %947 = vmatpush2.bf16.msra.mxu0 0
        %948 = vmatprep.subr.bf16.mxu0 0
        %949 = vmatpush2.bf16.msra.mxu0 0
        %950 = vmatprep.subr.bf16.mxu0 0
        %951 = vmatpush2.bf16.msra.mxu0 0
        %952 = vmatprep.subr.bf16.mxu0 0
        %953 = vmatpush2.bf16.msra.mxu0 0
        %954 = vmatprep.subr.bf16.mxu0 0
        %955 = vmatpush2.bf16.msra.mxu0 0
        %956 = vmatprep.mubr.bf16.mxu0 0
        %957 = vmatmul.mubr.bf16.gmra.mxu0 %v804
        %v958 = vpop.f32.mrf.mxu0
        %v959 = vadd.f32 %v862, %v958
        %v960 = vpop.f32.mrf.mxu0
        %v961 = vpop.f32.mrf.mxu0
        %v962 = vadd.f32 %v865, %v961
        %v963 = vpop.f32.mrf.mxu0
        %964 = vmatprep.mubr.bf16.mxu0 0
        %965 = vmatmul.mubr.bf16.gmra.mxu0 %v807
        %v966 = vpop.f32.mrf.mxu0
        %v967 = vadd.f32 %v870, %v966
        %v968 = vpop.f32.mrf.mxu0
        %v969 = vpop.f32.mrf.mxu0
        %v970 = vadd.f32 %v873, %v969
        %v971 = vpop.f32.mrf.mxu0
        %972 = vmatprep.mubr.bf16.mxu0 0
        %973 = vmatmul.mubr.bf16.gmra.mxu0 %v810
        %v974 = vpop.f32.mrf.mxu0
        %v975 = vadd.f32 %v878, %v974
        %v976 = vpop.f32.mrf.mxu0
        %v977 = vpop.f32.mrf.mxu0
        %v978 = vadd.f32 %v881, %v977
        %v979 = vpop.f32.mrf.mxu0
        %980 = vmatprep.mubr.bf16.mxu0 0
        %981 = vmatmul.mubr.bf16.gmra.mxu0 %v813
        %v982 = vpop.f32.mrf.mxu0
        %v983 = vadd.f32 %v886, %v982
        %v984 = vpop.f32.mrf.mxu0
        %v985 = vpop.f32.mrf.mxu0
        %v986 = vadd.f32 %v889, %v985
        %v987 = vpop.f32.mrf.mxu0
        %988 = vmatprep.mubr.bf16.mxu0 0
        %989 = vmatmul.mubr.bf16.gmra.mxu0 %v816
        %v990 = vpop.f32.mrf.mxu0
        %v991 = vadd.f32 %v894, %v990
        %v992 = vpop.f32.mrf.mxu0
        %v993 = vpop.f32.mrf.mxu0
        %v994 = vadd.f32 %v897, %v993
        %v995 = vpop.f32.mrf.mxu0
        %996 = vmatprep.mubr.bf16.mxu0 0
        %997 = vmatmul.mubr.bf16.gmra.mxu0 %v819
        %v998 = vpop.f32.mrf.mxu0
        %v999 = vadd.f32 %v902, %v998
        %v1000 = vpop.f32.mrf.mxu0
        %v1001 = vpop.f32.mrf.mxu0
        %v1002 = vadd.f32 %v905, %v1001
        %v1003 = vpop.f32.mrf.mxu0
        %1004 = vmatprep.mubr.bf16.mxu0 0
        %1005 = vmatmul.mubr.bf16.gmra.mxu0 %v822
        %v1006 = vpop.f32.mrf.mxu0
        %v1007 = vadd.f32 %v910, %v1006
        %v1008 = vpop.f32.mrf.mxu0
        %v1009 = vpop.f32.mrf.mxu0
        %v1010 = vadd.f32 %v913, %v1009
        %v1011 = vpop.f32.mrf.mxu0
        %1012 = vmatprep.mubr.bf16.mxu0 0
        %1013 = vmatmul.mubr.bf16.gmra.mxu0 %v825
        %v1014 = vpop.f32.mrf.mxu0
        %v1015 = vadd.f32 %v918, %v1014
        %v1016 = vpop.f32.mrf.mxu0
        %v1017 = vpop.f32.mrf.mxu0
        %v1018 = vadd.f32 %v921, %v1017
        %v1019 = vpop.f32.mrf.mxu0
        %1020 = vdwg.mxu0
        %v1021 = vmax.f32 %v959, 0.0
        %v1022 = vmax.f32 %v962, 0.0
        %v1023 = vmax.f32 %v967, 0.0
        %v1024 = vmax.f32 %v970, 0.0
        %v1025 = vmax.f32 %v975, 0.0
        %v1026 = vmax.f32 %v978, 0.0
        %v1027 = vmax.f32 %v983, 0.0
        %v1028 = vmax.f32 %v986, 0.0
        %v1029 = vmax.f32 %v991, 0.0
        %v1030 = vmax.f32 %v994, 0.0
        %v1031 = vmax.f32 %v999, 0.0
        %v1032 = vmax.f32 %v1002, 0.0
        %v1033 = vmax.f32 %v1007, 0.0
        %v1034 = vmax.f32 %v1010, 0.0
        %v1035 = vmax.f32 %v1015, 0.0
        %v1036 = vmax.f32 %v1018, 0.0
        %1037 = vst [vmem:[#allocation2] sm:$0xff] %v1021
        %1038 = vst [vmem:[#allocation2 + $0x8] sm:$0xff] %v1022
        %1039 = vst [vmem:[#allocation2 + $0x10] sm:$0xff] %v1023
        %1040 = vst [vmem:[#allocation2 + $0x18] sm:$0xff] %v1024
        %1041 = vst [vmem:[#allocation2 + $0x20] sm:$0xff] %v1025
        %1042 = vst [vmem:[#allocation2 + $0x28] sm:$0xff] %v1026
        %1043 = vst [vmem:[#allocation2 + $0x30] sm:$0xff] %v1027
        %1044 = vst [vmem:[#allocation2 + $0x38] sm:$0xff] %v1028
        %1045 = vst [vmem:[#allocation2 + $0x40] sm:$0xff] %v1029
        %1046 = vst [vmem:[#allocation2 + $0x48] sm:$0xff] %v1030
        %1047 = vst [vmem:[#allocation2 + $0x50] sm:$0xff] %v1031
        %1048 = vst [vmem:[#allocation2 + $0x58] sm:$0xff] %v1032
        %1049 = vst [vmem:[#allocation2 + $0x60] sm:$0xff] %v1033
        %1050 = vst [vmem:[#allocation2 + $0x68] sm:$0xff] %v1034
        %1051 = vst [vmem:[#allocation2 + $0x70] sm:$0xff] %v1035
        %1052 = vst [vmem:[#allocation2 + $0x78] sm:$0xff] %v1036
        %v1053 = vld [vmem:[#allocation2] ss:$2 sm:$0xff]
        %s1054 = scalar_lea.vmem [#allocation2], 16
        %v1055 = vld [vmem:[%s1054] ss:$2 sm:$0xff]
        %s1056 = scalar_lea.vmem [#allocation2], 32
        %v1057 = vld [vmem:[%s1056] ss:$2 sm:$0xff]
        %s1058 = scalar_lea.vmem [#allocation2], 48
        %v1059 = vld [vmem:[%s1058] ss:$2 sm:$0xff]
        %s1060 = scalar_lea.vmem [#allocation2], 64
        %v1061 = vld [vmem:[%s1060] ss:$2 sm:$0xff]
        %s1062 = scalar_lea.vmem [#allocation2], 80
        %v1063 = vld [vmem:[%s1062] ss:$2 sm:$0xff]
        %s1064 = scalar_lea.vmem [#allocation2], 96
        %v1065 = vld [vmem:[%s1064] ss:$2 sm:$0xff]
        %s1066 = scalar_lea.vmem [#allocation2], 112
        %v1067 = vld [vmem:[%s1066] ss:$2 sm:$0xff]
        %s1068 = scalar_lea.vmem [#allocation2], 1
        %v1069 = vld [vmem:[%s1068] ss:$2 sm:$0xff]
        %s1070 = scalar_lea.vmem [#allocation2], 17
        %v1071 = vld [vmem:[%s1070] ss:$2 sm:$0xff]
        %s1072 = scalar_lea.vmem [#allocation2], 33
        %v1073 = vld [vmem:[%s1072] ss:$2 sm:$0xff]
        %s1074 = scalar_lea.vmem [#allocation2], 49
        %v1075 = vld [vmem:[%s1074] ss:$2 sm:$0xff]
        %s1076 = scalar_lea.vmem [#allocation2], 65
        %v1077 = vld [vmem:[%s1076] ss:$2 sm:$0xff]
        %s1078 = scalar_lea.vmem [#allocation2], 81
        %v1079 = vld [vmem:[%s1078] ss:$2 sm:$0xff]
        %s1080 = scalar_lea.vmem [#allocation2], 97
        %v1081 = vld [vmem:[%s1080] ss:$2 sm:$0xff]
        %s1082 = scalar_lea.vmem [#allocation2], 113
        %v1083 = vld [vmem:[%s1082] ss:$2 sm:$0xff]
        %v1084 = vmax.f32 %v1053, %v1069
        %v1085 = vmax.f32 %v1055, %v1071
        %v1086 = vmax.f32 %v1057, %v1073
        %v1087 = vmax.f32 %v1059, %v1075
        %v1088 = vmax.f32 %v1061, %v1077
        %v1089 = vmax.f32 %v1063, %v1079
        %v1090 = vmax.f32 %v1065, %v1081
        %v1091 = vmax.f32 %v1067, %v1083
        %vm1100 = vcmask 1040384
        %v1101 = vrot.slane %v1069, 7
        %v1102 = vrot.slane %v1071, 7
        %v1103 = vsel %vm1100, %v1101, %v1102
        %v1104 = vrot.slane %v1073, 7
        %v1105 = vsel %vm1100, %v1102, %v1104
        %v1106 = vrot.slane %v1075, 7
        %v1107 = vsel %vm1100, %v1104, %v1106
        %v1108 = vrot.slane %v1077, 7
        %v1109 = vsel %vm1100, %v1106, %v1108
        %v1110 = vrot.slane %v1079, 7
        %v1111 = vsel %vm1100, %v1108, %v1110
        %v1112 = vrot.slane %v1081, 7
        %v1113 = vsel %vm1100, %v1110, %v1112
        %v1114 = vrot.slane %v1083, 7
        %v1115 = vsel %vm1100, %v1112, %v1114
        %v1124 = vsel %vm1100, 0.0, %v1101
        %v1125 = vlaneseq
        %v1126 = vshrl.u32 %v1125, 7
        %v1127 = vadd.s32 %v1126, 8
        %v1128 = vadd.s32 %v1126, 16
        %v1129 = vadd.s32 %v1126, 24
        %v1130 = vadd.s32 %v1126, 32
        %v1131 = vadd.s32 %v1126, 40
        %v1132 = vadd.s32 %v1126, 48
        %v1133 = vadd.s32 %v1126, 56
        %vm1134 = vcmp.lt.s32.totalorder %v1126, 0
        %v1135 = vsub.s32 0, %v1126
        %v1136 = vsel %vm1134, %v1135, %v1126
        %v1137 = vshrl.u32 %v1136, 3
        %v1138 = vand.u32 %v1136, 7
        %v1139 = vsub.s32 0, %v1138
        %v1140 = vsel %vm1134, %v1139, %v1138
        %vm1141 = vcmp.lt.s32.totalorder %v1127, 0
        %v1142 = vsub.s32 0, %v1127
        %v1143 = vsel %vm1141, %v1142, %v1127
        %v1144 = vshrl.u32 %v1143, 3
        %v1145 = vand.u32 %v1143, 7
        %v1146 = vsub.s32 0, %v1145
        %v1147 = vsel %vm1141, %v1146, %v1145
        %vm1148 = vcmp.lt.s32.totalorder %v1128, 0
        %v1149 = vsub.s32 0, %v1128
        %v1150 = vsel %vm1148, %v1149, %v1128
        %v1151 = vshrl.u32 %v1150, 3
        %v1152 = vand.u32 %v1150, 7
        %v1153 = vsub.s32 0, %v1152
        %v1154 = vsel %vm1148, %v1153, %v1152
        %vm1155 = vcmp.lt.s32.totalorder %v1129, 0
        %v1156 = vsub.s32 0, %v1129
        %v1157 = vsel %vm1155, %v1156, %v1129
        %v1158 = vshrl.u32 %v1157, 3
        %v1159 = vand.u32 %v1157, 7
        %v1160 = vsub.s32 0, %v1159
        %v1161 = vsel %vm1155, %v1160, %v1159
        %vm1162 = vcmp.lt.s32.totalorder %v1130, 0
        %v1163 = vsub.s32 0, %v1130
        %v1164 = vsel %vm1162, %v1163, %v1130
        %v1165 = vshrl.u32 %v1164, 3
        %v1166 = vand.u32 %v1164, 7
        %v1167 = vsub.s32 0, %v1166
        %v1168 = vsel %vm1162, %v1167, %v1166
        %vm1169 = vcmp.lt.s32.totalorder %v1131, 0
        %v1170 = vsub.s32 0, %v1131
        %v1171 = vsel %vm1169, %v1170, %v1131
        %v1172 = vshrl.u32 %v1171, 3
        %v1173 = vand.u32 %v1171, 7
        %v1174 = vsub.s32 0, %v1173
        %v1175 = vsel %vm1169, %v1174, %v1173
        %vm1176 = vcmp.lt.s32.totalorder %v1132, 0
        %v1177 = vsub.s32 0, %v1132
        %v1178 = vsel %vm1176, %v1177, %v1132
        %v1179 = vshrl.u32 %v1178, 3
        %v1180 = vand.u32 %v1178, 7
        %v1181 = vsub.s32 0, %v1180
        %v1182 = vsel %vm1176, %v1181, %v1180
        %vm1183 = vcmp.lt.s32.totalorder %v1133, 0
        %v1184 = vsub.s32 0, %v1133
        %v1185 = vsel %vm1183, %v1184, %v1133
        %v1186 = vshrl.u32 %v1185, 3
        %v1187 = vand.u32 %v1185, 7
        %v1188 = vsub.s32 0, %v1187
        %v1189 = vsel %vm1183, %v1188, %v1187
        %vm1190 = vcmp.ne.s32.totalorder %v1140, 0
        %vm1191 = vcmp.ne.s32.totalorder %v1147, 0
        %vm1192 = vcmp.ne.s32.totalorder %v1154, 0
        %vm1193 = vcmp.ne.s32.totalorder %v1161, 0
        %vm1194 = vcmp.ne.s32.totalorder %v1168, 0
        %vm1195 = vcmp.ne.s32.totalorder %v1175, 0
        %vm1196 = vcmp.ne.s32.totalorder %v1182, 0
        %vm1197 = vcmp.ne.s32.totalorder %v1189, 0
        %vm1198 = vcmp.lt.s32.totalorder %v1140, 0
        %vm1199 = vcmp.lt.s32.totalorder %v1147, 0
        %vm1200 = vcmp.lt.s32.totalorder %v1154, 0
        %vm1201 = vcmp.lt.s32.totalorder %v1161, 0
        %vm1202 = vcmp.lt.s32.totalorder %v1168, 0
        %vm1203 = vcmp.lt.s32.totalorder %v1175, 0
        %vm1204 = vcmp.lt.s32.totalorder %v1182, 0
        %vm1205 = vcmp.lt.s32.totalorder %v1189, 0
        %vm1206 = vmand %vm1198, %vm1190
        %vm1207 = vmand %vm1199, %vm1191
        %vm1208 = vmand %vm1200, %vm1192
        %vm1209 = vmand %vm1201, %vm1193
        %vm1210 = vmand %vm1202, %vm1194
        %vm1211 = vmand %vm1203, %vm1195
        %vm1212 = vmand %vm1204, %vm1196
        %vm1213 = vmand %vm1205, %vm1197
        %v1214 = vadd.s32 %v1140, 8
        %v1215 = vadd.s32 %v1147, 8
        %v1216 = vadd.s32 %v1154, 8
        %v1217 = vadd.s32 %v1161, 8
        %v1218 = vadd.s32 %v1168, 8
        %v1219 = vadd.s32 %v1175, 8
        %v1220 = vadd.s32 %v1182, 8
        %v1221 = vadd.s32 %v1189, 8
        %v1222 = vsel %vm1206, %v1214, %v1140
        %v1223 = vsel %vm1207, %v1215, %v1147
        %v1224 = vsel %vm1208, %v1216, %v1154
        %v1225 = vsel %vm1209, %v1217, %v1161
        %v1226 = vsel %vm1210, %v1218, %v1168
        %v1227 = vsel %vm1211, %v1219, %v1175
        %v1228 = vsel %vm1212, %v1220, %v1182
        %v1229 = vsel %vm1213, %v1221, %v1189
        %vm1230 = vcmp.eq.s32.totalorder %v1222, 0
        %vm1231 = vcmp.eq.s32.totalorder %v1223, 0
        %vm1232 = vcmp.eq.s32.totalorder %v1224, 0
        %vm1233 = vcmp.eq.s32.totalorder %v1225, 0
        %vm1234 = vcmp.eq.s32.totalorder %v1226, 0
        %vm1235 = vcmp.eq.s32.totalorder %v1227, 0
        %vm1236 = vcmp.eq.s32.totalorder %v1228, 0
        %vm1237 = vcmp.eq.s32.totalorder %v1229, 0
        %v1238 = vsel %vm1230, 0.0, %v1124
        %v1239 = vsel %vm1231, 0.0, %v1103
        %v1240 = vsel %vm1232, 0.0, %v1105
        %v1241 = vsel %vm1233, 0.0, %v1107
        %v1242 = vsel %vm1234, 0.0, %v1109
        %v1243 = vsel %vm1235, 0.0, %v1111
        %v1244 = vsel %vm1236, 0.0, %v1113
        %v1245 = vsel %vm1237, 0.0, %v1115
        %v1246 = vmax.f32 %v1084, %v1238
        %v1247 = vmax.f32 %v1085, %v1239
        %v1248 = vmax.f32 %v1086, %v1240
        %v1249 = vmax.f32 %v1087, %v1241
        %v1250 = vmax.f32 %v1088, %v1242
        %v1251 = vmax.f32 %v1089, %v1243
        %v1252 = vmax.f32 %v1090, %v1244
        %v1253 = vmax.f32 %v1091, %v1245
        %1262 = vrot.lane.b32.xlu0 %v1246, 8
        %v1263 = vpop.permute.xlu0 %1262
        %1264 = vrot.lane.b32.xlu0 %v1247, 8
        %v1265 = vpop.permute.xlu0 %1264
        %1266 = vrot.lane.b32.xlu0 %v1248, 8
        %v1267 = vpop.permute.xlu0 %1266
        %1268 = vrot.lane.b32.xlu0 %v1249, 8
        %v1269 = vpop.permute.xlu0 %1268
        %1270 = vrot.lane.b32.xlu0 %v1250, 8
        %v1271 = vpop.permute.xlu0 %1270
        %1272 = vrot.lane.b32.xlu0 %v1251, 8
        %v1273 = vpop.permute.xlu0 %1272
        %1274 = vrot.lane.b32.xlu0 %v1252, 8
        %v1275 = vpop.permute.xlu0 %1274
        %1276 = vrot.lane.b32.xlu0 %v1253, 8
        %v1277 = vpop.permute.xlu0 %1276
        %vm1286 = vcmask 64512
        %v1287 = vsel %vm1286, 0.0, %v1263
        %v1288 = vsel %vm1286, 0.0, %v1265
        %v1289 = vsel %vm1286, 0.0, %v1267
        %v1290 = vsel %vm1286, 0.0, %v1269
        %v1291 = vsel %vm1286, 0.0, %v1271
        %v1292 = vsel %vm1286, 0.0, %v1273
        %v1293 = vsel %vm1286, 0.0, %v1275
        %v1294 = vsel %vm1286, 0.0, %v1277
        %1295 = vrot.lane.b32.xlu0 %v1246, 120
        %v1296 = vpop.permute.xlu0 %1295
        %1297 = vrot.lane.b32.xlu0 %v1247, 120
        %v1298 = vpop.permute.xlu0 %1297
        %1299 = vrot.lane.b32.xlu0 %v1248, 120
        %v1300 = vpop.permute.xlu0 %1299
        %1301 = vrot.lane.b32.xlu0 %v1249, 120
        %v1302 = vpop.permute.xlu0 %1301
        %1303 = vrot.lane.b32.xlu0 %v1250, 120
        %v1304 = vpop.permute.xlu0 %1303
        %1305 = vrot.lane.b32.xlu0 %v1251, 120
        %v1306 = vpop.permute.xlu0 %1305
        %1307 = vrot.lane.b32.xlu0 %v1252, 120
        %v1308 = vpop.permute.xlu0 %1307
        %1309 = vrot.lane.b32.xlu0 %v1253, 120
        %v1310 = vpop.permute.xlu0 %1309
        %vm1319 = vcmask 982016
        %v1320 = vsel %vm1319, %v1296, 0.0
        %v1321 = vsel %vm1319, %v1298, 0.0
        %v1322 = vsel %vm1319, %v1300, 0.0
        %v1323 = vsel %vm1319, %v1302, 0.0
        %v1324 = vsel %vm1319, %v1304, 0.0
        %v1325 = vsel %vm1319, %v1306, 0.0
        %v1326 = vsel %vm1319, %v1308, 0.0
        %v1327 = vsel %vm1319, %v1310, 0.0
        %v1328 = vmax.f32 %v1246, %v1287
        %v1329 = vmax.f32 %v1247, %v1288
        %v1330 = vmax.f32 %v1248, %v1289
        %v1331 = vmax.f32 %v1249, %v1290
        %v1332 = vmax.f32 %v1250, %v1291
        %v1333 = vmax.f32 %v1251, %v1292
        %v1334 = vmax.f32 %v1252, %v1293
        %v1335 = vmax.f32 %v1253, %v1294
        %v1336 = vmax.f32 %v1328, %v1320
        %v1337 = vmax.f32 %v1329, %v1321
        %v1338 = vmax.f32 %v1330, %v1322
        %v1339 = vmax.f32 %v1331, %v1323
        %v1340 = vmax.f32 %v1332, %v1324
        %v1341 = vmax.f32 %v1333, %v1325
        %v1342 = vmax.f32 %v1334, %v1326
        %v1343 = vmax.f32 %v1335, %v1327
        %v1344 = vld [vmem:[%s11] sm:$0xff]
        %v1345 = vld [vmem:[%s11 + $0x8] sm:$0xff]
        %v1346 = vld [vmem:[%s11 + $0x10] sm:$0xff]
        %v1347 = vld [vmem:[%s11 + $0x18] sm:$0xff]
        %v1348 = vld [vmem:[%s11 + $0x20] sm:$0xff]
        %v1349 = vld [vmem:[%s11 + $0x28] sm:$0xff]
        %v1350 = vld [vmem:[%s11 + $0x30] sm:$0xff]
        %v1351 = vld [vmem:[%s11 + $0x38] sm:$0xff]
        %v1352 = vld [vmem:[%s11 + $0x40] sm:$0xff]
        %v1353 = vld [vmem:[%s11 + $0x48] sm:$0xff]
        %v1354 = vld [vmem:[%s11 + $0x50] sm:$0xff]
        %v1355 = vld [vmem:[%s11 + $0x58] sm:$0xff]
        %v1356 = vld [vmem:[%s11 + $0x60] sm:$0xff]
        %v1357 = vld [vmem:[%s11 + $0x68] sm:$0xff]
        %v1358 = vld [vmem:[%s11 + $0x70] sm:$0xff]
        %v1359 = vld [vmem:[%s11 + $0x78] sm:$0xff]
        %1360 = vmatprep.subr.mxu0 0.0
        %1361 = vmatpush1.msra.mxu0 %v1359
        %1362 = vmatprep.subr.mxu0 0.0
        %1363 = vmatpush1.msra.mxu0 %v1358
        %1364 = vmatprep.subr.mxu0 0.0
        %1365 = vmatpush1.msra.mxu0 %v1357
        %1366 = vmatprep.subr.mxu0 0.0
        %1367 = vmatpush1.msra.mxu0 %v1356
        %1368 = vmatprep.subr.mxu0 0.0
        %1369 = vmatpush1.msra.mxu0 %v1355
        %1370 = vmatprep.subr.mxu0 0.0
        %1371 = vmatpush1.msra.mxu0 %v1354
        %1372 = vmatprep.subr.mxu0 0.0
        %1373 = vmatpush1.msra.mxu0 %v1353
        %1374 = vmatprep.subr.mxu0 0.0
        %1375 = vmatpush1.msra.mxu0 %v1352
        %1376 = vmatprep.subr.mxu0 0.0
        %1377 = vmatpush1.msra.mxu0 %v1351
        %1378 = vmatprep.subr.mxu0 0.0
        %1379 = vmatpush1.msra.mxu0 %v1350
        %1380 = vmatprep.subr.mxu0 0.0
        %1381 = vmatpush1.msra.mxu0 %v1349
        %1382 = vmatprep.subr.mxu0 0.0
        %1383 = vmatpush1.msra.mxu0 %v1348
        %1384 = vmatprep.subr.mxu0 0.0
        %1385 = vmatpush1.msra.mxu0 %v1347
        %1386 = vmatprep.subr.mxu0 0.0
        %1387 = vmatpush1.msra.mxu0 %v1346
        %1388 = vmatprep.subr.mxu0 0.0
        %1389 = vmatpush1.msra.mxu0 %v1345
        %1390 = vmatprep.subr.mxu0 0.0
        %1391 = vmatpush1.msra.mxu0 %v1344
        %1392 = vmatprep.subr.mxu0 0.0
        %1393 = vmatpush2.msra.mxu0 0.0
        %1394 = vmatprep.subr.mxu0 0.0
        %1395 = vmatpush2.msra.mxu0 0.0
        %1396 = vmatprep.subr.mxu0 0.0
        %1397 = vmatpush2.msra.mxu0 0.0
        %1398 = vmatprep.subr.mxu0 0.0
        %1399 = vmatpush2.msra.mxu0 0.0
        %1400 = vmatprep.subr.mxu0 0.0
        %1401 = vmatpush2.msra.mxu0 0.0
        %1402 = vmatprep.subr.mxu0 0.0
        %1403 = vmatpush2.msra.mxu0 0.0
        %1404 = vmatprep.subr.mxu0 0.0
        %1405 = vmatpush2.msra.mxu0 0.0
        %1406 = vmatprep.subr.mxu0 0.0
        %1407 = vmatpush2.msra.mxu0 0.0
        %1408 = vmatprep.subr.mxu0 0.0
        %1409 = vmatpush2.msra.mxu0 0.0
        %1410 = vmatprep.subr.mxu0 0.0
        %1411 = vmatpush2.msra.mxu0 0.0
        %1412 = vmatprep.subr.mxu0 0.0
        %1413 = vmatpush2.msra.mxu0 0.0
        %1414 = vmatprep.subr.mxu0 0.0
        %1415 = vmatpush2.msra.mxu0 0.0
        %1416 = vmatprep.subr.mxu0 0.0
        %1417 = vmatpush2.msra.mxu0 0.0
        %1418 = vmatprep.subr.mxu0 0.0
        %1419 = vmatpush2.msra.mxu0 0.0
        %1420 = vmatprep.subr.mxu0 0.0
        %1421 = vmatpush2.msra.mxu0 0.0
        %1422 = vmatprep.subr.mxu0 0.0
        %1423 = vmatpush2.msra.mxu0 0.0
        %1424 = vmatprep.mubr.f32.mxu0 0.0
        %1425 = vmatmul.mubr.f32.gmra.mxu0 %v1336
        %v1426 = vpop.f32.mrf.mxu0
        %v1427 = vadd.f32 0.0, %v1426
        %v1428 = vpop.f32.mrf.mxu0
        %1429 = vmatprep.mubr.f32.mxu0 0.0
        %1430 = vmatmul.mubr.f32.gmra.mxu0 %v1337
        %v1431 = vpop.f32.mrf.mxu0
        %v1432 = vadd.f32 0.0, %v1431
        %v1433 = vpop.f32.mrf.mxu0
        %1434 = vmatprep.mubr.f32.mxu0 0.0
        %1435 = vmatmul.mubr.f32.gmra.mxu0 %v1338
        %v1436 = vpop.f32.mrf.mxu0
        %v1437 = vadd.f32 0.0, %v1436
        %v1438 = vpop.f32.mrf.mxu0
        %1439 = vmatprep.mubr.f32.mxu0 0.0
        %1440 = vmatmul.mubr.f32.gmra.mxu0 %v1339
        %v1441 = vpop.f32.mrf.mxu0
        %v1442 = vadd.f32 0.0, %v1441
        %v1443 = vpop.f32.mrf.mxu0
        %1444 = vmatprep.mubr.f32.mxu0 0.0
        %1445 = vmatmul.mubr.f32.gmra.mxu0 %v1340
        %v1446 = vpop.f32.mrf.mxu0
        %v1447 = vadd.f32 0.0, %v1446
        %v1448 = vpop.f32.mrf.mxu0
        %1449 = vmatprep.mubr.f32.mxu0 0.0
        %1450 = vmatmul.mubr.f32.gmra.mxu0 %v1341
        %v1451 = vpop.f32.mrf.mxu0
        %v1452 = vadd.f32 0.0, %v1451
        %v1453 = vpop.f32.mrf.mxu0
        %1454 = vmatprep.mubr.f32.mxu0 0.0
        %1455 = vmatmul.mubr.f32.gmra.mxu0 %v1342
        %v1456 = vpop.f32.mrf.mxu0
        %v1457 = vadd.f32 0.0, %v1456
        %v1458 = vpop.f32.mrf.mxu0
        %1459 = vmatprep.mubr.f32.mxu0 0.0
        %1460 = vmatmul.mubr.f32.gmra.mxu0 %v1343
        %v1461 = vpop.f32.mrf.mxu0
        %v1462 = vadd.f32 0.0, %v1461
        %v1463 = vpop.f32.mrf.mxu0
        %1464 = vdwg.mxu0
        %v1473 = vrot.slane %v1427, 7
        %v1474 = vrot.slane %v1432, 7
        %v1475 = vsel %vm1100, %v1473, %v1474
        %v1476 = vrot.slane %v1437, 7
        %v1477 = vsel %vm1100, %v1474, %v1476
        %v1478 = vrot.slane %v1442, 7
        %v1479 = vsel %vm1100, %v1476, %v1478
        %v1480 = vrot.slane %v1447, 7
        %v1481 = vsel %vm1100, %v1478, %v1480
        %v1482 = vrot.slane %v1452, 7
        %v1483 = vsel %vm1100, %v1480, %v1482
        %v1484 = vrot.slane %v1457, 7
        %v1485 = vsel %vm1100, %v1482, %v1484
        %v1486 = vrot.slane %v1462, 7
        %v1487 = vsel %vm1100, %v1484, %v1486
        %v1496 = vsel %vm1100, 0.0, %v1473
        %v1497 = vsel %vm1230, 0.0, %v1496
        %v1498 = vsel %vm1231, 0.0, %v1475
        %v1499 = vsel %vm1232, 0.0, %v1477
        %v1500 = vsel %vm1233, 0.0, %v1479
        %v1501 = vsel %vm1234, 0.0, %v1481
        %v1502 = vsel %vm1235, 0.0, %v1483
        %v1503 = vsel %vm1236, 0.0, %v1485
        %v1504 = vsel %vm1237, 0.0, %v1487
        %vm1505 = vcmask 1046528
        %v1506 = vrot.slane %v1427, 1
        %v1507 = vrot.slane %v1432, 1
        %v1508 = vsel %vm1505, %v1506, %v1507
        %v1509 = vrot.slane %v1437, 1
        %v1510 = vsel %vm1505, %v1507, %v1509
        %v1511 = vrot.slane %v1442, 1
        %v1512 = vsel %vm1505, %v1509, %v1511
        %v1513 = vrot.slane %v1447, 1
        %v1514 = vsel %vm1505, %v1511, %v1513
        %v1515 = vrot.slane %v1452, 1
        %v1516 = vsel %vm1505, %v1513, %v1515
        %v1517 = vrot.slane %v1457, 1
        %v1518 = vsel %vm1505, %v1515, %v1517
        %v1519 = vrot.slane %v1462, 1
        %v1520 = vsel %vm1505, %v1517, %v1519
        %v1529 = vsel %vm1505, %v1519, 0.0
        %vm1530 = vcmp.eq.s32.totalorder %v1222, 7
        %vm1531 = vcmp.eq.s32.totalorder %v1223, 7
        %vm1532 = vcmp.eq.s32.totalorder %v1224, 7
        %vm1533 = vcmp.eq.s32.totalorder %v1225, 7
        %vm1534 = vcmp.eq.s32.totalorder %v1226, 7
        %vm1535 = vcmp.eq.s32.totalorder %v1227, 7
        %vm1536 = vcmp.eq.s32.totalorder %v1228, 7
        %vm1537 = vcmp.eq.s32.totalorder %v1229, 7
        %v1538 = vsel %vm1530, 0.0, %v1508
        %v1539 = vsel %vm1531, 0.0, %v1510
        %v1540 = vsel %vm1532, 0.0, %v1512
        %v1541 = vsel %vm1533, 0.0, %v1514
        %v1542 = vsel %vm1534, 0.0, %v1516
        %v1543 = vsel %vm1535, 0.0, %v1518
        %v1544 = vsel %vm1536, 0.0, %v1520
        %v1545 = vsel %vm1537, 0.0, %v1529
        %1546 = vrot.lane.b32.xlu0 %v1427, 64
        %v1547 = vpop.permute.xlu0 %1546
        %1548 = vrot.lane.b32.xlu0 %v1432, 64
        %v1549 = vpop.permute.xlu0 %1548
        %1550 = vrot.lane.b32.xlu0 %v1437, 64
        %v1551 = vpop.permute.xlu0 %1550
        %1552 = vrot.lane.b32.xlu0 %v1442, 64
        %v1553 = vpop.permute.xlu0 %1552
        %1554 = vrot.lane.b32.xlu0 %v1447, 64
        %v1555 = vpop.permute.xlu0 %1554
        %1556 = vrot.lane.b32.xlu0 %v1452, 64
        %v1557 = vpop.permute.xlu0 %1556
        %1558 = vrot.lane.b32.xlu0 %v1457, 64
        %v1559 = vpop.permute.xlu0 %1558
        %1560 = vrot.lane.b32.xlu0 %v1462, 64
        %v1561 = vpop.permute.xlu0 %1560
        %vm1570 = vcmask 523264
        %v1571 = vsel %vm1570, %v1497, %v1547
        %v1572 = vsel %vm1570, %v1498, %v1549
        %v1573 = vsel %vm1570, %v1499, %v1551
        %v1574 = vsel %vm1570, %v1500, %v1553
        %v1575 = vsel %vm1570, %v1501, %v1555
        %v1576 = vsel %vm1570, %v1502, %v1557
        %v1577 = vsel %vm1570, %v1503, %v1559
        %v1578 = vsel %vm1570, %v1504, %v1561
        %v1579 = vpack.c.bf16 %v1572, %v1571
        %v1580 = vpack.c.bf16 %v1539, %v1538
        %v1581 = vpack.c.bf16 %v1574, %v1573
        %v1582 = vpack.c.bf16 %v1541, %v1540
        %v1583 = vpack.c.bf16 %v1576, %v1575
        %v1584 = vpack.c.bf16 %v1543, %v1542
        %v1585 = vpack.c.bf16 %v1578, %v1577
        %v1586 = vpack.c.bf16 %v1545, %v1544
        %v1587 = vld [vmem:[%s3] sm:$0xf]
        %v1588 = vld [vmem:[%s3 + $0x4] sm:$0xf]
        %v1589 = vld [vmem:[%s3 + $0x8] sm:$0xf]
        %v1590 = vld [vmem:[%s3 + $0xc] sm:$0xf]
        %v1591 = vld [vmem:[%s3 + $0x10] sm:$0xf]
        %v1592 = vld [vmem:[%s3 + $0x14] sm:$0xf]
        %v1593 = vld [vmem:[%s3 + $0x18] sm:$0xf]
        %v1594 = vld [vmem:[%s3 + $0x1c] sm:$0xf]
        %v1595 = vld [vmem:[%s3 + $0x20] sm:$0xf]
        %v1596 = vld [vmem:[%s3 + $0x24] sm:$0xf]
        %v1597 = vld [vmem:[%s3 + $0x28] sm:$0xf]
        %v1598 = vld [vmem:[%s3 + $0x2c] sm:$0xf]
        %v1599 = vld [vmem:[%s3 + $0x30] sm:$0xf]
        %v1600 = vld [vmem:[%s3 + $0x34] sm:$0xf]
        %v1601 = vld [vmem:[%s3 + $0x38] sm:$0xf]
        %v1602 = vld [vmem:[%s3 + $0x3c] sm:$0xf]
        %v1603 = vld [vmem:[%s3 + $0x40] sm:$0xf]
        %v1604 = vld [vmem:[%s3 + $0x44] sm:$0xf]
        %v1605 = vld [vmem:[%s3 + $0x48] sm:$0xf]
        %v1606 = vld [vmem:[%s3 + $0x4c] sm:$0xf]
        %v1607 = vld [vmem:[%s3 + $0x50] sm:$0xf]
        %v1608 = vld [vmem:[%s3 + $0x54] sm:$0xf]
        %v1609 = vld [vmem:[%s3 + $0x58] sm:$0xf]
        %v1610 = vld [vmem:[%s3 + $0x5c] sm:$0xf]
        %v1611 = vld [vmem:[%s4] sm:$0x1]
        %v1613 = vlaneseq
        %v1614 = vshrl.u32 %v1613, 7
        %v1615 = vsub.s32 0, %v1614
        %v1616 = vrot.slane %v1611, %v1615
        %v1642 = vunpack.c.l.b16 %v1587
        %v1643 = vunpack.c.l.b16 %v1588
        %v1644 = vunpack.c.l.b16 %v1589
        %v1645 = vunpack.c.l.b16 %v1590
        %v1646 = vunpack.c.l.b16 %v1591
        %v1647 = vunpack.c.l.b16 %v1592
        %v1648 = vunpack.c.l.b16 %v1593
        %v1649 = vunpack.c.l.b16 %v1594
        %v1650 = vunpack.c.l.b16 %v1595
        %v1651 = vunpack.c.l.b16 %v1596
        %v1652 = vunpack.c.l.b16 %v1597
        %v1653 = vunpack.c.l.b16 %v1598
        %v1654 = vunpack.c.l.b16 %v1599
        %v1655 = vunpack.c.l.b16 %v1600
        %v1656 = vunpack.c.l.b16 %v1601
        %v1657 = vunpack.c.l.b16 %v1602
        %v1658 = vunpack.c.l.b16 %v1603
        %v1659 = vunpack.c.l.b16 %v1604
        %v1660 = vunpack.c.l.b16 %v1605
        %v1661 = vunpack.c.l.b16 %v1606
        %v1662 = vunpack.c.l.b16 %v1607
        %v1663 = vunpack.c.l.b16 %v1608
        %v1664 = vunpack.c.l.b16 %v1609
        %v1665 = vunpack.c.l.b16 %v1610
        %v1666 = vpack.c.b16 %v1643, %v1642
        %v1667 = vpack.c.b16 %v1645, %v1644
        %v1668 = vpack.c.b16 %v1647, %v1646
        %v1669 = vpack.c.b16 %v1649, %v1648
        %v1670 = vpack.c.b16 %v1651, %v1650
        %v1671 = vpack.c.b16 %v1653, %v1652
        %v1672 = vpack.c.b16 %v1655, %v1654
        %v1673 = vpack.c.b16 %v1657, %v1656
        %v1674 = vpack.c.b16 %v1659, %v1658
        %v1675 = vpack.c.b16 %v1661, %v1660
        %v1676 = vpack.c.b16 %v1663, %v1662
        %v1677 = vpack.c.b16 %v1665, %v1664
        %v1691 = vsel %vm1570, %v1580, 0
        %v1694 = vsel %vm1570, %v1582, 0
        %v1697 = vsel %vm1570, %v1584, 0
        %v1700 = vsel %vm1570, %v1586, 0
        %1702 = vmatprep.subr.bf16.mxu0 0
        %1703 = vmatpush1.bf16.msra.mxu0 %v1673
        %1704 = vmatprep.subr.bf16.mxu0 0
        %1705 = vmatpush1.bf16.msra.mxu0 %v1672
        %1706 = vmatprep.subr.bf16.mxu0 0
        %1707 = vmatpush1.bf16.msra.mxu0 %v1671
        %1708 = vmatprep.subr.bf16.mxu0 0
        %1709 = vmatpush1.bf16.msra.mxu0 %v1670
        %1710 = vmatprep.subr.bf16.mxu0 0
        %1711 = vmatpush1.bf16.msra.mxu0 %v1669
        %1712 = vmatprep.subr.bf16.mxu0 0
        %1713 = vmatpush1.bf16.msra.mxu0 %v1668
        %1714 = vmatprep.subr.bf16.mxu0 0
        %1715 = vmatpush1.bf16.msra.mxu0 %v1667
        %1716 = vmatprep.subr.bf16.mxu0 0
        %1717 = vmatpush1.bf16.msra.mxu0 %v1666
        %1718 = vmatprep.subr.bf16.mxu0 0
        %1719 = vmatpush2.bf16.msra.mxu0 0
        %1720 = vmatprep.subr.bf16.mxu0 0
        %1721 = vmatpush2.bf16.msra.mxu0 0
        %1722 = vmatprep.subr.bf16.mxu0 0
        %1723 = vmatpush2.bf16.msra.mxu0 0
        %1724 = vmatprep.subr.bf16.mxu0 0
        %1725 = vmatpush2.bf16.msra.mxu0 0
        %1726 = vmatprep.subr.bf16.mxu0 0
        %1727 = vmatpush2.bf16.msra.mxu0 %v1677
        %1728 = vmatprep.subr.bf16.mxu0 0
        %1729 = vmatpush2.bf16.msra.mxu0 %v1676
        %1730 = vmatprep.subr.bf16.mxu0 0
        %1731 = vmatpush2.bf16.msra.mxu0 %v1675
        %1732 = vmatprep.subr.bf16.mxu0 0
        %1733 = vmatpush2.bf16.msra.mxu0 %v1674
        %1734 = vmatprep.mubr.bf16.mxu0 %v1691
        %1735 = vmatmul.mubr.bf16.gmra.mxu0 %v1579
        %v1736 = vpop.f32.mrf.mxu0
        %v1737 = vadd.f32 %v1616, %v1736
        %v1738 = vpop.f32.mrf.mxu0
        %v1739 = vpop.f32.mrf.mxu0
        %v1740 = vadd.f32 %v1616, %v1739
        %v1741 = vpop.f32.mrf.mxu0
        %1742 = vmatprep.mubr.bf16.mxu0 %v1694
        %1743 = vmatmul.mubr.bf16.gmra.mxu0 %v1581
        %v1744 = vpop.f32.mrf.mxu0
        %v1745 = vadd.f32 %v1616, %v1744
        %v1746 = vpop.f32.mrf.mxu0
        %v1747 = vpop.f32.mrf.mxu0
        %v1748 = vadd.f32 %v1616, %v1747
        %v1749 = vpop.f32.mrf.mxu0
        %1750 = vmatprep.mubr.bf16.mxu0 %v1697
        %1751 = vmatmul.mubr.bf16.gmra.mxu0 %v1583
        %v1752 = vpop.f32.mrf.mxu0
        %v1753 = vadd.f32 %v1616, %v1752
        %v1754 = vpop.f32.mrf.mxu0
        %v1755 = vpop.f32.mrf.mxu0
        %v1756 = vadd.f32 %v1616, %v1755
        %v1757 = vpop.f32.mrf.mxu0
        %1758 = vmatprep.mubr.bf16.mxu0 %v1700
        %1759 = vmatmul.mubr.bf16.gmra.mxu0 %v1585
        %v1760 = vpop.f32.mrf.mxu0
        %v1761 = vadd.f32 %v1616, %v1760
        %v1762 = vpop.f32.mrf.mxu0
        %v1763 = vpop.f32.mrf.mxu0
        %v1764 = vadd.f32 %v1616, %v1763
        %v1765 = vpop.f32.mrf.mxu0
        %1766 = vdwg.mxu0
        %v1767 = vmax.f32 %v1737, 0.0
        %v1768 = vmax.f32 %v1740, 0.0
        %v1769 = vmax.f32 %v1745, 0.0
        %v1770 = vmax.f32 %v1748, 0.0
        %v1771 = vmax.f32 %v1753, 0.0
        %v1772 = vmax.f32 %v1756, 0.0
        %v1773 = vmax.f32 %v1761, 0.0
        %v1774 = vmax.f32 %v1764, 0.0
        %v1783 = vrot.slane %v1767, 7
        %v1784 = vrot.slane %v1768, 7
        %v1785 = vsel %vm1100, %v1783, %v1784
        %v1786 = vrot.slane %v1769, 7
        %v1787 = vsel %vm1100, %v1784, %v1786
        %v1788 = vrot.slane %v1770, 7
        %v1789 = vsel %vm1100, %v1786, %v1788
        %v1790 = vrot.slane %v1771, 7
        %v1791 = vsel %vm1100, %v1788, %v1790
        %v1792 = vrot.slane %v1772, 7
        %v1793 = vsel %vm1100, %v1790, %v1792
        %v1794 = vrot.slane %v1773, 7
        %v1795 = vsel %vm1100, %v1792, %v1794
        %v1796 = vrot.slane %v1774, 7
        %v1797 = vsel %vm1100, %v1794, %v1796
        %v1806 = vsel %vm1100, 0.0, %v1783
        %v1807 = vsel %vm1230, 0.0, %v1806
        %v1808 = vsel %vm1231, 0.0, %v1785
        %v1809 = vsel %vm1232, 0.0, %v1787
        %v1810 = vsel %vm1233, 0.0, %v1789
        %v1811 = vsel %vm1234, 0.0, %v1791
        %v1812 = vsel %vm1235, 0.0, %v1793
        %v1813 = vsel %vm1236, 0.0, %v1795
        %v1814 = vsel %vm1237, 0.0, %v1797
        %v1815 = vrot.slane %v1767, 1
        %v1816 = vrot.slane %v1768, 1
        %v1817 = vsel %vm1505, %v1815, %v1816
        %v1818 = vrot.slane %v1769, 1
        %v1819 = vsel %vm1505, %v1816, %v1818
        %v1820 = vrot.slane %v1770, 1
        %v1821 = vsel %vm1505, %v1818, %v1820
        %v1822 = vrot.slane %v1771, 1
        %v1823 = vsel %vm1505, %v1820, %v1822
        %v1824 = vrot.slane %v1772, 1
        %v1825 = vsel %vm1505, %v1822, %v1824
        %v1826 = vrot.slane %v1773, 1
        %v1827 = vsel %vm1505, %v1824, %v1826
        %v1828 = vrot.slane %v1774, 1
        %v1829 = vsel %vm1505, %v1826, %v1828
        %v1838 = vsel %vm1505, %v1828, 0.0
        %v1839 = vsel %vm1530, 0.0, %v1817
        %v1840 = vsel %vm1531, 0.0, %v1819
        %v1841 = vsel %vm1532, 0.0, %v1821
        %v1842 = vsel %vm1533, 0.0, %v1823
        %v1843 = vsel %vm1534, 0.0, %v1825
        %v1844 = vsel %vm1535, 0.0, %v1827
        %v1845 = vsel %vm1536, 0.0, %v1829
        %v1846 = vsel %vm1537, 0.0, %v1838
        %1847 = vrot.lane.b32.xlu0 %v1767, 64
        %v1848 = vpop.permute.xlu0 %1847
        %1849 = vrot.lane.b32.xlu0 %v1768, 64
        %v1850 = vpop.permute.xlu0 %1849
        %1851 = vrot.lane.b32.xlu0 %v1769, 64
        %v1852 = vpop.permute.xlu0 %1851
        %1853 = vrot.lane.b32.xlu0 %v1770, 64
        %v1854 = vpop.permute.xlu0 %1853
        %1855 = vrot.lane.b32.xlu0 %v1771, 64
        %v1856 = vpop.permute.xlu0 %1855
        %1857 = vrot.lane.b32.xlu0 %v1772, 64
        %v1858 = vpop.permute.xlu0 %1857
        %1859 = vrot.lane.b32.xlu0 %v1773, 64
        %v1860 = vpop.permute.xlu0 %1859
        %1861 = vrot.lane.b32.xlu0 %v1774, 64
        %v1862 = vpop.permute.xlu0 %1861
        %v1871 = vsel %vm1570, %v1807, %v1848
        %v1872 = vsel %vm1570, %v1808, %v1850
        %v1873 = vsel %vm1570, %v1809, %v1852
        %v1874 = vsel %vm1570, %v1810, %v1854
        %v1875 = vsel %vm1570, %v1811, %v1856
        %v1876 = vsel %vm1570, %v1812, %v1858
        %v1877 = vsel %vm1570, %v1813, %v1860
        %v1878 = vsel %vm1570, %v1814, %v1862
        %v1879 = vpack.c.bf16 %v1872, %v1871
        %v1880 = vpack.c.bf16 %v1840, %v1839
        %v1881 = vpack.c.bf16 %v1874, %v1873
        %v1882 = vpack.c.bf16 %v1842, %v1841
        %v1883 = vpack.c.bf16 %v1876, %v1875
        %v1884 = vpack.c.bf16 %v1844, %v1843
        %v1885 = vpack.c.bf16 %v1878, %v1877
        %v1886 = vpack.c.bf16 %v1846, %v1845
        %v1887 = vld [vmem:[%s5] sm:$0xf]
        %v1888 = vld [vmem:[%s5 + $0x4] sm:$0xf]
        %v1889 = vld [vmem:[%s5 + $0x8] sm:$0xf]
        %v1890 = vld [vmem:[%s5 + $0xc] sm:$0xf]
        %v1891 = vld [vmem:[%s5 + $0x10] sm:$0xf]
        %v1892 = vld [vmem:[%s5 + $0x14] sm:$0xf]
        %v1893 = vld [vmem:[%s5 + $0x18] sm:$0xf]
        %v1894 = vld [vmem:[%s5 + $0x1c] sm:$0xf]
        %v1895 = vld [vmem:[%s5 + $0x20] sm:$0xf]
        %v1896 = vld [vmem:[%s5 + $0x24] sm:$0xf]
        %v1897 = vld [vmem:[%s5 + $0x28] sm:$0xf]
        %v1898 = vld [vmem:[%s5 + $0x2c] sm:$0xf]
        %v1899 = vld [vmem:[%s5 + $0x30] sm:$0xf]
        %v1900 = vld [vmem:[%s5 + $0x34] sm:$0xf]
        %v1901 = vld [vmem:[%s5 + $0x38] sm:$0xf]
        %v1902 = vld [vmem:[%s5 + $0x3c] sm:$0xf]
        %v1903 = vld [vmem:[%s5 + $0x40] sm:$0xf]
        %v1904 = vld [vmem:[%s5 + $0x44] sm:$0xf]
        %v1905 = vld [vmem:[%s5 + $0x48] sm:$0xf]
        %v1906 = vld [vmem:[%s5 + $0x4c] sm:$0xf]
        %v1907 = vld [vmem:[%s5 + $0x50] sm:$0xf]
        %v1908 = vld [vmem:[%s5 + $0x54] sm:$0xf]
        %v1909 = vld [vmem:[%s5 + $0x58] sm:$0xf]
        %v1910 = vld [vmem:[%s5 + $0x5c] sm:$0xf]
        %v1911 = vld [vmem:[%s6] sm:$0x1]
        %v1913 = vlaneseq
        %v1914 = vshrl.u32 %v1913, 7
        %v1915 = vsub.s32 0, %v1914
        %v1916 = vrot.slane %v1911, %v1915
        %v1942 = vunpack.c.l.b16 %v1887
        %v1943 = vunpack.c.l.b16 %v1888
        %v1944 = vunpack.c.l.b16 %v1889
        %v1945 = vunpack.c.l.b16 %v1890
        %v1946 = vunpack.c.l.b16 %v1891
        %v1947 = vunpack.c.l.b16 %v1892
        %v1948 = vunpack.c.l.b16 %v1893
        %v1949 = vunpack.c.l.b16 %v1894
        %v1950 = vunpack.c.l.b16 %v1895
        %v1951 = vunpack.c.l.b16 %v1896
        %v1952 = vunpack.c.l.b16 %v1897
        %v1953 = vunpack.c.l.b16 %v1898
        %v1954 = vunpack.c.l.b16 %v1899
        %v1955 = vunpack.c.l.b16 %v1900
        %v1956 = vunpack.c.l.b16 %v1901
        %v1957 = vunpack.c.l.b16 %v1902
        %v1958 = vunpack.c.l.b16 %v1903
        %v1959 = vunpack.c.l.b16 %v1904
        %v1960 = vunpack.c.l.b16 %v1905
        %v1961 = vunpack.c.l.b16 %v1906
        %v1962 = vunpack.c.l.b16 %v1907
        %v1963 = vunpack.c.l.b16 %v1908
        %v1964 = vunpack.c.l.b16 %v1909
        %v1965 = vunpack.c.l.b16 %v1910
        %v1966 = vpack.c.b16 %v1943, %v1942
        %v1967 = vpack.c.b16 %v1945, %v1944
        %v1968 = vpack.c.b16 %v1947, %v1946
        %v1969 = vpack.c.b16 %v1949, %v1948
        %v1970 = vpack.c.b16 %v1951, %v1950
        %v1971 = vpack.c.b16 %v1953, %v1952
        %v1972 = vpack.c.b16 %v1955, %v1954
        %v1973 = vpack.c.b16 %v1957, %v1956
        %v1974 = vpack.c.b16 %v1959, %v1958
        %v1975 = vpack.c.b16 %v1961, %v1960
        %v1976 = vpack.c.b16 %v1963, %v1962
        %v1977 = vpack.c.b16 %v1965, %v1964
        %v1991 = vsel %vm1570, %v1880, 0
        %v1994 = vsel %vm1570, %v1882, 0
        %v1997 = vsel %vm1570, %v1884, 0
        %v2000 = vsel %vm1570, %v1886, 0
        %2002 = vmatprep.subr.bf16.mxu0 0
        %2003 = vmatpush1.bf16.msra.mxu0 %v1973
        %2004 = vmatprep.subr.bf16.mxu0 0
        %2005 = vmatpush1.bf16.msra.mxu0 %v1972
        %2006 = vmatprep.subr.bf16.mxu0 0
        %2007 = vmatpush1.bf16.msra.mxu0 %v1971
        %2008 = vmatprep.subr.bf16.mxu0 0
        %2009 = vmatpush1.bf16.msra.mxu0 %v1970
        %2010 = vmatprep.subr.bf16.mxu0 0
        %2011 = vmatpush1.bf16.msra.mxu0 %v1969
        %2012 = vmatprep.subr.bf16.mxu0 0
        %2013 = vmatpush1.bf16.msra.mxu0 %v1968
        %2014 = vmatprep.subr.bf16.mxu0 0
        %2015 = vmatpush1.bf16.msra.mxu0 %v1967
        %2016 = vmatprep.subr.bf16.mxu0 0
        %2017 = vmatpush1.bf16.msra.mxu0 %v1966
        %2018 = vmatprep.subr.bf16.mxu0 0
        %2019 = vmatpush2.bf16.msra.mxu0 0
        %2020 = vmatprep.subr.bf16.mxu0 0
        %2021 = vmatpush2.bf16.msra.mxu0 0
        %2022 = vmatprep.subr.bf16.mxu0 0
        %2023 = vmatpush2.bf16.msra.mxu0 0
        %2024 = vmatprep.subr.bf16.mxu0 0
        %2025 = vmatpush2.bf16.msra.mxu0 0
        %2026 = vmatprep.subr.bf16.mxu0 0
        %2027 = vmatpush2.bf16.msra.mxu0 %v1977
        %2028 = vmatprep.subr.bf16.mxu0 0
        %2029 = vmatpush2.bf16.msra.mxu0 %v1976
        %2030 = vmatprep.subr.bf16.mxu0 0
        %2031 = vmatpush2.bf16.msra.mxu0 %v1975
        %2032 = vmatprep.subr.bf16.mxu0 0
        %2033 = vmatpush2.bf16.msra.mxu0 %v1974
        %2034 = vmatprep.mubr.bf16.mxu0 %v1991
        %2035 = vmatmul.mubr.bf16.gmra.mxu0 %v1879
        %v2036 = vpop.f32.mrf.mxu0
        %v2037 = vadd.f32 %v1916, %v2036
        %v2038 = vpop.f32.mrf.mxu0
        %v2039 = vpop.f32.mrf.mxu0
        %v2040 = vadd.f32 %v1916, %v2039
        %v2041 = vpop.f32.mrf.mxu0
        %2042 = vmatprep.mubr.bf16.mxu0 %v1994
        %2043 = vmatmul.mubr.bf16.gmra.mxu0 %v1881
        %v2044 = vpop.f32.mrf.mxu0
        %v2045 = vadd.f32 %v1916, %v2044
        %v2046 = vpop.f32.mrf.mxu0
        %v2047 = vpop.f32.mrf.mxu0
        %v2048 = vadd.f32 %v1916, %v2047
        %v2049 = vpop.f32.mrf.mxu0
        %2050 = vmatprep.mubr.bf16.mxu0 %v1997
        %2051 = vmatmul.mubr.bf16.gmra.mxu0 %v1883
        %v2052 = vpop.f32.mrf.mxu0
        %v2053 = vadd.f32 %v1916, %v2052
        %v2054 = vpop.f32.mrf.mxu0
        %v2055 = vpop.f32.mrf.mxu0
        %v2056 = vadd.f32 %v1916, %v2055
        %v2057 = vpop.f32.mrf.mxu0
        %2058 = vmatprep.mubr.bf16.mxu0 %v2000
        %2059 = vmatmul.mubr.bf16.gmra.mxu0 %v1885
        %v2060 = vpop.f32.mrf.mxu0
        %v2061 = vadd.f32 %v1916, %v2060
        %v2062 = vpop.f32.mrf.mxu0
        %v2063 = vpop.f32.mrf.mxu0
        %v2064 = vadd.f32 %v1916, %v2063
        %v2065 = vpop.f32.mrf.mxu0
        %2066 = vdwg.mxu0
        %v2067 = vadd.f32 %v1427, %v2037
        %v2068 = vadd.f32 %v1432, %v2040
        %v2069 = vadd.f32 %v1437, %v2045
        %v2070 = vadd.f32 %v1442, %v2048
        %v2071 = vadd.f32 %v1447, %v2053
        %v2072 = vadd.f32 %v1452, %v2056
        %v2073 = vadd.f32 %v1457, %v2061
        %v2074 = vadd.f32 %v1462, %v2064
        %v2075 = vmax.f32 %v2067, 0.0
        %v2076 = vmax.f32 %v2068, 0.0
        %v2077 = vmax.f32 %v2069, 0.0
        %v2078 = vmax.f32 %v2070, 0.0
        %v2079 = vmax.f32 %v2071, 0.0
        %v2080 = vmax.f32 %v2072, 0.0
        %v2081 = vmax.f32 %v2073, 0.0
        %v2082 = vmax.f32 %v2074, 0.0
        %2083 = vst.msk [vmem:[#allocation3] sm:$0xff] %vm1570, %v2075
        %2084 = vst.msk [vmem:[#allocation3 + $0x8] sm:$0xff] %vm1570, %v2076
        %2085 = vst.msk [vmem:[#allocation3 + $0x10] sm:$0xff] %vm1570, %v2077
        %2086 = vst.msk [vmem:[#allocation3 + $0x18] sm:$0xff] %vm1570, %v2078
        %2087 = vst.msk [vmem:[#allocation3 + $0x20] sm:$0xff] %vm1570, %v2079
        %2088 = vst.msk [vmem:[#allocation3 + $0x28] sm:$0xff] %vm1570, %v2080
        %2089 = vst.msk [vmem:[#allocation3 + $0x30] sm:$0xff] %vm1570, %v2081
        %2090 = vst.msk [vmem:[#allocation3 + $0x38] sm:$0xff] %vm1570, %v2082
        %v2091 = vld [vmem:[#allocation3] ss:$2 sm:$0xff]
        %s2092 = scalar_lea.vmem [#allocation3], 16
        %v2093 = vld [vmem:[%s2092] ss:$2 sm:$0xff]
        %s2094 = scalar_lea.vmem [#allocation3], 32
        %v2095 = vld [vmem:[%s2094] ss:$2 sm:$0xff]
        %s2096 = scalar_lea.vmem [#allocation3], 48
        %v2097 = vld [vmem:[%s2096] ss:$2 sm:$0xff]
        %s2098 = scalar_lea.vmem [#allocation3], 1
        %v2099 = vld [vmem:[%s2098] ss:$2 sm:$0xff]
        %s2100 = scalar_lea.vmem [#allocation3], 17
        %v2101 = vld [vmem:[%s2100] ss:$2 sm:$0xff]
        %s2102 = scalar_lea.vmem [#allocation3], 33
        %v2103 = vld [vmem:[%s2102] ss:$2 sm:$0xff]
        %s2104 = scalar_lea.vmem [#allocation3], 49
        %v2105 = vld [vmem:[%s2104] ss:$2 sm:$0xff]
        %v2110 = vrot.slane %v2099, 7
        %v2111 = vrot.slane %v2101, 7
        %v2112 = vsel %vm1100, %v2110, %v2111
        %v2113 = vrot.slane %v2103, 7
        %v2114 = vsel %vm1100, %v2111, %v2113
        %v2115 = vrot.slane %v2105, 7
        %v2116 = vsel %vm1100, %v2113, %v2115
        %v2121 = vsel %vm1100, 0.0, %v2110
        %vm2122 = vcmp.lt.s32.totalorder %v1126, 0
        %v2123 = vsub.s32 0, %v1126
        %v2124 = vsel %vm2122, %v2123, %v1126
        %v2125 = vshrl.u32 %v2124, 2
        %v2126 = vand.u32 %v2124, 3
        %v2127 = vsub.s32 0, %v2126
        %v2128 = vsel %vm2122, %v2127, %v2126
        %vm2129 = vcmp.lt.s32.totalorder %v1127, 0
        %v2130 = vsub.s32 0, %v1127
        %v2131 = vsel %vm2129, %v2130, %v1127
        %v2132 = vshrl.u32 %v2131, 2
        %v2133 = vand.u32 %v2131, 3
        %v2134 = vsub.s32 0, %v2133
        %v2135 = vsel %vm2129, %v2134, %v2133
        %vm2136 = vcmp.lt.s32.totalorder %v1128, 0
        %v2137 = vsub.s32 0, %v1128
        %v2138 = vsel %vm2136, %v2137, %v1128
        %v2139 = vshrl.u32 %v2138, 2
        %v2140 = vand.u32 %v2138, 3
        %v2141 = vsub.s32 0, %v2140
        %v2142 = vsel %vm2136, %v2141, %v2140
        %vm2143 = vcmp.lt.s32.totalorder %v1129, 0
        %v2144 = vsub.s32 0, %v1129
        %v2145 = vsel %vm2143, %v2144, %v1129
        %v2146 = vshrl.u32 %v2145, 2
        %v2147 = vand.u32 %v2145, 3
        %v2148 = vsub.s32 0, %v2147
        %v2149 = vsel %vm2143, %v2148, %v2147
        %vm2150 = vcmp.ne.s32.totalorder %v2128, 0
        %vm2151 = vcmp.ne.s32.totalorder %v2135, 0
        %vm2152 = vcmp.ne.s32.totalorder %v2142, 0
        %vm2153 = vcmp.ne.s32.totalorder %v2149, 0
        %vm2154 = vcmp.lt.s32.totalorder %v2128, 0
        %vm2155 = vcmp.lt.s32.totalorder %v2135, 0
        %vm2156 = vcmp.lt.s32.totalorder %v2142, 0
        %vm2157 = vcmp.lt.s32.totalorder %v2149, 0
        %vm2158 = vmand %vm2154, %vm2150
        %vm2159 = vmand %vm2155, %vm2151
        %vm2160 = vmand %vm2156, %vm2152
        %vm2161 = vmand %vm2157, %vm2153
        %v2162 = vadd.s32 %v2128, 4
        %v2163 = vadd.s32 %v2135, 4
        %v2164 = vadd.s32 %v2142, 4
        %v2165 = vadd.s32 %v2149, 4
        %v2166 = vsel %vm2158, %v2162, %v2128
        %v2167 = vsel %vm2159, %v2163, %v2135
        %v2168 = vsel %vm2160, %v2164, %v2142
        %v2169 = vsel %vm2161, %v2165, %v2149
        %vm2170 = vcmp.eq.s32.totalorder %v2166, 0
        %vm2171 = vcmp.eq.s32.totalorder %v2167, 0
        %vm2172 = vcmp.eq.s32.totalorder %v2168, 0
        %vm2173 = vcmp.eq.s32.totalorder %v2169, 0
        %v2174 = vsel %vm2170, 0.0, %v2121
        %v2175 = vsel %vm2171, 0.0, %v2112
        %v2176 = vsel %vm2172, 0.0, %v2114
        %v2177 = vsel %vm2173, 0.0, %v2116
        %2182 = vrot.lane.b32.xlu0 %v2091, 64
        %v2183 = vpop.permute.xlu0 %2182
        %2184 = vrot.lane.b32.xlu0 %v2093, 64
        %v2185 = vpop.permute.xlu0 %2184
        %2186 = vrot.lane.b32.xlu0 %v2095, 64
        %v2187 = vpop.permute.xlu0 %2186
        %2188 = vrot.lane.b32.xlu0 %v2097, 64
        %v2189 = vpop.permute.xlu0 %2188
        %v2194 = vsel %vm1570, %v2174, %v2183
        %v2195 = vsel %vm1570, %v2175, %v2185
        %v2196 = vsel %vm1570, %v2176, %v2187
        %v2197 = vsel %vm1570, %v2177, %v2189
        %v2198 = vpack.c.bf16 %v2195, %v2194
        %v2199 = vpack.c.bf16 %v2101, %v2099
        %v2200 = vpack.c.bf16 %v2197, %v2196
        %v2201 = vpack.c.bf16 %v2105, %v2103
        %v2202 = vld [vmem:[%s7] sm:$0xf]
        %v2203 = vld [vmem:[%s7 + $0x4] sm:$0xf]
        %v2204 = vld [vmem:[%s7 + $0x8] sm:$0xf]
        %v2205 = vld [vmem:[%s7 + $0xc] sm:$0xf]
        %v2206 = vld [vmem:[%s7 + $0x10] sm:$0xf]
        %v2207 = vld [vmem:[%s7 + $0x14] sm:$0xf]
        %v2208 = vld [vmem:[%s7 + $0x18] sm:$0xf]
        %v2209 = vld [vmem:[%s7 + $0x1c] sm:$0xf]
        %v2210 = vld [vmem:[%s7 + $0x20] sm:$0xf]
        %v2211 = vld [vmem:[%s7 + $0x24] sm:$0xf]
        %v2212 = vld [vmem:[%s7 + $0x28] sm:$0xf]
        %v2213 = vld [vmem:[%s7 + $0x2c] sm:$0xf]
        %v2214 = vld [vmem:[%s7 + $0x30] sm:$0xf]
        %v2215 = vld [vmem:[%s7 + $0x34] sm:$0xf]
        %v2216 = vld [vmem:[%s7 + $0x38] sm:$0xf]
        %v2217 = vld [vmem:[%s7 + $0x3c] sm:$0xf]
        %v2218 = vld [vmem:[%s7 + $0x40] sm:$0xf]
        %v2219 = vld [vmem:[%s7 + $0x44] sm:$0xf]
        %v2220 = vld [vmem:[%s7 + $0x48] sm:$0xf]
        %v2221 = vld [vmem:[%s7 + $0x4c] sm:$0xf]
        %v2222 = vld [vmem:[%s7 + $0x50] sm:$0xf]
        %v2223 = vld [vmem:[%s7 + $0x54] sm:$0xf]
        %v2224 = vld [vmem:[%s7 + $0x58] sm:$0xf]
        %v2225 = vld [vmem:[%s7 + $0x5c] sm:$0xf]
        %v2226 = vld [vmem:[%s8] sm:$0x1]
        %v2228 = vlaneseq
        %v2229 = vshrl.u32 %v2228, 7
        %v2230 = vsub.s32 0, %v2229
        %v2231 = vrot.slane %v2226, %v2230
        %v2257 = vunpack.c.l.b16 %v2202
        %v2258 = vunpack.c.l.b16 %v2203
        %v2259 = vunpack.c.l.b16 %v2204
        %v2260 = vunpack.c.l.b16 %v2205
        %v2261 = vunpack.c.l.b16 %v2206
        %v2262 = vunpack.c.l.b16 %v2207
        %v2263 = vunpack.c.l.b16 %v2208
        %v2264 = vunpack.c.l.b16 %v2209
        %v2265 = vunpack.c.l.b16 %v2210
        %v2266 = vunpack.c.l.b16 %v2211
        %v2267 = vunpack.c.l.b16 %v2212
        %v2268 = vunpack.c.l.b16 %v2213
        %v2269 = vunpack.c.l.b16 %v2214
        %v2270 = vunpack.c.l.b16 %v2215
        %v2271 = vunpack.c.l.b16 %v2216
        %v2272 = vunpack.c.l.b16 %v2217
        %v2273 = vunpack.c.l.b16 %v2218
        %v2274 = vunpack.c.l.b16 %v2219
        %v2275 = vunpack.c.l.b16 %v2220
        %v2276 = vunpack.c.l.b16 %v2221
        %v2277 = vunpack.c.l.b16 %v2222
        %v2278 = vunpack.c.l.b16 %v2223
        %v2279 = vunpack.c.l.b16 %v2224
        %v2280 = vunpack.c.l.b16 %v2225
        %v2281 = vpack.c.b16 %v2258, %v2257
        %v2282 = vpack.c.b16 %v2260, %v2259
        %v2283 = vpack.c.b16 %v2262, %v2261
        %v2284 = vpack.c.b16 %v2264, %v2263
        %v2285 = vpack.c.b16 %v2266, %v2265
        %v2286 = vpack.c.b16 %v2268, %v2267
        %v2287 = vpack.c.b16 %v2270, %v2269
        %v2288 = vpack.c.b16 %v2272, %v2271
        %v2289 = vpack.c.b16 %v2274, %v2273
        %v2290 = vpack.c.b16 %v2276, %v2275
        %v2291 = vpack.c.b16 %v2278, %v2277
        %v2292 = vpack.c.b16 %v2280, %v2279
        %v2306 = vsel %vm1570, %v2199, 0
        %v2309 = vsel %vm1570, %v2201, 0
        %2311 = vmatprep.subr.bf16.mxu0 0
        %2312 = vmatpush1.bf16.msra.mxu0 %v2288
        %2313 = vmatprep.subr.bf16.mxu0 0
        %2314 = vmatpush1.bf16.msra.mxu0 %v2287
        %2315 = vmatprep.subr.bf16.mxu0 0
        %2316 = vmatpush1.bf16.msra.mxu0 %v2286
        %2317 = vmatprep.subr.bf16.mxu0 0
        %2318 = vmatpush1.bf16.msra.mxu0 %v2285
        %2319 = vmatprep.subr.bf16.mxu0 0
        %2320 = vmatpush1.bf16.msra.mxu0 %v2284
        %2321 = vmatprep.subr.bf16.mxu0 0
        %2322 = vmatpush1.bf16.msra.mxu0 %v2283
        %2323 = vmatprep.subr.bf16.mxu0 0
        %2324 = vmatpush1.bf16.msra.mxu0 %v2282
        %2325 = vmatprep.subr.bf16.mxu0 0
        %2326 = vmatpush1.bf16.msra.mxu0 %v2281
        %2327 = vmatprep.subr.bf16.mxu0 0
        %2328 = vmatpush2.bf16.msra.mxu0 0
        %2329 = vmatprep.subr.bf16.mxu0 0
        %2330 = vmatpush2.bf16.msra.mxu0 0
        %2331 = vmatprep.subr.bf16.mxu0 0
        %2332 = vmatpush2.bf16.msra.mxu0 0
        %2333 = vmatprep.subr.bf16.mxu0 0
        %2334 = vmatpush2.bf16.msra.mxu0 0
        %2335 = vmatprep.subr.bf16.mxu0 0
        %2336 = vmatpush2.bf16.msra.mxu0 %v2292
        %2337 = vmatprep.subr.bf16.mxu0 0
        %2338 = vmatpush2.bf16.msra.mxu0 %v2291
        %2339 = vmatprep.subr.bf16.mxu0 0
        %2340 = vmatpush2.bf16.msra.mxu0 %v2290
        %2341 = vmatprep.subr.bf16.mxu0 0
        %2342 = vmatpush2.bf16.msra.mxu0 %v2289
        %2343 = vmatprep.mubr.bf16.mxu0 %v2306
        %2344 = vmatmul.mubr.bf16.gmra.mxu0 %v2198
        %v2345 = vpop.f32.mrf.mxu0
        %v2346 = vadd.f32 %v2231, %v2345
        %v2347 = vpop.f32.mrf.mxu0
        %v2348 = vpop.f32.mrf.mxu0
        %v2349 = vadd.f32 %v2231, %v2348
        %v2350 = vpop.f32.mrf.mxu0
        %2351 = vmatprep.mubr.bf16.mxu0 %v2309
        %2352 = vmatmul.mubr.bf16.gmra.mxu0 %v2200
        %v2353 = vpop.f32.mrf.mxu0
        %v2354 = vadd.f32 %v2231, %v2353
        %v2355 = vpop.f32.mrf.mxu0
        %v2356 = vpop.f32.mrf.mxu0
        %v2357 = vadd.f32 %v2231, %v2356
        %v2358 = vpop.f32.mrf.mxu0
        %2359 = vdwg.mxu0
        %v2360 = vmax.f32 %v2346, 0.0
        %v2361 = vmax.f32 %v2349, 0.0
        %v2362 = vmax.f32 %v2354, 0.0
        %v2363 = vmax.f32 %v2357, 0.0
        %v2368 = vrot.slane %v2360, 7
        %v2369 = vrot.slane %v2361, 7
        %v2370 = vsel %vm1100, %v2368, %v2369
        %v2371 = vrot.slane %v2362, 7
        %v2372 = vsel %vm1100, %v2369, %v2371
        %v2373 = vrot.slane %v2363, 7
        %v2374 = vsel %vm1100, %v2371, %v2373
        %v2379 = vsel %vm1100, 0.0, %v2368
        %v2380 = vsel %vm2170, 0.0, %v2379
        %v2381 = vsel %vm2171, 0.0, %v2370
        %v2382 = vsel %vm2172, 0.0, %v2372
        %v2383 = vsel %vm2173, 0.0, %v2374
        %v2384 = vrot.slane %v2360, 1
        %v2385 = vrot.slane %v2361, 1
        %v2386 = vsel %vm1505, %v2384, %v2385
        %v2387 = vrot.slane %v2362, 1
        %v2388 = vsel %vm1505, %v2385, %v2387
        %v2389 = vrot.slane %v2363, 1
        %v2390 = vsel %vm1505, %v2387, %v2389
        %v2395 = vsel %vm1505, %v2389, 0.0
        %vm2396 = vcmp.eq.s32.totalorder %v2166, 3
        %vm2397 = vcmp.eq.s32.totalorder %v2167, 3
        %vm2398 = vcmp.eq.s32.totalorder %v2168, 3
        %vm2399 = vcmp.eq.s32.totalorder %v2169, 3
        %v2400 = vsel %vm2396, 0.0, %v2386
        %v2401 = vsel %vm2397, 0.0, %v2388
        %v2402 = vsel %vm2398, 0.0, %v2390
        %v2403 = vsel %vm2399, 0.0, %v2395
        %2404 = vrot.lane.b32.xlu0 %v2360, 64
        %v2405 = vpop.permute.xlu0 %2404
        %2406 = vrot.lane.b32.xlu0 %v2361, 64
        %v2407 = vpop.permute.xlu0 %2406
        %2408 = vrot.lane.b32.xlu0 %v2362, 64
        %v2409 = vpop.permute.xlu0 %2408
        %2410 = vrot.lane.b32.xlu0 %v2363, 64
        %v2411 = vpop.permute.xlu0 %2410
        %v2416 = vsel %vm1570, %v2380, %v2405
        %v2417 = vsel %vm1570, %v2381, %v2407
        %v2418 = vsel %vm1570, %v2382, %v2409
        %v2419 = vsel %vm1570, %v2383, %v2411
        %v2420 = vpack.c.bf16 %v2417, %v2416
        %v2421 = vpack.c.bf16 %v2401, %v2400
        %v2422 = vpack.c.bf16 %v2419, %v2418
        %v2423 = vpack.c.bf16 %v2403, %v2402
        %v2424 = vld [vmem:[%s9] sm:$0xf]
        %v2425 = vld [vmem:[%s9 + $0x4] sm:$0xf]
        %v2426 = vld [vmem:[%s9 + $0x8] sm:$0xf]
        %v2427 = vld [vmem:[%s9 + $0xc] sm:$0xf]
        %v2428 = vld [vmem:[%s9 + $0x10] sm:$0xf]
        %v2429 = vld [vmem:[%s9 + $0x14] sm:$0xf]
        %v2430 = vld [vmem:[%s9 + $0x18] sm:$0xf]
        %v2431 = vld [vmem:[%s9 + $0x1c] sm:$0xf]
        %v2432 = vld [vmem:[%s9 + $0x20] sm:$0xf]
        %v2433 = vld [vmem:[%s9 + $0x24] sm:$0xf]
        %v2434 = vld [vmem:[%s9 + $0x28] sm:$0xf]
        %v2435 = vld [vmem:[%s9 + $0x2c] sm:$0xf]
        %v2436 = vld [vmem:[%s9 + $0x30] sm:$0xf]
        %v2437 = vld [vmem:[%s9 + $0x34] sm:$0xf]
        %v2438 = vld [vmem:[%s9 + $0x38] sm:$0xf]
        %v2439 = vld [vmem:[%s9 + $0x3c] sm:$0xf]
        %v2440 = vld [vmem:[%s9 + $0x40] sm:$0xf]
        %v2441 = vld [vmem:[%s9 + $0x44] sm:$0xf]
        %v2442 = vld [vmem:[%s9 + $0x48] sm:$0xf]
        %v2443 = vld [vmem:[%s9 + $0x4c] sm:$0xf]
        %v2444 = vld [vmem:[%s9 + $0x50] sm:$0xf]
        %v2445 = vld [vmem:[%s9 + $0x54] sm:$0xf]
        %v2446 = vld [vmem:[%s9 + $0x58] sm:$0xf]
        %v2447 = vld [vmem:[%s9 + $0x5c] sm:$0xf]
        %v2448 = vld [vmem:[%s10] sm:$0x1]
        %v2450 = vlaneseq
        %v2451 = vshrl.u32 %v2450, 7
        %v2452 = vsub.s32 0, %v2451
        %v2453 = vrot.slane %v2448, %v2452
        %v2479 = vunpack.c.l.b16 %v2424
        %v2480 = vunpack.c.l.b16 %v2425
        %v2481 = vunpack.c.l.b16 %v2426
        %v2482 = vunpack.c.l.b16 %v2427
        %v2483 = vunpack.c.l.b16 %v2428
        %v2484 = vunpack.c.l.b16 %v2429
        %v2485 = vunpack.c.l.b16 %v2430
        %v2486 = vunpack.c.l.b16 %v2431
        %v2487 = vunpack.c.l.b16 %v2432
        %v2488 = vunpack.c.l.b16 %v2433
        %v2489 = vunpack.c.l.b16 %v2434
        %v2490 = vunpack.c.l.b16 %v2435
        %v2491 = vunpack.c.l.b16 %v2436
        %v2492 = vunpack.c.l.b16 %v2437
        %v2493 = vunpack.c.l.b16 %v2438
        %v2494 = vunpack.c.l.b16 %v2439
        %v2495 = vunpack.c.l.b16 %v2440
        %v2496 = vunpack.c.l.b16 %v2441
        %v2497 = vunpack.c.l.b16 %v2442
        %v2498 = vunpack.c.l.b16 %v2443
        %v2499 = vunpack.c.l.b16 %v2444
        %v2500 = vunpack.c.l.b16 %v2445
        %v2501 = vunpack.c.l.b16 %v2446
        %v2502 = vunpack.c.l.b16 %v2447
        %v2503 = vpack.c.b16 %v2480, %v2479
        %v2504 = vpack.c.b16 %v2482, %v2481
        %v2505 = vpack.c.b16 %v2484, %v2483
        %v2506 = vpack.c.b16 %v2486, %v2485
        %v2507 = vpack.c.b16 %v2488, %v2487
        %v2508 = vpack.c.b16 %v2490, %v2489
        %v2509 = vpack.c.b16 %v2492, %v2491
        %v2510 = vpack.c.b16 %v2494, %v2493
        %v2511 = vpack.c.b16 %v2496, %v2495
        %v2512 = vpack.c.b16 %v2498, %v2497
        %v2513 = vpack.c.b16 %v2500, %v2499
        %v2514 = vpack.c.b16 %v2502, %v2501
        %v2528 = vsel %vm1570, %v2421, 0
        %v2531 = vsel %vm1570, %v2423, 0
        %2533 = vmatprep.subr.bf16.mxu0 0
        %2534 = vmatpush1.bf16.msra.mxu0 %v2510
        %2535 = vmatprep.subr.bf16.mxu0 0
        %2536 = vmatpush1.bf16.msra.mxu0 %v2509
        %2537 = vmatprep.subr.bf16.mxu0 0
        %2538 = vmatpush1.bf16.msra.mxu0 %v2508
        %2539 = vmatprep.subr.bf16.mxu0 0
        %2540 = vmatpush1.bf16.msra.mxu0 %v2507
        %2541 = vmatprep.subr.bf16.mxu0 0
        %2542 = vmatpush1.bf16.msra.mxu0 %v2506
        %2543 = vmatprep.subr.bf16.mxu0 0
        %2544 = vmatpush1.bf16.msra.mxu0 %v2505
        %2545 = vmatprep.subr.bf16.mxu0 0
        %2546 = vmatpush1.bf16.msra.mxu0 %v2504
        %2547 = vmatprep.subr.bf16.mxu0 0
        %2548 = vmatpush1.bf16.msra.mxu0 %v2503
        %2549 = vmatprep.subr.bf16.mxu0 0
        %2550 = vmatpush2.bf16.msra.mxu0 0
        %2551 = vmatprep.subr.bf16.mxu0 0
        %2552 = vmatpush2.bf16.msra.mxu0 0
        %2553 = vmatprep.subr.bf16.mxu0 0
        %2554 = vmatpush2.bf16.msra.mxu0 0
        %2555 = vmatprep.subr.bf16.mxu0 0
        %2556 = vmatpush2.bf16.msra.mxu0 0
        %2557 = vmatprep.subr.bf16.mxu0 0
        %2558 = vmatpush2.bf16.msra.mxu0 %v2514
        %2559 = vmatprep.subr.bf16.mxu0 0
        %2560 = vmatpush2.bf16.msra.mxu0 %v2513
        %2561 = vmatprep.subr.bf16.mxu0 0
        %2562 = vmatpush2.bf16.msra.mxu0 %v2512
        %2563 = vmatprep.subr.bf16.mxu0 0
        %2564 = vmatpush2.bf16.msra.mxu0 %v2511
        %2565 = vmatprep.mubr.bf16.mxu0 %v2528
        %2566 = vmatmul.mubr.bf16.gmra.mxu0 %v2420
        %v2567 = vpop.f32.mrf.mxu0
        %v2568 = vadd.f32 %v2453, %v2567
        %v2569 = vpop.f32.mrf.mxu0
        %v2570 = vpop.f32.mrf.mxu0
        %v2571 = vadd.f32 %v2453, %v2570
        %v2572 = vpop.f32.mrf.mxu0
        %2573 = vmatprep.mubr.bf16.mxu0 %v2531
        %2574 = vmatmul.mubr.bf16.gmra.mxu0 %v2422
        %v2575 = vpop.f32.mrf.mxu0
        %v2576 = vadd.f32 %v2453, %v2575
        %v2577 = vpop.f32.mrf.mxu0
        %v2578 = vpop.f32.mrf.mxu0
        %v2579 = vadd.f32 %v2453, %v2578
        %v2580 = vpop.f32.mrf.mxu0
        %2581 = vdwg.mxu0
        %v2582 = vadd.f32 %v2091, %v2099
        %v2583 = vadd.f32 %v2093, %v2101
        %v2584 = vadd.f32 %v2095, %v2103
        %v2585 = vadd.f32 %v2097, %v2105
        %v2586 = vld [vmem:[%s12] sm:$0xff]
        %v2587 = vld [vmem:[%s12 + $0x8] sm:$0xff]
        %v2588 = vld [vmem:[%s12 + $0x10] sm:$0xff]
        %v2589 = vld [vmem:[%s12 + $0x18] sm:$0xff]
        %v2590 = vld [vmem:[%s12 + $0x20] sm:$0xff]
        %v2591 = vld [vmem:[%s12 + $0x28] sm:$0xff]
        %v2592 = vld [vmem:[%s12 + $0x30] sm:$0xff]
        %v2593 = vld [vmem:[%s12 + $0x38] sm:$0xff]
        %v2595 = vsel %vm1570, %v2582, 0
        %v2598 = vsel %vm1570, %v2583, 0
        %v2601 = vsel %vm1570, %v2584, 0
        %v2604 = vsel %vm1570, %v2585, 0
        %2606 = vmatprep.subr.mxu0 0.0
        %2607 = vmatpush1.msra.mxu0 0.0
        %2608 = vmatprep.subr.mxu0 0.0
        %2609 = vmatpush1.msra.mxu0 0.0
        %2610 = vmatprep.subr.mxu0 0.0
        %2611 = vmatpush1.msra.mxu0 0.0
        %2612 = vmatprep.subr.mxu0 0.0
        %2613 = vmatpush1.msra.mxu0 0.0
        %2614 = vmatprep.subr.mxu0 0.0
        %2615 = vmatpush1.msra.mxu0 0.0
        %2616 = vmatprep.subr.mxu0 0.0
        %2617 = vmatpush1.msra.mxu0 0.0
        %2618 = vmatprep.subr.mxu0 0.0
        %2619 = vmatpush1.msra.mxu0 0.0
        %2620 = vmatprep.subr.mxu0 0.0
        %2621 = vmatpush1.msra.mxu0 0.0
        %2622 = vmatprep.subr.mxu0 0.0
        %2623 = vmatpush1.msra.mxu0 %v2593
        %2624 = vmatprep.subr.mxu0 0.0
        %2625 = vmatpush1.msra.mxu0 %v2592
        %2626 = vmatprep.subr.mxu0 0.0
        %2627 = vmatpush1.msra.mxu0 %v2591
        %2628 = vmatprep.subr.mxu0 0.0
        %2629 = vmatpush1.msra.mxu0 %v2590
        %2630 = vmatprep.subr.mxu0 0.0
        %2631 = vmatpush1.msra.mxu0 %v2589
        %2632 = vmatprep.subr.mxu0 0.0
        %2633 = vmatpush1.msra.mxu0 %v2588
        %2634 = vmatprep.subr.mxu0 0.0
        %2635 = vmatpush1.msra.mxu0 %v2587
        %2636 = vmatprep.subr.mxu0 0.0
        %2637 = vmatpush1.msra.mxu0 %v2586
        %2638 = vmatprep.subr.mxu0 0.0
        %2639 = vmatpush2.msra.mxu0 0.0
        %2640 = vmatprep.subr.mxu0 0.0
        %2641 = vmatpush2.msra.mxu0 0.0
        %2642 = vmatprep.subr.mxu0 0.0
        %2643 = vmatpush2.msra.mxu0 0.0
        %2644 = vmatprep.subr.mxu0 0.0
        %2645 = vmatpush2.msra.mxu0 0.0
        %2646 = vmatprep.subr.mxu0 0.0
        %2647 = vmatpush2.msra.mxu0 0.0
        %2648 = vmatprep.subr.mxu0 0.0
        %2649 = vmatpush2.msra.mxu0 0.0
        %2650 = vmatprep.subr.mxu0 0.0
        %2651 = vmatpush2.msra.mxu0 0.0
        %2652 = vmatprep.subr.mxu0 0.0
        %2653 = vmatpush2.msra.mxu0 0.0
        %2654 = vmatprep.subr.mxu0 0.0
        %2655 = vmatpush2.msra.mxu0 0.0
        %2656 = vmatprep.subr.mxu0 0.0
        %2657 = vmatpush2.msra.mxu0 0.0
        %2658 = vmatprep.subr.mxu0 0.0
        %2659 = vmatpush2.msra.mxu0 0.0
        %2660 = vmatprep.subr.mxu0 0.0
        %2661 = vmatpush2.msra.mxu0 0.0
        %2662 = vmatprep.subr.mxu0 0.0
        %2663 = vmatpush2.msra.mxu0 0.0
        %2664 = vmatprep.subr.mxu0 0.0
        %2665 = vmatpush2.msra.mxu0 0.0
        %2666 = vmatprep.subr.mxu0 0.0
        %2667 = vmatpush2.msra.mxu0 0.0
        %2668 = vmatprep.subr.mxu0 0.0
        %2669 = vmatpush2.msra.mxu0 0.0
        %2670 = vmatprep.mubr.f32.mxu0 0.0
        %2671 = vmatmul.mubr.f32.gmra.mxu0 %v2595
        %v2672 = vpop.f32.mrf.mxu0
        %v2673 = vadd.f32 %v2568, %v2672
        %v2674 = vpop.f32.mrf.mxu0
        %2675 = vmatprep.mubr.f32.mxu0 0.0
        %2676 = vmatmul.mubr.f32.gmra.mxu0 %v2598
        %v2677 = vpop.f32.mrf.mxu0
        %v2678 = vadd.f32 %v2571, %v2677
        %v2679 = vpop.f32.mrf.mxu0
        %2680 = vmatprep.mubr.f32.mxu0 0.0
        %2681 = vmatmul.mubr.f32.gmra.mxu0 %v2601
        %v2682 = vpop.f32.mrf.mxu0
        %v2683 = vadd.f32 %v2576, %v2682
        %v2684 = vpop.f32.mrf.mxu0
        %2685 = vmatprep.mubr.f32.mxu0 0.0
        %2686 = vmatmul.mubr.f32.gmra.mxu0 %v2604
        %v2687 = vpop.f32.mrf.mxu0
        %v2688 = vadd.f32 %v2579, %v2687
        %v2689 = vpop.f32.mrf.mxu0
        %2690 = vdwg.mxu0
        %v2691 = vmax.f32 %v2673, 0.0
        %v2692 = vmax.f32 %v2678, 0.0
        %v2693 = vmax.f32 %v2683, 0.0
        %v2694 = vmax.f32 %v2688, 0.0
        %2695 = vst.msk [vmem:[#allocation4] sm:$0xff] %vm1570, %v2691
        %2696 = vst.msk [vmem:[#allocation4 + $0x8] sm:$0xff] %vm1570, %v2692
        %2697 = vst.msk [vmem:[#allocation4 + $0x10] sm:$0xff] %vm1570, %v2693
        %2698 = vst.msk [vmem:[#allocation4 + $0x18] sm:$0xff] %vm1570, %v2694
        %v2699 = vld [vmem:[#allocation4] ss:$4 sm:$0xff]
        %s2700 = scalar_lea.vmem [#allocation4], 1
        %v2701 = vld [vmem:[%s2700] ss:$4 sm:$0xff]
        %v2702 = vadd.f32 %v2699, %v2701
        %s2703 = scalar_lea.vmem [#allocation4], 2
        %v2704 = vld [vmem:[%s2703] ss:$4 sm:$0xff]
        %v2705 = vadd.f32 %v2702, %v2704
        %s2706 = scalar_lea.vmem [#allocation4], 3
        %v2707 = vld [vmem:[%s2706] ss:$4 sm:$0xff]
        %v2708 = vadd.f32 %v2705, %v2707
        %v2709 = vld [vmem:[%s13] sm:$0xff]
        %v2710 = vld [vmem:[%s13 + $0x8] sm:$0xff]
        %v2711 = vld [vmem:[%s13 + $0x10] sm:$0xff]
        %v2712 = vld [vmem:[%s13 + $0x18] sm:$0xff]
        %v2713 = vld [vmem:[%s13 + $0x20] sm:$0xff]
        %v2714 = vld [vmem:[%s13 + $0x28] sm:$0xff]
        %v2715 = vld [vmem:[%s13 + $0x30] sm:$0xff]
        %v2716 = vld [vmem:[%s13 + $0x38] sm:$0xff]
        %v2717 = vld [vmem:[%s14] sm:$0x1]
        %v2719 = vlaneseq
        %v2720 = vshrl.u32 %v2719, 7
        %v2721 = vsub.s32 0, %v2720
        %v2722 = vrot.slane %v2717, %v2721
        %v2725 = vsel %vm1570, %v2708, 0
        %2727 = vmatprep.subr.mxu0 0.0
        %2728 = vmatpush1.msra.mxu0 0.0
        %2729 = vmatprep.subr.mxu0 0.0
        %2730 = vmatpush1.msra.mxu0 0.0
        %2731 = vmatprep.subr.mxu0 0.0
        %2732 = vmatpush1.msra.mxu0 0.0
        %2733 = vmatprep.subr.mxu0 0.0
        %2734 = vmatpush1.msra.mxu0 0.0
        %2735 = vmatprep.subr.mxu0 0.0
        %2736 = vmatpush1.msra.mxu0 0.0
        %2737 = vmatprep.subr.mxu0 0.0
        %2738 = vmatpush1.msra.mxu0 0.0
        %2739 = vmatprep.subr.mxu0 0.0
        %2740 = vmatpush1.msra.mxu0 0.0
        %2741 = vmatprep.subr.mxu0 0.0
        %2742 = vmatpush1.msra.mxu0 0.0
        %2743 = vmatprep.subr.mxu0 0.0
        %2744 = vmatpush1.msra.mxu0 %v2716
        %2745 = vmatprep.subr.mxu0 0.0
        %2746 = vmatpush1.msra.mxu0 %v2715
        %2747 = vmatprep.subr.mxu0 0.0
        %2748 = vmatpush1.msra.mxu0 %v2714
        %2749 = vmatprep.subr.mxu0 0.0
        %2750 = vmatpush1.msra.mxu0 %v2713
        %2751 = vmatprep.subr.mxu0 0.0
        %2752 = vmatpush1.msra.mxu0 %v2712
        %2753 = vmatprep.subr.mxu0 0.0
        %2754 = vmatpush1.msra.mxu0 %v2711
        %2755 = vmatprep.subr.mxu0 0.0
        %2756 = vmatpush1.msra.mxu0 %v2710
        %2757 = vmatprep.subr.mxu0 0.0
        %2758 = vmatpush1.msra.mxu0 %v2709
        %2759 = vmatprep.subr.mxu0 0.0
        %2760 = vmatpush2.msra.mxu0 0.0
        %2761 = vmatprep.subr.mxu0 0.0
        %2762 = vmatpush2.msra.mxu0 0.0
        %2763 = vmatprep.subr.mxu0 0.0
        %2764 = vmatpush2.msra.mxu0 0.0
        %2765 = vmatprep.subr.mxu0 0.0
        %2766 = vmatpush2.msra.mxu0 0.0
        %2767 = vmatprep.subr.mxu0 0.0
        %2768 = vmatpush2.msra.mxu0 0.0
        %2769 = vmatprep.subr.mxu0 0.0
        %2770 = vmatpush2.msra.mxu0 0.0
        %2771 = vmatprep.subr.mxu0 0.0
        %2772 = vmatpush2.msra.mxu0 0.0
        %2773 = vmatprep.subr.mxu0 0.0
        %2774 = vmatpush2.msra.mxu0 0.0
        %2775 = vmatprep.subr.mxu0 0.0
        %2776 = vmatpush2.msra.mxu0 0.0
        %2777 = vmatprep.subr.mxu0 0.0
        %2778 = vmatpush2.msra.mxu0 0.0
        %2779 = vmatprep.subr.mxu0 0.0
        %2780 = vmatpush2.msra.mxu0 0.0
        %2781 = vmatprep.subr.mxu0 0.0
        %2782 = vmatpush2.msra.mxu0 0.0
        %2783 = vmatprep.subr.mxu0 0.0
        %2784 = vmatpush2.msra.mxu0 0.0
        %2785 = vmatprep.subr.mxu0 0.0
        %2786 = vmatpush2.msra.mxu0 0.0
        %2787 = vmatprep.subr.mxu0 0.0
        %2788 = vmatpush2.msra.mxu0 0.0
        %2789 = vmatprep.subr.mxu0 0.0
        %2790 = vmatpush2.msra.mxu0 0.0
        %2791 = vmatprep.mubr.f32.mxu0 0.0
        %2792 = vmatmul.mubr.f32.gmra.mxu0 %v2725
        %v2793 = vpop.f32.mrf.mxu0
        %v2794 = vadd.f32 %v2722, %v2793
        %v2795 = vpop.f32.mrf.mxu0
        %2796 = vdwg.mxu0
        %vm2797 = vcmask 80896
        %2798 = vst.msk [vmem:[%s490] sm:$0xff] %vm2797, %v2794
        %s2799 = sand.u32 %s357, 1
        %s2800 = scalar_lea.sflag [#allocation6], %s2799
        %s2801 = sand.u32 %s357, 1
        %s2802 = smul.addr %s2801, 8
        %s2803 = scalar_lea.vmem [#allocation5], %s2802
        // Predicated region
        $region81: #{resnet_forward.1} parent=79 // pred_check
          %p2804 = pneg %p367
        $region82: #{resnet_forward.1} parent=79 // pred_check_branch
          %2806 = sbr.rel (%p2804) target = $region84
        $region83: #{resnet_forward.1} parent=79 // pred_region
          %s2808 = ssub.s32 128, 128
          %2809 = vsyncadd %s2800, %s2808
          %s2810 = smul.addr %s29, 128
          %s2811 = scalar_lea.hbm %s15, %s2810
          %s2813 = sshll.u32 %s2803, 4
          %s2814 = int_to_ptr.vmem [resolvable:$true] %s2813
          %2816 = dma.vmem_to_hbm [thread:$0]  %s2814, 128, %s2811, %s2800
        $region84: #{resnet_forward.1} parent=79 // pred_fallthru
          _
      $region80: #{resnet_forward.1} parent=5 // pred_fallthru
        _
      %p2817 = scmp.le.s32.totalorder 2, %s24
      // Predicated region
      $region85: #{resnet_forward.1} parent=5 // pred_check
        %p2818 = pneg %p2817
      $region86: #{resnet_forward.1} parent=5 // pred_check_branch
        %2820 = sbr.rel (%p2818) target = $region88
      $region87: #{resnet_forward.1} parent=5 // pred_region
        %s2821 = ssub.s32 %s24, 2
        // Predicated region
        $region89: #{resnet_forward.1} parent=87 // pred_check
          %p2822 = pneg %p373
        $region90: #{resnet_forward.1} parent=87 // pred_check_branch
          %2824 = sbr.rel (%p2822) target = $region92
        $region91: #{resnet_forward.1} parent=87 // pred_region
          %s2825 = sand.u32 %s358, 1
          %s2826 = scalar_lea.sflag [#allocation6], %s2825
          %s2827 = sand.u32 %s358, 1
          %s2828 = smul.addr %s2827, 8
          %s2829 = scalar_lea.vmem [#allocation5], %s2828
          %2830 = dma.done %s2826, 128
        $region92: #{resnet_forward.1} parent=87 // pred_fallthru
          _
      $region88: #{resnet_forward.1} parent=5 // pred_fallthru
        _
    $region6: #{resnet_forward.1} parent=1 // loop_footer
      %s28 = sadd.s32 1, %s24
    $region7: #{resnet_forward.1} parent=1 // loop_footer_branch
      %23 = sbr.rel target = $region3
    $region8: #{resnet_forward.1} parent=1 // loop_exit
      _
    %2831 = vsyncpa [#allocation6], 1
    %s2832 = scalar_lea.sflag [#allocation6], 1
    %2833 = vsyncpa %s2832, 1

</llo_original>
